<compile_context>
chip_gen: v5e
topology: v5e:2x2
jax: 0.10.0
libtpu: 0.0.40
codegen_flags: <defaults>
</compile_context>

<pallas_src>
import functools

import jax
import jax.numpy as jnp
from jax.experimental import pallas as pl
from jax.experimental.pallas import tpu as pltpu


# -----------------------------------------------------------------------------
# Kernel
# -----------------------------------------------------------------------------
def lstm_fc_kernel(xp_ref,              # (T, B, 4Hp) precomputed x @ Wih0 + b0 (time-major)
                   whh0_ref,            # (Hp, 4Hp)   layer-0 recurrent weights
                   wih1_ref,            # (Hp, 4Hp)   layer-1 input (from h0) weights
                   whh1_ref,            # (Hp, 4Hp)   layer-1 recurrent weights
                   b1_ref,              # (1, 4Hp)
                   wfc_ref,             # (Hp, Op)
                   bfc_ref,             # (1, Op)
                   out_ref,             # (B, Op)
                   *, matmul_dtype):
    T, B, G4 = xp_ref.shape
    Hp = whh0_ref.shape[0]
    f32 = jnp.float32

    # ---- hoisted loop-invariant loads / broadcasts ---------------------------
    whh0 = whh0_ref[...].astype(matmul_dtype)          # (Hp, 4Hp)
    wih1 = wih1_ref[...].astype(matmul_dtype)          # (Hp, 4Hp)
    whh1 = whh1_ref[...].astype(matmul_dtype)          # (Hp, 4Hp)
    b1 = jnp.broadcast_to(b1_ref[...], (B, G4))        # broadcast once, not per step

    def activations(gates, c_prev):
        # Gate layout: [ i | f | o | g ], each Hp wide -> 128-lane-aligned slices
        # (free static views); one fused sigmoid over the three sigmoid gates.
        sig = jax.nn.sigmoid(gates[:, 0:3 * Hp])
        i = sig[:, 0 * Hp:1 * Hp]
        f = sig[:, 1 * Hp:2 * Hp]
        o = sig[:, 2 * Hp:3 * Hp]
        g = jnp.tanh(gates[:, 3 * Hp:4 * Hp])
        c = f * c_prev + i * g                         # cell state stays f32
        h = o * jnp.tanh(c)
        return h, c

    zeros = jnp.zeros((B, Hp), f32)
    h0, c0, h1, c1 = zeros, zeros, zeros, zeros

    # ---- fully unrolled time recurrence (T small & static) -------------------
    for t in range(T):
        # Layer 1 contribution from h1_prev: independent of this step's layer-0
        # result, so it can be scheduled in parallel with the layer-0 chain.
        g1_rec = jnp.dot(h1.astype(matmul_dtype), whh1,
                         preferred_element_type=f32) + b1

        # Layer 0: only the recurrent matmul is on the serial chain.
        g0 = xp_ref[t] + jnp.dot(h0.astype(matmul_dtype), whh0,
                                 preferred_element_type=f32)
        h0, c0 = activations(g0, c0)

        # Layer 1: input matmul on the freshly computed h0.
        g1 = g1_rec + jnp.dot(h0.astype(matmul_dtype), wih1,
                              preferred_element_type=f32)
        h1, c1 = activations(g1, c1)

    # ---- final FC on last timestep's top-layer hidden state (one-time, f32) --
    out_ref[...] = (jnp.dot(h1, wfc_ref[...], preferred_element_type=f32)
                    + bfc_ref[...])


# -----------------------------------------------------------------------------
# Parameter packing (PyTorch layout -> lane-aligned kernel layout)
# -----------------------------------------------------------------------------
def _pack_gate_weight(w, Hp):
    """(4H, In) PyTorch LSTM weight -> (In, 4Hp); gate order [i,f,o,g], each gate
    block zero-padded from H to Hp output lanes."""
    H = w.shape[0] // 4
    i, f, g, o = w[0:H], w[H:2 * H], w[2 * H:3 * H], w[3 * H:4 * H]
    blocks = [jnp.pad(blk, ((0, Hp - H), (0, 0))) for blk in (i, f, o, g)]
    return jnp.concatenate(blocks, axis=0).T                     # (In, 4Hp)


def _pack_gate_bias(b, Hp):
    H = b.shape[0] // 4
    i, f, g, o = b[0:H], b[H:2 * H], b[2 * H:3 * H], b[3 * H:4 * H]
    blocks = [jnp.pad(blk, (0, Hp - H)) for blk in (i, f, o, g)]
    return jnp.concatenate(blocks, axis=0).reshape(1, 4 * Hp)    # (1, 4Hp)


def _pad_rows(w, rows):
    return jnp.pad(w, ((0, rows - w.shape[0]), (0, 0)))


def init_params(key, input_size, hidden_size, output_size, lane=128):
    """Deterministic init mimicking nn.LSTM / nn.Linear uniform(-1/sqrt(H), 1/sqrt(H)).
    Returns (packed_kernel_params, raw_pytorch_style_params)."""
    H, D, O = hidden_size, input_size, output_size
    Hp = ((H + lane - 1) // lane) * lane
    Op = ((O + lane - 1) // lane) * lane
    k = 1.0 / jnp.sqrt(jnp.float32(H))
    keys = jax.random.split(key, 10)
    u = lambda kk, shape: jax.random.uniform(kk, shape, jnp.float32, -k, k)

    # PyTorch-native shapes.
    w_ih_l0 = u(keys[0], (4 * H, D)); w_hh_l0 = u(keys[1], (4 * H, H))
    b_ih_l0 = u(keys[2], (4 * H,));   b_hh_l0 = u(keys[3], (4 * H,))
    w_ih_l1 = u(keys[4], (4 * H, H)); w_hh_l1 = u(keys[5], (4 * H, H))
    b_ih_l1 = u(keys[6], (4 * H,));   b_hh_l1 = u(keys[7], (4 * H,))
    w_fc = u(keys[8], (O, H));        b_fc = u(keys[9], (O,))

    packed = dict(
        wih0=_pack_gate_weight(w_ih_l0, Hp),                       # (D, 4Hp) used in wrapper
        whh0=_pad_rows(_pack_gate_weight(w_hh_l0, Hp), Hp),        # (Hp, 4Hp)
        b0=_pack_gate_bias(b_ih_l0 + b_hh_l0, Hp),                 # (1, 4Hp) folded into x_proj
        wih1=_pad_rows(_pack_gate_weight(w_ih_l1, Hp), Hp),        # (Hp, 4Hp)
        whh1=_pad_rows(_pack_gate_weight(w_hh_l1, Hp), Hp),        # (Hp, 4Hp)
        b1=_pack_gate_bias(b_ih_l1 + b_hh_l1, Hp),                 # (1, 4Hp)
        wfc=jnp.pad(w_fc.T, ((0, Hp - H), (0, Op - O))),           # (Hp, Op)
        bfc=jnp.pad(b_fc, (0, Op - O)).reshape(1, Op),             # (1, Op)
        H=H, Hp=Hp, O=O, Op=Op,
    )
    raw = dict(w_ih_l0=w_ih_l0, w_hh_l0=w_hh_l0, b_ih_l0=b_ih_l0, b_hh_l0=b_hh_l0,
               w_ih_l1=w_ih_l1, w_hh_l1=w_hh_l1, b_ih_l1=b_ih_l1, b_hh_l1=b_hh_l1,
               w_fc=w_fc, b_fc=b_fc)
    return packed, raw


# -----------------------------------------------------------------------------
# Wrapper
# -----------------------------------------------------------------------------
def lstm_forward(x, params, *, use_bf16_matmul=False):
    """x: (B, T, D) batch-first, like the PyTorch module. Returns (B, output_size)."""
    B, T, D = x.shape
    Hp, Op, O = params["Hp"], params["Op"], params["O"]

    # Hoisted layer-0 input projection (no recurrent dependency): one big matmul
    # with far better MXU utilization than T tiny per-step pushes; bias b0 folded
    # in; produced directly in time-major (T, B, 4Hp) layout for the kernel.
    xp = jnp.einsum("btd,dg->tbg", x, params["wih0"]) + params["b0"]

    kernel = functools.partial(
        lstm_fc_kernel,
        matmul_dtype=jnp.bfloat16 if use_bf16_matmul else jnp.float32)

    vmem = pl.BlockSpec(memory_space=pltpu.MemorySpace.VMEM)
    out = pl.pallas_call(
        kernel,
        out_shape=jax.ShapeDtypeStruct((B, Op), jnp.float32),
        in_specs=[vmem] * 7,
        out_specs=vmem,
    )(xp, params["whh0"], params["wih1"], params["whh1"],
      params["b1"], params["wfc"], params["bfc"])
    return out[:, :O]


# -----------------------------------------------------------------------------
# Pure-JAX reference (exact PyTorch semantics, unpadded) for correctness check
# -----------------------------------------------------------------------------
def lstm_reference(x, raw, hidden_size):
    B, T, _ = x.shape
    H = hidden_size

    def cell(x_t, h, c, w_ih, w_hh, b_ih, b_hh):
        g = x_t @ w_ih.T + h @ w_hh.T + b_ih + b_hh
        i = jax.nn.sigmoid(g[:, 0:H])
        f = jax.nn.sigmoid(g[:, H:2 * H])
        gg = jnp.tanh(g[:, 2 * H:3 * H])
        o = jax.nn.sigmoid(g[:, 3 * H:4 * H])
        c = f * c + i * gg
        h = o * jnp.tanh(c)
        return h, c

    z = jnp.zeros((B, H), jnp.float32)
    h0, c0, h1, c1 = z, z, z, z
    for t in range(T):
        h0, c0 = cell(x[:, t], h0, c0, raw["w_ih_l0"], raw["w_hh_l0"],
                      raw["b_ih_l0"], raw["b_hh_l0"])
        h1, c1 = cell(h0, h1, c1, raw["w_ih_l1"], raw["w_hh_l1"],
                      raw["b_ih_l1"], raw["b_hh_l1"])
    return h1 @ raw["w_fc"].T + raw["b_fc"]


# -----------------------------------------------------------------------------
if __name__ == "__main__":
    # Shapes consistent with the module (hidden_size=50, num_layers=2, output=1),
    # kept small for the test: batch=2, seq=8, input_size=4.
    hidden_size = 50
    output_size = 1
    batch = 2
    seq_len = 8
    input_size = 4

    key = jax.random.PRNGKey(0)
    kx, kp = jax.random.split(key)
    x = jax.random.normal(kx, (batch, seq_len, input_size), jnp.float32)
    params, raw = init_params(kp, input_size, hidden_size, output_size)

    out = lstm_forward(x, params)          # f32 MXU path (exact module semantics)
    jax.block_until_ready(out)
    assert out.shape == (batch, output_size), out.shape

    ref = lstm_reference(x, raw, hidden_size)
    max_err = float(jnp.max(jnp.abs(out - ref)))
    assert max_err < 5e-2, f"kernel/reference mismatch: max_err={max_err}"

    print("KERNEL_OK")
</pallas_src>

<mosaic_0001>
module attributes {stable_mosaic.version = 11 : i64} {
  func.func @lstm_fc_kernel(%arg0: memref<8x2x512xf32, #tpu.memory_space<vmem>>, %arg1: memref<128x512xf32, #tpu.memory_space<vmem>>, %arg2: memref<128x512xf32, #tpu.memory_space<vmem>>, %arg3: memref<128x512xf32, #tpu.memory_space<vmem>>, %arg4: memref<1x512xf32, #tpu.memory_space<vmem>>, %arg5: memref<128x128xf32, #tpu.memory_space<vmem>>, %arg6: memref<1x128xf32, #tpu.memory_space<vmem>>, %arg7: memref<2x128xf32, #tpu.memory_space<vmem>>) attributes {dimension_semantics = [], scalar_prefetch = 0 : i64, scratch_operands = 0 : i64, tpu.core_type = #tpu.core_type<tc>} {
    %c0 = arith.constant 0 : index
    %c0_0 = arith.constant 0 : index
    %0 = vector.load %arg1[%c0, %c0_0] : memref<128x512xf32, #tpu.memory_space<vmem>>, vector<128x512xf32>
    %c0_1 = arith.constant 0 : index
    %c0_2 = arith.constant 0 : index
    %1 = vector.load %arg2[%c0_1, %c0_2] : memref<128x512xf32, #tpu.memory_space<vmem>>, vector<128x512xf32>
    %c0_3 = arith.constant 0 : index
    %c0_4 = arith.constant 0 : index
    %2 = vector.load %arg3[%c0_3, %c0_4] : memref<128x512xf32, #tpu.memory_space<vmem>>, vector<128x512xf32>
    %c0_5 = arith.constant 0 : index
    %c0_6 = arith.constant 0 : index
    %3 = vector.load %arg4[%c0_5, %c0_6] : memref<1x512xf32, #tpu.memory_space<vmem>>, vector<1x512xf32>
    %4 = vector.shape_cast %3 : vector<1x512xf32> to vector<1x512xf32>
    %5 = vector.broadcast %4 : vector<1x512xf32> to vector<2x512xf32>
    %cst = arith.constant 0.000000e+00 : f32
    %6 = vector.broadcast %cst : f32 to vector<2x128xf32>
    %cst_7 = arith.constant dense<0.000000e+00> : vector<2x512xf32>
    %7 = tpu.matmul %6, %2, %cst_7 {dimension_numbers = #tpu.dot_dimension_numbers<[1], [0], [0], [1], [0, 0, 1, 1], [], []>} : vector<2x128xf32>, vector<128x512xf32>, vector<2x512xf32> -> vector<2x512xf32>
    %8 = arith.addf %7, %5 : vector<2x512xf32>
    %c0_8 = arith.constant 0 : index
    %c0_9 = arith.constant 0 : index
    %c0_10 = arith.constant 0 : index
    %9 = vector.load %arg0[%c0_8, %c0_9, %c0_10] : memref<8x2x512xf32, #tpu.memory_space<vmem>>, vector<1x2x512xf32>
    %10 = vector.shape_cast %9 : vector<1x2x512xf32> to vector<2x512xf32>
    %cst_11 = arith.constant dense<0.000000e+00> : vector<2x512xf32>
    %11 = tpu.matmul %6, %0, %cst_11 {dimension_numbers = #tpu.dot_dimension_numbers<[1], [0], [0], [1], [0, 0, 1, 1], [], []>} : vector<2x128xf32>, vector<128x512xf32>, vector<2x512xf32> -> vector<2x512xf32>
    %12 = arith.addf %10, %11 : vector<2x512xf32>
    %13 = vector.extract_strided_slice %12 {offsets = [0, 0], sizes = [2, 384], strides = [1, 1]} : vector<2x512xf32> to vector<2x384xf32>
    %14 = arith.negf %13 : vector<2x384xf32>
    %15 = math.exp %14 : vector<2x384xf32>
    %cst_12 = arith.constant 1.000000e+00 : f32
    %16 = vector.broadcast %cst_12 : f32 to vector<2x384xf32>
    %17 = arith.addf %16, %15 : vector<2x384xf32>
    %18 = arith.divf %16, %17 : vector<2x384xf32>
    %19 = vector.extract_strided_slice %18 {offsets = [0, 0], sizes = [2, 128], strides = [1, 1]} : vector<2x384xf32> to vector<2x128xf32>
    %20 = vector.extract_strided_slice %18 {offsets = [0, 128], sizes = [2, 128], strides = [1, 1]} : vector<2x384xf32> to vector<2x128xf32>
    %21 = vector.extract_strided_slice %18 {offsets = [0, 256], sizes = [2, 128], strides = [1, 1]} : vector<2x384xf32> to vector<2x128xf32>
    %22 = vector.extract_strided_slice %12 {offsets = [0, 384], sizes = [2, 128], strides = [1, 1]} : vector<2x512xf32> to vector<2x128xf32>
    %23 = math.tanh %22 : vector<2x128xf32>
    %24 = arith.mulf %20, %6 : vector<2x128xf32>
    %25 = arith.mulf %19, %23 : vector<2x128xf32>
    %26 = arith.addf %24, %25 : vector<2x128xf32>
    %27 = math.tanh %26 : vector<2x128xf32>
    %28 = arith.mulf %21, %27 : vector<2x128xf32>
    %cst_13 = arith.constant dense<0.000000e+00> : vector<2x512xf32>
    %29 = tpu.matmul %28, %1, %cst_13 {dimension_numbers = #tpu.dot_dimension_numbers<[1], [0], [0], [1], [0, 0, 1, 1], [], []>} : vector<2x128xf32>, vector<128x512xf32>, vector<2x512xf32> -> vector<2x512xf32>
    %30 = arith.addf %8, %29 : vector<2x512xf32>
    %31 = vector.extract_strided_slice %30 {offsets = [0, 0], sizes = [2, 384], strides = [1, 1]} : vector<2x512xf32> to vector<2x384xf32>
    %32 = arith.negf %31 : vector<2x384xf32>
    %33 = math.exp %32 : vector<2x384xf32>
    %cst_14 = arith.constant 1.000000e+00 : f32
    %34 = vector.broadcast %cst_14 : f32 to vector<2x384xf32>
    %35 = arith.addf %34, %33 : vector<2x384xf32>
    %36 = arith.divf %34, %35 : vector<2x384xf32>
    %37 = vector.extract_strided_slice %36 {offsets = [0, 0], sizes = [2, 128], strides = [1, 1]} : vector<2x384xf32> to vector<2x128xf32>
    %38 = vector.extract_strided_slice %36 {offsets = [0, 128], sizes = [2, 128], strides = [1, 1]} : vector<2x384xf32> to vector<2x128xf32>
    %39 = vector.extract_strided_slice %36 {offsets = [0, 256], sizes = [2, 128], strides = [1, 1]} : vector<2x384xf32> to vector<2x128xf32>
    %40 = vector.extract_strided_slice %30 {offsets = [0, 384], sizes = [2, 128], strides = [1, 1]} : vector<2x512xf32> to vector<2x128xf32>
    %41 = math.tanh %40 : vector<2x128xf32>
    %42 = arith.mulf %38, %6 : vector<2x128xf32>
    %43 = arith.mulf %37, %41 : vector<2x128xf32>
    %44 = arith.addf %42, %43 : vector<2x128xf32>
    %45 = math.tanh %44 : vector<2x128xf32>
    %46 = arith.mulf %39, %45 : vector<2x128xf32>
    %cst_15 = arith.constant dense<0.000000e+00> : vector<2x512xf32>
    %47 = tpu.matmul %46, %2, %cst_15 {dimension_numbers = #tpu.dot_dimension_numbers<[1], [0], [0], [1], [0, 0, 1, 1], [], []>} : vector<2x128xf32>, vector<128x512xf32>, vector<2x512xf32> -> vector<2x512xf32>
    %48 = arith.addf %47, %5 : vector<2x512xf32>
    %c1 = arith.constant 1 : index
    %c0_16 = arith.constant 0 : index
    %c0_17 = arith.constant 0 : index
    %49 = vector.load %arg0[%c1, %c0_16, %c0_17] : memref<8x2x512xf32, #tpu.memory_space<vmem>>, vector<1x2x512xf32>
    %50 = vector.shape_cast %49 : vector<1x2x512xf32> to vector<2x512xf32>
    %cst_18 = arith.constant dense<0.000000e+00> : vector<2x512xf32>
    %51 = tpu.matmul %28, %0, %cst_18 {dimension_numbers = #tpu.dot_dimension_numbers<[1], [0], [0], [1], [0, 0, 1, 1], [], []>} : vector<2x128xf32>, vector<128x512xf32>, vector<2x512xf32> -> vector<2x512xf32>
    %52 = arith.addf %50, %51 : vector<2x512xf32>
    %53 = vector.extract_strided_slice %52 {offsets = [0, 0], sizes = [2, 384], strides = [1, 1]} : vector<2x512xf32> to vector<2x384xf32>
    %54 = arith.negf %53 : vector<2x384xf32>
    %55 = math.exp %54 : vector<2x384xf32>
    %cst_19 = arith.constant 1.000000e+00 : f32
    %56 = vector.broadcast %cst_19 : f32 to vector<2x384xf32>
    %57 = arith.addf %56, %55 : vector<2x384xf32>
    %58 = arith.divf %56, %57 : vector<2x384xf32>
    %59 = vector.extract_strided_slice %58 {offsets = [0, 0], sizes = [2, 128], strides = [1, 1]} : vector<2x384xf32> to vector<2x128xf32>
    %60 = vector.extract_strided_slice %58 {offsets = [0, 128], sizes = [2, 128], strides = [1, 1]} : vector<2x384xf32> to vector<2x128xf32>
    %61 = vector.extract_strided_slice %58 {offsets = [0, 256], sizes = [2, 128], strides = [1, 1]} : vector<2x384xf32> to vector<2x128xf32>
    %62 = vector.extract_strided_slice %52 {offsets = [0, 384], sizes = [2, 128], strides = [1, 1]} : vector<2x512xf32> to vector<2x128xf32>
    %63 = math.tanh %62 : vector<2x128xf32>
    %64 = arith.mulf %60, %26 : vector<2x128xf32>
    %65 = arith.mulf %59, %63 : vector<2x128xf32>
    %66 = arith.addf %64, %65 : vector<2x128xf32>
    %67 = math.tanh %66 : vector<2x128xf32>
    %68 = arith.mulf %61, %67 : vector<2x128xf32>
    %cst_20 = arith.constant dense<0.000000e+00> : vector<2x512xf32>
    %69 = tpu.matmul %68, %1, %cst_20 {dimension_numbers = #tpu.dot_dimension_numbers<[1], [0], [0], [1], [0, 0, 1, 1], [], []>} : vector<2x128xf32>, vector<128x512xf32>, vector<2x512xf32> -> vector<2x512xf32>
    %70 = arith.addf %48, %69 : vector<2x512xf32>
    %71 = vector.extract_strided_slice %70 {offsets = [0, 0], sizes = [2, 384], strides = [1, 1]} : vector<2x512xf32> to vector<2x384xf32>
    %72 = arith.negf %71 : vector<2x384xf32>
    %73 = math.exp %72 : vector<2x384xf32>
    %cst_21 = arith.constant 1.000000e+00 : f32
    %74 = vector.broadcast %cst_21 : f32 to vector<2x384xf32>
    %75 = arith.addf %74, %73 : vector<2x384xf32>
    %76 = arith.divf %74, %75 : vector<2x384xf32>
    %77 = vector.extract_strided_slice %76 {offsets = [0, 0], sizes = [2, 128], strides = [1, 1]} : vector<2x384xf32> to vector<2x128xf32>
    %78 = vector.extract_strided_slice %76 {offsets = [0, 128], sizes = [2, 128], strides = [1, 1]} : vector<2x384xf32> to vector<2x128xf32>
    %79 = vector.extract_strided_slice %76 {offsets = [0, 256], sizes = [2, 128], strides = [1, 1]} : vector<2x384xf32> to vector<2x128xf32>
    %80 = vector.extract_strided_slice %70 {offsets = [0, 384], sizes = [2, 128], strides = [1, 1]} : vector<2x512xf32> to vector<2x128xf32>
    %81 = math.tanh %80 : vector<2x128xf32>
    %82 = arith.mulf %78, %44 : vector<2x128xf32>
    %83 = arith.mulf %77, %81 : vector<2x128xf32>
    %84 = arith.addf %82, %83 : vector<2x128xf32>
    %85 = math.tanh %84 : vector<2x128xf32>
    %86 = arith.mulf %79, %85 : vector<2x128xf32>
    %cst_22 = arith.constant dense<0.000000e+00> : vector<2x512xf32>
    %87 = tpu.matmul %86, %2, %cst_22 {dimension_numbers = #tpu.dot_dimension_numbers<[1], [0], [0], [1], [0, 0, 1, 1], [], []>} : vector<2x128xf32>, vector<128x512xf32>, vector<2x512xf32> -> vector<2x512xf32>
    %88 = arith.addf %87, %5 : vector<2x512xf32>
    %c2 = arith.constant 2 : index
    %c0_23 = arith.constant 0 : index
    %c0_24 = arith.constant 0 : index
    %89 = vector.load %arg0[%c2, %c0_23, %c0_24] : memref<8x2x512xf32, #tpu.memory_space<vmem>>, vector<1x2x512xf32>
    %90 = vector.shape_cast %89 : vector<1x2x512xf32> to vector<2x512xf32>
    %cst_25 = arith.constant dense<0.000000e+00> : vector<2x512xf32>
    %91 = tpu.matmul %68, %0, %cst_25 {dimension_numbers = #tpu.dot_dimension_numbers<[1], [0], [0], [1], [0, 0, 1, 1], [], []>} : vector<2x128xf32>, vector<128x512xf32>, vector<2x512xf32> -> vector<2x512xf32>
    %92 = arith.addf %90, %91 : vector<2x512xf32>
    %93 = vector.extract_strided_slice %92 {offsets = [0, 0], sizes = [2, 384], strides = [1, 1]} : vector<2x512xf32> to vector<2x384xf32>
    %94 = arith.negf %93 : vector<2x384xf32>
    %95 = math.exp %94 : vector<2x384xf32>
    %cst_26 = arith.constant 1.000000e+00 : f32
    %96 = vector.broadcast %cst_26 : f32 to vector<2x384xf32>
    %97 = arith.addf %96, %95 : vector<2x384xf32>
    %98 = arith.divf %96, %97 : vector<2x384xf32>
    %99 = vector.extract_strided_slice %98 {offsets = [0, 0], sizes = [2, 128], strides = [1, 1]} : vector<2x384xf32> to vector<2x128xf32>
    %100 = vector.extract_strided_slice %98 {offsets = [0, 128], sizes = [2, 128], strides = [1, 1]} : vector<2x384xf32> to vector<2x128xf32>
    %101 = vector.extract_strided_slice %98 {offsets = [0, 256], sizes = [2, 128], strides = [1, 1]} : vector<2x384xf32> to vector<2x128xf32>
    %102 = vector.extract_strided_slice %92 {offsets = [0, 384], sizes = [2, 128], strides = [1, 1]} : vector<2x512xf32> to vector<2x128xf32>
    %103 = math.tanh %102 : vector<2x128xf32>
    %104 = arith.mulf %100, %66 : vector<2x128xf32>
    %105 = arith.mulf %99, %103 : vector<2x128xf32>
    %106 = arith.addf %104, %105 : vector<2x128xf32>
    %107 = math.tanh %106 : vector<2x128xf32>
    %108 = arith.mulf %101, %107 : vector<2x128xf32>
    %cst_27 = arith.constant dense<0.000000e+00> : vector<2x512xf32>
    %109 = tpu.matmul %108, %1, %cst_27 {dimension_numbers = #tpu.dot_dimension_numbers<[1], [0], [0], [1], [0, 0, 1, 1], [], []>} : vector<2x128xf32>, vector<128x512xf32>, vector<2x512xf32> -> vector<2x512xf32>
    %110 = arith.addf %88, %109 : vector<2x512xf32>
    %111 = vector.extract_strided_slice %110 {offsets = [0, 0], sizes = [2, 384], strides = [1, 1]} : vector<2x512xf32> to vector<2x384xf32>
    %112 = arith.negf %111 : vector<2x384xf32>
    %113 = math.exp %112 : vector<2x384xf32>
    %cst_28 = arith.constant 1.000000e+00 : f32
    %114 = vector.broadcast %cst_28 : f32 to vector<2x384xf32>
    %115 = arith.addf %114, %113 : vector<2x384xf32>
    %116 = arith.divf %114, %115 : vector<2x384xf32>
    %117 = vector.extract_strided_slice %116 {offsets = [0, 0], sizes = [2, 128], strides = [1, 1]} : vector<2x384xf32> to vector<2x128xf32>
    %118 = vector.extract_strided_slice %116 {offsets = [0, 128], sizes = [2, 128], strides = [1, 1]} : vector<2x384xf32> to vector<2x128xf32>
    %119 = vector.extract_strided_slice %116 {offsets = [0, 256], sizes = [2, 128], strides = [1, 1]} : vector<2x384xf32> to vector<2x128xf32>
    %120 = vector.extract_strided_slice %110 {offsets = [0, 384], sizes = [2, 128], strides = [1, 1]} : vector<2x512xf32> to vector<2x128xf32>
    %121 = math.tanh %120 : vector<2x128xf32>
    %122 = arith.mulf %118, %84 : vector<2x128xf32>
    %123 = arith.mulf %117, %121 : vector<2x128xf32>
    %124 = arith.addf %122, %123 : vector<2x128xf32>
    %125 = math.tanh %124 : vector<2x128xf32>
    %126 = arith.mulf %119, %125 : vector<2x128xf32>
    %cst_29 = arith.constant dense<0.000000e+00> : vector<2x512xf32>
    %127 = tpu.matmul %126, %2, %cst_29 {dimension_numbers = #tpu.dot_dimension_numbers<[1], [0], [0], [1], [0, 0, 1, 1], [], []>} : vector<2x128xf32>, vector<128x512xf32>, vector<2x512xf32> -> vector<2x512xf32>
    %128 = arith.addf %127, %5 : vector<2x512xf32>
    %c3 = arith.constant 3 : index
    %c0_30 = arith.constant 0 : index
    %c0_31 = arith.constant 0 : index
    %129 = vector.load %arg0[%c3, %c0_30, %c0_31] : memref<8x2x512xf32, #tpu.memory_space<vmem>>, vector<1x2x512xf32>
    %130 = vector.shape_cast %129 : vector<1x2x512xf32> to vector<2x512xf32>
    %cst_32 = arith.constant dense<0.000000e+00> : vector<2x512xf32>
    %131 = tpu.matmul %108, %0, %cst_32 {dimension_numbers = #tpu.dot_dimension_numbers<[1], [0], [0], [1], [0, 0, 1, 1], [], []>} : vector<2x128xf32>, vector<128x512xf32>, vector<2x512xf32> -> vector<2x512xf32>
    %132 = arith.addf %130, %131 : vector<2x512xf32>
    %133 = vector.extract_strided_slice %132 {offsets = [0, 0], sizes = [2, 384], strides = [1, 1]} : vector<2x512xf32> to vector<2x384xf32>
    %134 = arith.negf %133 : vector<2x384xf32>
    %135 = math.exp %134 : vector<2x384xf32>
    %cst_33 = arith.constant 1.000000e+00 : f32
    %136 = vector.broadcast %cst_33 : f32 to vector<2x384xf32>
    %137 = arith.addf %136, %135 : vector<2x384xf32>
    %138 = arith.divf %136, %137 : vector<2x384xf32>
    %139 = vector.extract_strided_slice %138 {offsets = [0, 0], sizes = [2, 128], strides = [1, 1]} : vector<2x384xf32> to vector<2x128xf32>
    %140 = vector.extract_strided_slice %138 {offsets = [0, 128], sizes = [2, 128], strides = [1, 1]} : vector<2x384xf32> to vector<2x128xf32>
    %141 = vector.extract_strided_slice %138 {offsets = [0, 256], sizes = [2, 128], strides = [1, 1]} : vector<2x384xf32> to vector<2x128xf32>
    %142 = vector.extract_strided_slice %132 {offsets = [0, 384], sizes = [2, 128], strides = [1, 1]} : vector<2x512xf32> to vector<2x128xf32>
    %143 = math.tanh %142 : vector<2x128xf32>
    %144 = arith.mulf %140, %106 : vector<2x128xf32>
    %145 = arith.mulf %139, %143 : vector<2x128xf32>
    %146 = arith.addf %144, %145 : vector<2x128xf32>
    %147 = math.tanh %146 : vector<2x128xf32>
    %148 = arith.mulf %141, %147 : vector<2x128xf32>
    %cst_34 = arith.constant dense<0.000000e+00> : vector<2x512xf32>
    %149 = tpu.matmul %148, %1, %cst_34 {dimension_numbers = #tpu.dot_dimension_numbers<[1], [0], [0], [1], [0, 0, 1, 1], [], []>} : vector<2x128xf32>, vector<128x512xf32>, vector<2x512xf32> -> vector<2x512xf32>
    %150 = arith.addf %128, %149 : vector<2x512xf32>
    %151 = vector.extract_strided_slice %150 {offsets = [0, 0], sizes = [2, 384], strides = [1, 1]} : vector<2x512xf32> to vector<2x384xf32>
    %152 = arith.negf %151 : vector<2x384xf32>
    %153 = math.exp %152 : vector<2x384xf32>
    %cst_35 = arith.constant 1.000000e+00 : f32
    %154 = vector.broadcast %cst_35 : f32 to vector<2x384xf32>
    %155 = arith.addf %154, %153 : vector<2x384xf32>
    %156 = arith.divf %154, %155 : vector<2x384xf32>
    %157 = vector.extract_strided_slice %156 {offsets = [0, 0], sizes = [2, 128], strides = [1, 1]} : vector<2x384xf32> to vector<2x128xf32>
    %158 = vector.extract_strided_slice %156 {offsets = [0, 128], sizes = [2, 128], strides = [1, 1]} : vector<2x384xf32> to vector<2x128xf32>
    %159 = vector.extract_strided_slice %156 {offsets = [0, 256], sizes = [2, 128], strides = [1, 1]} : vector<2x384xf32> to vector<2x128xf32>
    %160 = vector.extract_strided_slice %150 {offsets = [0, 384], sizes = [2, 128], strides = [1, 1]} : vector<2x512xf32> to vector<2x128xf32>
    %161 = math.tanh %160 : vector<2x128xf32>
    %162 = arith.mulf %158, %124 : vector<2x128xf32>
    %163 = arith.mulf %157, %161 : vector<2x128xf32>
    %164 = arith.addf %162, %163 : vector<2x128xf32>
    %165 = math.tanh %164 : vector<2x128xf32>
    %166 = arith.mulf %159, %165 : vector<2x128xf32>
    %cst_36 = arith.constant dense<0.000000e+00> : vector<2x512xf32>
    %167 = tpu.matmul %166, %2, %cst_36 {dimension_numbers = #tpu.dot_dimension_numbers<[1], [0], [0], [1], [0, 0, 1, 1], [], []>} : vector<2x128xf32>, vector<128x512xf32>, vector<2x512xf32> -> vector<2x512xf32>
    %168 = arith.addf %167, %5 : vector<2x512xf32>
    %c4 = arith.constant 4 : index
    %c0_37 = arith.constant 0 : index
    %c0_38 = arith.constant 0 : index
    %169 = vector.load %arg0[%c4, %c0_37, %c0_38] : memref<8x2x512xf32, #tpu.memory_space<vmem>>, vector<1x2x512xf32>
    %170 = vector.shape_cast %169 : vector<1x2x512xf32> to vector<2x512xf32>
    %cst_39 = arith.constant dense<0.000000e+00> : vector<2x512xf32>
    %171 = tpu.matmul %148, %0, %cst_39 {dimension_numbers = #tpu.dot_dimension_numbers<[1], [0], [0], [1], [0, 0, 1, 1], [], []>} : vector<2x128xf32>, vector<128x512xf32>, vector<2x512xf32> -> vector<2x512xf32>
    %172 = arith.addf %170, %171 : vector<2x512xf32>
    %173 = vector.extract_strided_slice %172 {offsets = [0, 0], sizes = [2, 384], strides = [1, 1]} : vector<2x512xf32> to vector<2x384xf32>
    %174 = arith.negf %173 : vector<2x384xf32>
    %175 = math.exp %174 : vector<2x384xf32>
    %cst_40 = arith.constant 1.000000e+00 : f32
    %176 = vector.broadcast %cst_40 : f32 to vector<2x384xf32>
    %177 = arith.addf %176, %175 : vector<2x384xf32>
    %178 = arith.divf %176, %177 : vector<2x384xf32>
    %179 = vector.extract_strided_slice %178 {offsets = [0, 0], sizes = [2, 128], strides = [1, 1]} : vector<2x384xf32> to vector<2x128xf32>
    %180 = vector.extract_strided_slice %178 {offsets = [0, 128], sizes = [2, 128], strides = [1, 1]} : vector<2x384xf32> to vector<2x128xf32>
    %181 = vector.extract_strided_slice %178 {offsets = [0, 256], sizes = [2, 128], strides = [1, 1]} : vector<2x384xf32> to vector<2x128xf32>
    %182 = vector.extract_strided_slice %172 {offsets = [0, 384], sizes = [2, 128], strides = [1, 1]} : vector<2x512xf32> to vector<2x128xf32>
    %183 = math.tanh %182 : vector<2x128xf32>
    %184 = arith.mulf %180, %146 : vector<2x128xf32>
    %185 = arith.mulf %179, %183 : vector<2x128xf32>
    %186 = arith.addf %184, %185 : vector<2x128xf32>
    %187 = math.tanh %186 : vector<2x128xf32>
    %188 = arith.mulf %181, %187 : vector<2x128xf32>
    %cst_41 = arith.constant dense<0.000000e+00> : vector<2x512xf32>
    %189 = tpu.matmul %188, %1, %cst_41 {dimension_numbers = #tpu.dot_dimension_numbers<[1], [0], [0], [1], [0, 0, 1, 1], [], []>} : vector<2x128xf32>, vector<128x512xf32>, vector<2x512xf32> -> vector<2x512xf32>
    %190 = arith.addf %168, %189 : vector<2x512xf32>
    %191 = vector.extract_strided_slice %190 {offsets = [0, 0], sizes = [2, 384], strides = [1, 1]} : vector<2x512xf32> to vector<2x384xf32>
    %192 = arith.negf %191 : vector<2x384xf32>
    %193 = math.exp %192 : vector<2x384xf32>
    %cst_42 = arith.constant 1.000000e+00 : f32
    %194 = vector.broadcast %cst_42 : f32 to vector<2x384xf32>
    %195 = arith.addf %194, %193 : vector<2x384xf32>
    %196 = arith.divf %194, %195 : vector<2x384xf32>
    %197 = vector.extract_strided_slice %196 {offsets = [0, 0], sizes = [2, 128], strides = [1, 1]} : vector<2x384xf32> to vector<2x128xf32>
    %198 = vector.extract_strided_slice %196 {offsets = [0, 128], sizes = [2, 128], strides = [1, 1]} : vector<2x384xf32> to vector<2x128xf32>
    %199 = vector.extract_strided_slice %196 {offsets = [0, 256], sizes = [2, 128], strides = [1, 1]} : vector<2x384xf32> to vector<2x128xf32>
    %200 = vector.extract_strided_slice %190 {offsets = [0, 384], sizes = [2, 128], strides = [1, 1]} : vector<2x512xf32> to vector<2x128xf32>
    %201 = math.tanh %200 : vector<2x128xf32>
    %202 = arith.mulf %198, %164 : vector<2x128xf32>
    %203 = arith.mulf %197, %201 : vector<2x128xf32>
    %204 = arith.addf %202, %203 : vector<2x128xf32>
    %205 = math.tanh %204 : vector<2x128xf32>
    %206 = arith.mulf %199, %205 : vector<2x128xf32>
    %cst_43 = arith.constant dense<0.000000e+00> : vector<2x512xf32>
    %207 = tpu.matmul %206, %2, %cst_43 {dimension_numbers = #tpu.dot_dimension_numbers<[1], [0], [0], [1], [0, 0, 1, 1], [], []>} : vector<2x128xf32>, vector<128x512xf32>, vector<2x512xf32> -> vector<2x512xf32>
    %208 = arith.addf %207, %5 : vector<2x512xf32>
    %c5 = arith.constant 5 : index
    %c0_44 = arith.constant 0 : index
    %c0_45 = arith.constant 0 : index
    %209 = vector.load %arg0[%c5, %c0_44, %c0_45] : memref<8x2x512xf32, #tpu.memory_space<vmem>>, vector<1x2x512xf32>
    %210 = vector.shape_cast %209 : vector<1x2x512xf32> to vector<2x512xf32>
    %cst_46 = arith.constant dense<0.000000e+00> : vector<2x512xf32>
    %211 = tpu.matmul %188, %0, %cst_46 {dimension_numbers = #tpu.dot_dimension_numbers<[1], [0], [0], [1], [0, 0, 1, 1], [], []>} : vector<2x128xf32>, vector<128x512xf32>, vector<2x512xf32> -> vector<2x512xf32>
    %212 = arith.addf %210, %211 : vector<2x512xf32>
    %213 = vector.extract_strided_slice %212 {offsets = [0, 0], sizes = [2, 384], strides = [1, 1]} : vector<2x512xf32> to vector<2x384xf32>
    %214 = arith.negf %213 : vector<2x384xf32>
    %215 = math.exp %214 : vector<2x384xf32>
    %cst_47 = arith.constant 1.000000e+00 : f32
    %216 = vector.broadcast %cst_47 : f32 to vector<2x384xf32>
    %217 = arith.addf %216, %215 : vector<2x384xf32>
    %218 = arith.divf %216, %217 : vector<2x384xf32>
    %219 = vector.extract_strided_slice %218 {offsets = [0, 0], sizes = [2, 128], strides = [1, 1]} : vector<2x384xf32> to vector<2x128xf32>
    %220 = vector.extract_strided_slice %218 {offsets = [0, 128], sizes = [2, 128], strides = [1, 1]} : vector<2x384xf32> to vector<2x128xf32>
    %221 = vector.extract_strided_slice %218 {offsets = [0, 256], sizes = [2, 128], strides = [1, 1]} : vector<2x384xf32> to vector<2x128xf32>
    %222 = vector.extract_strided_slice %212 {offsets = [0, 384], sizes = [2, 128], strides = [1, 1]} : vector<2x512xf32> to vector<2x128xf32>
    %223 = math.tanh %222 : vector<2x128xf32>
    %224 = arith.mulf %220, %186 : vector<2x128xf32>
    %225 = arith.mulf %219, %223 : vector<2x128xf32>
    %226 = arith.addf %224, %225 : vector<2x128xf32>
    %227 = math.tanh %226 : vector<2x128xf32>
    %228 = arith.mulf %221, %227 : vector<2x128xf32>
    %cst_48 = arith.constant dense<0.000000e+00> : vector<2x512xf32>
    %229 = tpu.matmul %228, %1, %cst_48 {dimension_numbers = #tpu.dot_dimension_numbers<[1], [0], [0], [1], [0, 0, 1, 1], [], []>} : vector<2x128xf32>, vector<128x512xf32>, vector<2x512xf32> -> vector<2x512xf32>
    %230 = arith.addf %208, %229 : vector<2x512xf32>
    %231 = vector.extract_strided_slice %230 {offsets = [0, 0], sizes = [2, 384], strides = [1, 1]} : vector<2x512xf32> to vector<2x384xf32>
    %232 = arith.negf %231 : vector<2x384xf32>
    %233 = math.exp %232 : vector<2x384xf32>
    %cst_49 = arith.constant 1.000000e+00 : f32
    %234 = vector.broadcast %cst_49 : f32 to vector<2x384xf32>
    %235 = arith.addf %234, %233 : vector<2x384xf32>
    %236 = arith.divf %234, %235 : vector<2x384xf32>
    %237 = vector.extract_strided_slice %236 {offsets = [0, 0], sizes = [2, 128], strides = [1, 1]} : vector<2x384xf32> to vector<2x128xf32>
    %238 = vector.extract_strided_slice %236 {offsets = [0, 128], sizes = [2, 128], strides = [1, 1]} : vector<2x384xf32> to vector<2x128xf32>
    %239 = vector.extract_strided_slice %236 {offsets = [0, 256], sizes = [2, 128], strides = [1, 1]} : vector<2x384xf32> to vector<2x128xf32>
    %240 = vector.extract_strided_slice %230 {offsets = [0, 384], sizes = [2, 128], strides = [1, 1]} : vector<2x512xf32> to vector<2x128xf32>
    %241 = math.tanh %240 : vector<2x128xf32>
    %242 = arith.mulf %238, %204 : vector<2x128xf32>
    %243 = arith.mulf %237, %241 : vector<2x128xf32>
    %244 = arith.addf %242, %243 : vector<2x128xf32>
    %245 = math.tanh %244 : vector<2x128xf32>
    %246 = arith.mulf %239, %245 : vector<2x128xf32>
    %cst_50 = arith.constant dense<0.000000e+00> : vector<2x512xf32>
    %247 = tpu.matmul %246, %2, %cst_50 {dimension_numbers = #tpu.dot_dimension_numbers<[1], [0], [0], [1], [0, 0, 1, 1], [], []>} : vector<2x128xf32>, vector<128x512xf32>, vector<2x512xf32> -> vector<2x512xf32>
    %248 = arith.addf %247, %5 : vector<2x512xf32>
    %c6 = arith.constant 6 : index
    %c0_51 = arith.constant 0 : index
    %c0_52 = arith.constant 0 : index
    %249 = vector.load %arg0[%c6, %c0_51, %c0_52] : memref<8x2x512xf32, #tpu.memory_space<vmem>>, vector<1x2x512xf32>
    %250 = vector.shape_cast %249 : vector<1x2x512xf32> to vector<2x512xf32>
    %cst_53 = arith.constant dense<0.000000e+00> : vector<2x512xf32>
    %251 = tpu.matmul %228, %0, %cst_53 {dimension_numbers = #tpu.dot_dimension_numbers<[1], [0], [0], [1], [0, 0, 1, 1], [], []>} : vector<2x128xf32>, vector<128x512xf32>, vector<2x512xf32> -> vector<2x512xf32>
    %252 = arith.addf %250, %251 : vector<2x512xf32>
    %253 = vector.extract_strided_slice %252 {offsets = [0, 0], sizes = [2, 384], strides = [1, 1]} : vector<2x512xf32> to vector<2x384xf32>
    %254 = arith.negf %253 : vector<2x384xf32>
    %255 = math.exp %254 : vector<2x384xf32>
    %cst_54 = arith.constant 1.000000e+00 : f32
    %256 = vector.broadcast %cst_54 : f32 to vector<2x384xf32>
    %257 = arith.addf %256, %255 : vector<2x384xf32>
    %258 = arith.divf %256, %257 : vector<2x384xf32>
    %259 = vector.extract_strided_slice %258 {offsets = [0, 0], sizes = [2, 128], strides = [1, 1]} : vector<2x384xf32> to vector<2x128xf32>
    %260 = vector.extract_strided_slice %258 {offsets = [0, 128], sizes = [2, 128], strides = [1, 1]} : vector<2x384xf32> to vector<2x128xf32>
    %261 = vector.extract_strided_slice %258 {offsets = [0, 256], sizes = [2, 128], strides = [1, 1]} : vector<2x384xf32> to vector<2x128xf32>
    %262 = vector.extract_strided_slice %252 {offsets = [0, 384], sizes = [2, 128], strides = [1, 1]} : vector<2x512xf32> to vector<2x128xf32>
    %263 = math.tanh %262 : vector<2x128xf32>
    %264 = arith.mulf %260, %226 : vector<2x128xf32>
    %265 = arith.mulf %259, %263 : vector<2x128xf32>
    %266 = arith.addf %264, %265 : vector<2x128xf32>
    %267 = math.tanh %266 : vector<2x128xf32>
    %268 = arith.mulf %261, %267 : vector<2x128xf32>
    %cst_55 = arith.constant dense<0.000000e+00> : vector<2x512xf32>
    %269 = tpu.matmul %268, %1, %cst_55 {dimension_numbers = #tpu.dot_dimension_numbers<[1], [0], [0], [1], [0, 0, 1, 1], [], []>} : vector<2x128xf32>, vector<128x512xf32>, vector<2x512xf32> -> vector<2x512xf32>
    %270 = arith.addf %248, %269 : vector<2x512xf32>
    %271 = vector.extract_strided_slice %270 {offsets = [0, 0], sizes = [2, 384], strides = [1, 1]} : vector<2x512xf32> to vector<2x384xf32>
    %272 = arith.negf %271 : vector<2x384xf32>
    %273 = math.exp %272 : vector<2x384xf32>
    %cst_56 = arith.constant 1.000000e+00 : f32
    %274 = vector.broadcast %cst_56 : f32 to vector<2x384xf32>
    %275 = arith.addf %274, %273 : vector<2x384xf32>
    %276 = arith.divf %274, %275 : vector<2x384xf32>
    %277 = vector.extract_strided_slice %276 {offsets = [0, 0], sizes = [2, 128], strides = [1, 1]} : vector<2x384xf32> to vector<2x128xf32>
    %278 = vector.extract_strided_slice %276 {offsets = [0, 128], sizes = [2, 128], strides = [1, 1]} : vector<2x384xf32> to vector<2x128xf32>
    %279 = vector.extract_strided_slice %276 {offsets = [0, 256], sizes = [2, 128], strides = [1, 1]} : vector<2x384xf32> to vector<2x128xf32>
    %280 = vector.extract_strided_slice %270 {offsets = [0, 384], sizes = [2, 128], strides = [1, 1]} : vector<2x512xf32> to vector<2x128xf32>
    %281 = math.tanh %280 : vector<2x128xf32>
    %282 = arith.mulf %278, %244 : vector<2x128xf32>
    %283 = arith.mulf %277, %281 : vector<2x128xf32>
    %284 = arith.addf %282, %283 : vector<2x128xf32>
    %285 = math.tanh %284 : vector<2x128xf32>
    %286 = arith.mulf %279, %285 : vector<2x128xf32>
    %cst_57 = arith.constant dense<0.000000e+00> : vector<2x512xf32>
    %287 = tpu.matmul %286, %2, %cst_57 {dimension_numbers = #tpu.dot_dimension_numbers<[1], [0], [0], [1], [0, 0, 1, 1], [], []>} : vector<2x128xf32>, vector<128x512xf32>, vector<2x512xf32> -> vector<2x512xf32>
    %288 = arith.addf %287, %5 : vector<2x512xf32>
    %c7 = arith.constant 7 : index
    %c0_58 = arith.constant 0 : index
    %c0_59 = arith.constant 0 : index
    %289 = vector.load %arg0[%c7, %c0_58, %c0_59] : memref<8x2x512xf32, #tpu.memory_space<vmem>>, vector<1x2x512xf32>
    %290 = vector.shape_cast %289 : vector<1x2x512xf32> to vector<2x512xf32>
    %cst_60 = arith.constant dense<0.000000e+00> : vector<2x512xf32>
    %291 = tpu.matmul %268, %0, %cst_60 {dimension_numbers = #tpu.dot_dimension_numbers<[1], [0], [0], [1], [0, 0, 1, 1], [], []>} : vector<2x128xf32>, vector<128x512xf32>, vector<2x512xf32> -> vector<2x512xf32>
    %292 = arith.addf %290, %291 : vector<2x512xf32>
    %293 = vector.extract_strided_slice %292 {offsets = [0, 0], sizes = [2, 384], strides = [1, 1]} : vector<2x512xf32> to vector<2x384xf32>
    %294 = arith.negf %293 : vector<2x384xf32>
    %295 = math.exp %294 : vector<2x384xf32>
    %cst_61 = arith.constant 1.000000e+00 : f32
    %296 = vector.broadcast %cst_61 : f32 to vector<2x384xf32>
    %297 = arith.addf %296, %295 : vector<2x384xf32>
    %298 = arith.divf %296, %297 : vector<2x384xf32>
    %299 = vector.extract_strided_slice %298 {offsets = [0, 0], sizes = [2, 128], strides = [1, 1]} : vector<2x384xf32> to vector<2x128xf32>
    %300 = vector.extract_strided_slice %298 {offsets = [0, 128], sizes = [2, 128], strides = [1, 1]} : vector<2x384xf32> to vector<2x128xf32>
    %301 = vector.extract_strided_slice %298 {offsets = [0, 256], sizes = [2, 128], strides = [1, 1]} : vector<2x384xf32> to vector<2x128xf32>
    %302 = vector.extract_strided_slice %292 {offsets = [0, 384], sizes = [2, 128], strides = [1, 1]} : vector<2x512xf32> to vector<2x128xf32>
    %303 = math.tanh %302 : vector<2x128xf32>
    %304 = arith.mulf %300, %266 : vector<2x128xf32>
    %305 = arith.mulf %299, %303 : vector<2x128xf32>
    %306 = arith.addf %304, %305 : vector<2x128xf32>
    %307 = math.tanh %306 : vector<2x128xf32>
    %308 = arith.mulf %301, %307 : vector<2x128xf32>
    %cst_62 = arith.constant dense<0.000000e+00> : vector<2x512xf32>
    %309 = tpu.matmul %308, %1, %cst_62 {dimension_numbers = #tpu.dot_dimension_numbers<[1], [0], [0], [1], [0, 0, 1, 1], [], []>} : vector<2x128xf32>, vector<128x512xf32>, vector<2x512xf32> -> vector<2x512xf32>
    %310 = arith.addf %288, %309 : vector<2x512xf32>
    %311 = vector.extract_strided_slice %310 {offsets = [0, 0], sizes = [2, 384], strides = [1, 1]} : vector<2x512xf32> to vector<2x384xf32>
    %312 = arith.negf %311 : vector<2x384xf32>
    %313 = math.exp %312 : vector<2x384xf32>
    %cst_63 = arith.constant 1.000000e+00 : f32
    %314 = vector.broadcast %cst_63 : f32 to vector<2x384xf32>
    %315 = arith.addf %314, %313 : vector<2x384xf32>
    %316 = arith.divf %314, %315 : vector<2x384xf32>
    %317 = vector.extract_strided_slice %316 {offsets = [0, 0], sizes = [2, 128], strides = [1, 1]} : vector<2x384xf32> to vector<2x128xf32>
    %318 = vector.extract_strided_slice %316 {offsets = [0, 128], sizes = [2, 128], strides = [1, 1]} : vector<2x384xf32> to vector<2x128xf32>
    %319 = vector.extract_strided_slice %316 {offsets = [0, 256], sizes = [2, 128], strides = [1, 1]} : vector<2x384xf32> to vector<2x128xf32>
    %320 = vector.extract_strided_slice %310 {offsets = [0, 384], sizes = [2, 128], strides = [1, 1]} : vector<2x512xf32> to vector<2x128xf32>
    %321 = math.tanh %320 : vector<2x128xf32>
    %322 = arith.mulf %318, %284 : vector<2x128xf32>
    %323 = arith.mulf %317, %321 : vector<2x128xf32>
    %324 = arith.addf %322, %323 : vector<2x128xf32>
    %325 = math.tanh %324 : vector<2x128xf32>
    %326 = arith.mulf %319, %325 : vector<2x128xf32>
    %c0_64 = arith.constant 0 : index
    %c0_65 = arith.constant 0 : index
    %327 = vector.load %arg5[%c0_64, %c0_65] : memref<128x128xf32, #tpu.memory_space<vmem>>, vector<128x128xf32>
    %cst_66 = arith.constant dense<0.000000e+00> : vector<2x128xf32>
    %328 = tpu.matmul %326, %327, %cst_66 {dimension_numbers = #tpu.dot_dimension_numbers<[1], [0], [0], [1], [0, 0, 1, 1], [], []>} : vector<2x128xf32>, vector<128x128xf32>, vector<2x128xf32> -> vector<2x128xf32>
    %c0_67 = arith.constant 0 : index
    %c0_68 = arith.constant 0 : index
    %329 = vector.load %arg6[%c0_67, %c0_68] : memref<1x128xf32, #tpu.memory_space<vmem>>, vector<1x128xf32>
    %330 = vector.broadcast %329 : vector<1x128xf32> to vector<2x128xf32>
    %331 = arith.addf %328, %330 : vector<2x128xf32>
    %c0_69 = arith.constant 0 : index
    %c0_70 = arith.constant 0 : index
    %332 = vector.load %arg7[%c0_69, %c0_70] : memref<2x128xf32, #tpu.memory_space<vmem>>, vector<2x128xf32>
    tpu.vector_store %arg7[%c0_69, %c0_70], %331 {strides = array<i32>} : memref<2x128xf32, #tpu.memory_space<vmem>>, vector<2x128xf32>,
    return
  }
}

</mosaic_0001>

<llo_original>
// kernel: tpu_custom_call.1
$region0: #{tpu_custom_call.1}
  #allocation0 [shape = 'u32[]', space=smem, size = 0x4, offset = 0x4, fixed_abs, tag = 'smem constant byte address 0x4 - core index']
  #allocation1 [shape = 'u32[72,128]{1,0:T(1,128)}', space=vmem, size = 0x9000, scoped, tag = 'internal scratch']
  %s0 = inlined_call_operand.hbm [shape: f32[8,2,512], index: 0, kind: input, shape index: {}]
  %s1 = inlined_call_operand.hbm [shape: f32[128,512], index: 1, kind: input, shape index: {}]
  %s2 = inlined_call_operand.hbm [shape: f32[128,512], index: 2, kind: input, shape index: {}]
  %s3 = inlined_call_operand.hbm [shape: f32[128,512], index: 3, kind: input, shape index: {}]
  %s4 = inlined_call_operand.hbm [shape: f32[1,512], index: 4, kind: input, shape index: {}]
  %s5 = inlined_call_operand.hbm [shape: f32[128,128], index: 5, kind: input, shape index: {}]
  %s6 = inlined_call_operand.vmem [shape: f32[1,128], index: 6, kind: input, shape index: {}]
  %s7 = inlined_call_operand.hbm [shape: f32[2,128], index: 7, kind: output, shape index: {}]
  %s8 = sld [smem:[#allocation0]]
  $region62: #{tpu_custom_call.1} parent=0
    _
  %s10 = ssub.s32 1, %s8
  %s11 = scalar_select 0, %s10, %s8
  $region1: #{tpu_custom_call.1} parent=0
    #allocation2 [shape = 'u8[32768]{0}', space=vmem, size = 0x8000, scoped, tag = 'input window, operand 0, single buffered']
    #allocation3 [shape = 's32[1]{0}', space=sflag, size = 0x4, scoped, tag = 'scoped memory for tpu_custom_call.1']
    #allocation4 [shape = 's32[1]{0}', space=sflag, size = 0x4, scoped, tag = 'scoped memory for tpu_custom_call.1']
    #allocation5 [shape = 'u8[262144]{0}', space=vmem, size = 0x40000, scoped, tag = 'input window, operand 1, single buffered']
    #allocation6 [shape = 's32[1]{0}', space=sflag, size = 0x4, scoped, tag = 'scoped memory for tpu_custom_call.1']
    #allocation7 [shape = 'u8[262144]{0}', space=vmem, size = 0x40000, scoped, tag = 'input window, operand 2, single buffered']
    #allocation8 [shape = 'u8[262144]{0}', space=vmem, size = 0x40000, scoped, tag = 'input window, operand 3, single buffered']
    #allocation9 [shape = 's32[1]{0}', space=sflag, size = 0x4, scoped, tag = 'scoped memory for tpu_custom_call.1']
    #allocation10 [shape = 'u8[2048]{0}', space=vmem, size = 0x800, scoped, tag = 'input window, operand 4, single buffered']
    #allocation11 [shape = 'u8[65536]{0}', space=vmem, size = 0x10000, scoped, tag = 'input window, operand 5, single buffered']
    #allocation12 [shape = 's32[1]{0}', space=sflag, size = 0x4, scoped, tag = 'scoped memory for tpu_custom_call.1']
    #allocation13 [shape = 'u8[1024]{0}', space=vmem, size = 0x400, scoped, tag = 'output window, operand 0, single buffered']
    %12 = vsyncpa [#allocation3], 0
    %13 = vsyncpa [#allocation6], 0
    %14 = vsyncpa [#allocation9], 0
    %15 = vsyncpa [#allocation12], 0
    %16 = vsyncpa [#allocation4], 0
    // Predicated region
    $region2: #{tpu_custom_call.1} parent=1 // pred_check
      _
    $region3: #{tpu_custom_call.1} parent=1 // pred_check_branch
      %18 = sbr.rel (0) target = $region5
    $region4: #{tpu_custom_call.1} parent=1 // pred_region
      %20 = vsyncadd [#allocation3], 0
      %s21 = sshll.u32 %s0, 4
      %s22 = int_to_ptr.hbm [resolvable:$true] %s21
      %s23 = sshll.u32 [#allocation2], 4
      %s24 = int_to_ptr.vmem [resolvable:$true] %s23
      %29 = dma.hbm_to_vmem [thread:$0]  %s22, 1024, %s24, [#allocation3], 128, 128, 8
    $region5: #{tpu_custom_call.1} parent=1 // pred_fallthru
      _
    // Predicated region
    $region6: #{tpu_custom_call.1} parent=1 // pred_check
      _
    $region7: #{tpu_custom_call.1} parent=1 // pred_check_branch
      %31 = sbr.rel (0) target = $region9
    $region8: #{tpu_custom_call.1} parent=1 // pred_region
      %33 = vsyncadd [#allocation6], 0
      %s34 = sshll.u32 %s1, 4
      %s35 = int_to_ptr.hbm [resolvable:$true] %s34
      %s36 = sshll.u32 [#allocation5], 4
      %s37 = int_to_ptr.vmem [resolvable:$true] %s36
      %42 = dma.hbm_to_vmem [thread:$0]  %s35, 8192, %s37, [#allocation6], 512, 512, 32
    $region9: #{tpu_custom_call.1} parent=1 // pred_fallthru
      _
    // Predicated region
    $region10: #{tpu_custom_call.1} parent=1 // pred_check
      _
    $region11: #{tpu_custom_call.1} parent=1 // pred_check_branch
      %44 = sbr.rel (0) target = $region13
    $region12: #{tpu_custom_call.1} parent=1 // pred_region
      %46 = vsyncadd [#allocation6], 0
      %s47 = sshll.u32 %s2, 4
      %s48 = int_to_ptr.hbm [resolvable:$true] %s47
      %s49 = sshll.u32 [#allocation7], 4
      %s50 = int_to_ptr.vmem [resolvable:$true] %s49
      %55 = dma.hbm_to_vmem [thread:$0]  %s48, 8192, %s50, [#allocation6], 512, 512, 32
    $region13: #{tpu_custom_call.1} parent=1 // pred_fallthru
      _
    // Predicated region
    $region14: #{tpu_custom_call.1} parent=1 // pred_check
      _
    $region15: #{tpu_custom_call.1} parent=1 // pred_check_branch
      %57 = sbr.rel (0) target = $region17
    $region16: #{tpu_custom_call.1} parent=1 // pred_region
      %59 = vsyncadd [#allocation9], 0
      %s60 = sshll.u32 %s3, 4
      %s61 = int_to_ptr.hbm [resolvable:$true] %s60
      %s62 = sshll.u32 [#allocation8], 4
      %s63 = int_to_ptr.vmem [resolvable:$true] %s62
      %68 = dma.hbm_to_vmem [thread:$0]  %s61, 8192, %s63, [#allocation9], 512, 512, 32
    $region17: #{tpu_custom_call.1} parent=1 // pred_fallthru
      _
    // Predicated region
    $region18: #{tpu_custom_call.1} parent=1 // pred_check
      _
    $region19: #{tpu_custom_call.1} parent=1 // pred_check_branch
      %70 = sbr.rel (0) target = $region21
    $region20: #{tpu_custom_call.1} parent=1 // pred_region
      %72 = vsyncadd [#allocation9], 0
      %s74 = sshll.u32 %s4, 4
      %s75 = int_to_ptr.hbm [resolvable:$true] %s74
      %s76 = sshll.u32 [#allocation10], 4
      %s77 = int_to_ptr.vmem [resolvable:$true] %s76
      %79 = dma.hbm_to_vmem [thread:$0]  %s75, 64, %s77, [#allocation9]
    $region21: #{tpu_custom_call.1} parent=1 // pred_fallthru
      _
    // Predicated region
    $region22: #{tpu_custom_call.1} parent=1 // pred_check
      _
    $region23: #{tpu_custom_call.1} parent=1 // pred_check_branch
      %81 = sbr.rel (0) target = $region25
    $region24: #{tpu_custom_call.1} parent=1 // pred_region
      %83 = vsyncadd [#allocation12], 0
      %s84 = sshll.u32 %s5, 4
      %s85 = int_to_ptr.hbm [resolvable:$true] %s84
      %s86 = sshll.u32 [#allocation11], 4
      %s87 = int_to_ptr.vmem [resolvable:$true] %s86
      %92 = dma.hbm_to_vmem [thread:$0]  %s85, 2048, %s87, [#allocation12], 128, 128, 8
    $region25: #{tpu_custom_call.1} parent=1 // pred_fallthru
      _
    // Predicated region
    $region26: #{tpu_custom_call.1} parent=1 // pred_check
      _
    $region27: #{tpu_custom_call.1} parent=1 // pred_check_branch
      %94 = sbr.rel (0) target = $region29
    $region28: #{tpu_custom_call.1} parent=1 // pred_region
      _
    $region29: #{tpu_custom_call.1} parent=1 // pred_fallthru
      _
    // Predicated region
    $region30: #{tpu_custom_call.1} parent=1 // pred_check
      _
    $region31: #{tpu_custom_call.1} parent=1 // pred_check_branch
      %96 = sbr.rel (0) target = $region33
    $region32: #{tpu_custom_call.1} parent=1 // pred_region
      %98 = dma.done [#allocation3], 1024
    $region33: #{tpu_custom_call.1} parent=1 // pred_fallthru
      _
    // Predicated region
    $region34: #{tpu_custom_call.1} parent=1 // pred_check
      _
    $region35: #{tpu_custom_call.1} parent=1 // pred_check_branch
      %100 = sbr.rel (0) target = $region37
    $region36: #{tpu_custom_call.1} parent=1 // pred_region
      %102 = dma.done [#allocation6], 8192
    $region37: #{tpu_custom_call.1} parent=1 // pred_fallthru
      _
    // Predicated region
    $region38: #{tpu_custom_call.1} parent=1 // pred_check
      _
    $region39: #{tpu_custom_call.1} parent=1 // pred_check_branch
      %104 = sbr.rel (0) target = $region41
    $region40: #{tpu_custom_call.1} parent=1 // pred_region
      %106 = dma.done [#allocation6], 8192
    $region41: #{tpu_custom_call.1} parent=1 // pred_fallthru
      _
    // Predicated region
    $region42: #{tpu_custom_call.1} parent=1 // pred_check
      _
    $region43: #{tpu_custom_call.1} parent=1 // pred_check_branch
      %108 = sbr.rel (0) target = $region45
    $region44: #{tpu_custom_call.1} parent=1 // pred_region
      %110 = dma.done [#allocation9], 8192
    $region45: #{tpu_custom_call.1} parent=1 // pred_fallthru
      _
    // Predicated region
    $region46: #{tpu_custom_call.1} parent=1 // pred_check
      _
    $region47: #{tpu_custom_call.1} parent=1 // pred_check_branch
      %112 = sbr.rel (0) target = $region49
    $region48: #{tpu_custom_call.1} parent=1 // pred_region
      %114 = dma.done [#allocation9], 64
    $region49: #{tpu_custom_call.1} parent=1 // pred_fallthru
      _
    // Predicated region
    $region50: #{tpu_custom_call.1} parent=1 // pred_check
      _
    $region51: #{tpu_custom_call.1} parent=1 // pred_check_branch
      %116 = sbr.rel (0) target = $region53
    $region52: #{tpu_custom_call.1} parent=1 // pred_region
      %118 = dma.done [#allocation12], 2048
    $region53: #{tpu_custom_call.1} parent=1 // pred_fallthru
      _
    %v119 = vld [vmem:[#allocation5] sm:$0xff]
    %v120 = vld [vmem:[#allocation5 + $0x8] sm:$0xff]
    %v121 = vld [vmem:[#allocation5 + $0x10] sm:$0xff]
    %v122 = vld [vmem:[#allocation5 + $0x18] sm:$0xff]
    %v123 = vld [vmem:[#allocation5 + $0x20] sm:$0xff]
    %v124 = vld [vmem:[#allocation5 + $0x28] sm:$0xff]
    %v125 = vld [vmem:[#allocation5 + $0x30] sm:$0xff]
    %v126 = vld [vmem:[#allocation5 + $0x38] sm:$0xff]
    %v127 = vld [vmem:[#allocation5 + $0x40] sm:$0xff]
    %v128 = vld [vmem:[#allocation5 + $0x48] sm:$0xff]
    %v129 = vld [vmem:[#allocation5 + $0x50] sm:$0xff]
    %v130 = vld [vmem:[#allocation5 + $0x58] sm:$0xff]
    %v131 = vld [vmem:[#allocation5 + $0x60] sm:$0xff]
    %v132 = vld [vmem:[#allocation5 + $0x68] sm:$0xff]
    %v133 = vld [vmem:[#allocation5 + $0x70] sm:$0xff]
    %v134 = vld [vmem:[#allocation5 + $0x78] sm:$0xff]
    %v135 = vld [vmem:[#allocation5 + $0x80] sm:$0xff]
    %v136 = vld [vmem:[#allocation5 + $0x88] sm:$0xff]
    %v137 = vld [vmem:[#allocation5 + $0x90] sm:$0xff]
    %v138 = vld [vmem:[#allocation5 + $0x98] sm:$0xff]
    %v139 = vld [vmem:[#allocation5 + $0xa0] sm:$0xff]
    %v140 = vld [vmem:[#allocation5 + $0xa8] sm:$0xff]
    %v141 = vld [vmem:[#allocation5 + $0xb0] sm:$0xff]
    %v142 = vld [vmem:[#allocation5 + $0xb8] sm:$0xff]
    %v143 = vld [vmem:[#allocation5 + $0xc0] sm:$0xff]
    %v144 = vld [vmem:[#allocation5 + $0xc8] sm:$0xff]
    %v145 = vld [vmem:[#allocation5 + $0xd0] sm:$0xff]
    %v146 = vld [vmem:[#allocation5 + $0xd8] sm:$0xff]
    %v147 = vld [vmem:[#allocation5 + $0xe0] sm:$0xff]
    %v148 = vld [vmem:[#allocation5 + $0xe8] sm:$0xff]
    %v149 = vld [vmem:[#allocation5 + $0xf0] sm:$0xff]
    %v150 = vld [vmem:[#allocation5 + $0xf8] sm:$0xff]
    %v151 = vld [vmem:[#allocation5 + $0x100] sm:$0xff]
    %v152 = vld [vmem:[#allocation5 + $0x108] sm:$0xff]
    %v153 = vld [vmem:[#allocation5 + $0x110] sm:$0xff]
    %v154 = vld [vmem:[#allocation5 + $0x118] sm:$0xff]
    %v155 = vld [vmem:[#allocation5 + $0x120] sm:$0xff]
    %v156 = vld [vmem:[#allocation5 + $0x128] sm:$0xff]
    %v157 = vld [vmem:[#allocation5 + $0x130] sm:$0xff]
    %v158 = vld [vmem:[#allocation5 + $0x138] sm:$0xff]
    %v159 = vld [vmem:[#allocation5 + $0x140] sm:$0xff]
    %v160 = vld [vmem:[#allocation5 + $0x148] sm:$0xff]
    %v161 = vld [vmem:[#allocation5 + $0x150] sm:$0xff]
    %v162 = vld [vmem:[#allocation5 + $0x158] sm:$0xff]
    %v163 = vld [vmem:[#allocation5 + $0x160] sm:$0xff]
    %v164 = vld [vmem:[#allocation5 + $0x168] sm:$0xff]
    %v165 = vld [vmem:[#allocation5 + $0x170] sm:$0xff]
    %v166 = vld [vmem:[#allocation5 + $0x178] sm:$0xff]
    %v167 = vld [vmem:[#allocation5 + $0x180] sm:$0xff]
    %v168 = vld [vmem:[#allocation5 + $0x188] sm:$0xff]
    %v169 = vld [vmem:[#allocation5 + $0x190] sm:$0xff]
    %v170 = vld [vmem:[#allocation5 + $0x198] sm:$0xff]
    %v171 = vld [vmem:[#allocation5 + $0x1a0] sm:$0xff]
    %v172 = vld [vmem:[#allocation5 + $0x1a8] sm:$0xff]
    %v173 = vld [vmem:[#allocation5 + $0x1b0] sm:$0xff]
    %v174 = vld [vmem:[#allocation5 + $0x1b8] sm:$0xff]
    %v175 = vld [vmem:[#allocation5 + $0x1c0] sm:$0xff]
    %v176 = vld [vmem:[#allocation5 + $0x1c8] sm:$0xff]
    %v177 = vld [vmem:[#allocation5 + $0x1d0] sm:$0xff]
    %v178 = vld [vmem:[#allocation5 + $0x1d8] sm:$0xff]
    %v179 = vld [vmem:[#allocation5 + $0x1e0] sm:$0xff]
    %v180 = vld [vmem:[#allocation5 + $0x1e8] sm:$0xff]
    %v181 = vld [vmem:[#allocation5 + $0x1f0] sm:$0xff]
    %v182 = vld [vmem:[#allocation5 + $0x1f8] sm:$0xff]
    %v183 = vld [vmem:[#allocation7] sm:$0xff]
    %v184 = vld [vmem:[#allocation7 + $0x8] sm:$0xff]
    %v185 = vld [vmem:[#allocation7 + $0x10] sm:$0xff]
    %v186 = vld [vmem:[#allocation7 + $0x18] sm:$0xff]
    %v187 = vld [vmem:[#allocation7 + $0x20] sm:$0xff]
    %v188 = vld [vmem:[#allocation7 + $0x28] sm:$0xff]
    %v189 = vld [vmem:[#allocation7 + $0x30] sm:$0xff]
    %v190 = vld [vmem:[#allocation7 + $0x38] sm:$0xff]
    %v191 = vld [vmem:[#allocation7 + $0x40] sm:$0xff]
    %v192 = vld [vmem:[#allocation7 + $0x48] sm:$0xff]
    %v193 = vld [vmem:[#allocation7 + $0x50] sm:$0xff]
    %v194 = vld [vmem:[#allocation7 + $0x58] sm:$0xff]
    %v195 = vld [vmem:[#allocation7 + $0x60] sm:$0xff]
    %v196 = vld [vmem:[#allocation7 + $0x68] sm:$0xff]
    %v197 = vld [vmem:[#allocation7 + $0x70] sm:$0xff]
    %v198 = vld [vmem:[#allocation7 + $0x78] sm:$0xff]
    %v199 = vld [vmem:[#allocation7 + $0x80] sm:$0xff]
    %v200 = vld [vmem:[#allocation7 + $0x88] sm:$0xff]
    %v201 = vld [vmem:[#allocation7 + $0x90] sm:$0xff]
    %v202 = vld [vmem:[#allocation7 + $0x98] sm:$0xff]
    %v203 = vld [vmem:[#allocation7 + $0xa0] sm:$0xff]
    %v204 = vld [vmem:[#allocation7 + $0xa8] sm:$0xff]
    %v205 = vld [vmem:[#allocation7 + $0xb0] sm:$0xff]
    %v206 = vld [vmem:[#allocation7 + $0xb8] sm:$0xff]
    %v207 = vld [vmem:[#allocation7 + $0xc0] sm:$0xff]
    %v208 = vld [vmem:[#allocation7 + $0xc8] sm:$0xff]
    %v209 = vld [vmem:[#allocation7 + $0xd0] sm:$0xff]
    %v210 = vld [vmem:[#allocation7 + $0xd8] sm:$0xff]
    %v211 = vld [vmem:[#allocation7 + $0xe0] sm:$0xff]
    %v212 = vld [vmem:[#allocation7 + $0xe8] sm:$0xff]
    %v213 = vld [vmem:[#allocation7 + $0xf0] sm:$0xff]
    %v214 = vld [vmem:[#allocation7 + $0xf8] sm:$0xff]
    %v215 = vld [vmem:[#allocation7 + $0x100] sm:$0xff]
    %v216 = vld [vmem:[#allocation7 + $0x108] sm:$0xff]
    %v217 = vld [vmem:[#allocation7 + $0x110] sm:$0xff]
    %v218 = vld [vmem:[#allocation7 + $0x118] sm:$0xff]
    %v219 = vld [vmem:[#allocation7 + $0x120] sm:$0xff]
    %v220 = vld [vmem:[#allocation7 + $0x128] sm:$0xff]
    %v221 = vld [vmem:[#allocation7 + $0x130] sm:$0xff]
    %v222 = vld [vmem:[#allocation7 + $0x138] sm:$0xff]
    %v223 = vld [vmem:[#allocation7 + $0x140] sm:$0xff]
    %v224 = vld [vmem:[#allocation7 + $0x148] sm:$0xff]
    %v225 = vld [vmem:[#allocation7 + $0x150] sm:$0xff]
    %v226 = vld [vmem:[#allocation7 + $0x158] sm:$0xff]
    %v227 = vld [vmem:[#allocation7 + $0x160] sm:$0xff]
    %v228 = vld [vmem:[#allocation7 + $0x168] sm:$0xff]
    %v229 = vld [vmem:[#allocation7 + $0x170] sm:$0xff]
    %v230 = vld [vmem:[#allocation7 + $0x178] sm:$0xff]
    %v231 = vld [vmem:[#allocation7 + $0x180] sm:$0xff]
    %v232 = vld [vmem:[#allocation7 + $0x188] sm:$0xff]
    %v233 = vld [vmem:[#allocation7 + $0x190] sm:$0xff]
    %v234 = vld [vmem:[#allocation7 + $0x198] sm:$0xff]
    %v235 = vld [vmem:[#allocation7 + $0x1a0] sm:$0xff]
    %v236 = vld [vmem:[#allocation7 + $0x1a8] sm:$0xff]
    %v237 = vld [vmem:[#allocation7 + $0x1b0] sm:$0xff]
    %v238 = vld [vmem:[#allocation7 + $0x1b8] sm:$0xff]
    %v239 = vld [vmem:[#allocation7 + $0x1c0] sm:$0xff]
    %v240 = vld [vmem:[#allocation7 + $0x1c8] sm:$0xff]
    %v241 = vld [vmem:[#allocation7 + $0x1d0] sm:$0xff]
    %v242 = vld [vmem:[#allocation7 + $0x1d8] sm:$0xff]
    %v243 = vld [vmem:[#allocation7 + $0x1e0] sm:$0xff]
    %v244 = vld [vmem:[#allocation7 + $0x1e8] sm:$0xff]
    %v245 = vld [vmem:[#allocation7 + $0x1f0] sm:$0xff]
    %v246 = vld [vmem:[#allocation7 + $0x1f8] sm:$0xff]
    %v247 = vld [vmem:[#allocation8] sm:$0xff]
    %v248 = vld [vmem:[#allocation8 + $0x8] sm:$0xff]
    %v249 = vld [vmem:[#allocation8 + $0x10] sm:$0xff]
    %v250 = vld [vmem:[#allocation8 + $0x18] sm:$0xff]
    %v251 = vld [vmem:[#allocation8 + $0x20] sm:$0xff]
    %v252 = vld [vmem:[#allocation8 + $0x28] sm:$0xff]
    %v253 = vld [vmem:[#allocation8 + $0x30] sm:$0xff]
    %v254 = vld [vmem:[#allocation8 + $0x38] sm:$0xff]
    %v255 = vld [vmem:[#allocation8 + $0x40] sm:$0xff]
    %v256 = vld [vmem:[#allocation8 + $0x48] sm:$0xff]
    %v257 = vld [vmem:[#allocation8 + $0x50] sm:$0xff]
    %v258 = vld [vmem:[#allocation8 + $0x58] sm:$0xff]
    %v259 = vld [vmem:[#allocation8 + $0x60] sm:$0xff]
    %v260 = vld [vmem:[#allocation8 + $0x68] sm:$0xff]
    %v261 = vld [vmem:[#allocation8 + $0x70] sm:$0xff]
    %v262 = vld [vmem:[#allocation8 + $0x78] sm:$0xff]
    %v263 = vld [vmem:[#allocation8 + $0x80] sm:$0xff]
    %v264 = vld [vmem:[#allocation8 + $0x88] sm:$0xff]
    %v265 = vld [vmem:[#allocation8 + $0x90] sm:$0xff]
    %v266 = vld [vmem:[#allocation8 + $0x98] sm:$0xff]
    %v267 = vld [vmem:[#allocation8 + $0xa0] sm:$0xff]
    %v268 = vld [vmem:[#allocation8 + $0xa8] sm:$0xff]
    %v269 = vld [vmem:[#allocation8 + $0xb0] sm:$0xff]
    %v270 = vld [vmem:[#allocation8 + $0xb8] sm:$0xff]
    %v271 = vld [vmem:[#allocation8 + $0xc0] sm:$0xff]
    %v272 = vld [vmem:[#allocation8 + $0xc8] sm:$0xff]
    %v273 = vld [vmem:[#allocation8 + $0xd0] sm:$0xff]
    %v274 = vld [vmem:[#allocation8 + $0xd8] sm:$0xff]
    %v275 = vld [vmem:[#allocation8 + $0xe0] sm:$0xff]
    %v276 = vld [vmem:[#allocation8 + $0xe8] sm:$0xff]
    %v277 = vld [vmem:[#allocation8 + $0xf0] sm:$0xff]
    %v278 = vld [vmem:[#allocation8 + $0xf8] sm:$0xff]
    %v279 = vld [vmem:[#allocation8 + $0x100] sm:$0xff]
    %v280 = vld [vmem:[#allocation8 + $0x108] sm:$0xff]
    %v281 = vld [vmem:[#allocation8 + $0x110] sm:$0xff]
    %v282 = vld [vmem:[#allocation8 + $0x118] sm:$0xff]
    %v283 = vld [vmem:[#allocation8 + $0x120] sm:$0xff]
    %v284 = vld [vmem:[#allocation8 + $0x128] sm:$0xff]
    %v285 = vld [vmem:[#allocation8 + $0x130] sm:$0xff]
    %v286 = vld [vmem:[#allocation8 + $0x138] sm:$0xff]
    %v287 = vld [vmem:[#allocation8 + $0x140] sm:$0xff]
    %v288 = vld [vmem:[#allocation8 + $0x148] sm:$0xff]
    %v289 = vld [vmem:[#allocation8 + $0x150] sm:$0xff]
    %v290 = vld [vmem:[#allocation8 + $0x158] sm:$0xff]
    %v291 = vld [vmem:[#allocation8 + $0x160] sm:$0xff]
    %v292 = vld [vmem:[#allocation8 + $0x168] sm:$0xff]
    %v293 = vld [vmem:[#allocation8 + $0x170] sm:$0xff]
    %v294 = vld [vmem:[#allocation8 + $0x178] sm:$0xff]
    %v295 = vld [vmem:[#allocation8 + $0x180] sm:$0xff]
    %v296 = vld [vmem:[#allocation8 + $0x188] sm:$0xff]
    %v297 = vld [vmem:[#allocation8 + $0x190] sm:$0xff]
    %v298 = vld [vmem:[#allocation8 + $0x198] sm:$0xff]
    %v299 = vld [vmem:[#allocation8 + $0x1a0] sm:$0xff]
    %v300 = vld [vmem:[#allocation8 + $0x1a8] sm:$0xff]
    %v301 = vld [vmem:[#allocation8 + $0x1b0] sm:$0xff]
    %v302 = vld [vmem:[#allocation8 + $0x1b8] sm:$0xff]
    %v303 = vld [vmem:[#allocation8 + $0x1c0] sm:$0xff]
    %v304 = vld [vmem:[#allocation8 + $0x1c8] sm:$0xff]
    %v305 = vld [vmem:[#allocation8 + $0x1d0] sm:$0xff]
    %v306 = vld [vmem:[#allocation8 + $0x1d8] sm:$0xff]
    %v307 = vld [vmem:[#allocation8 + $0x1e0] sm:$0xff]
    %v308 = vld [vmem:[#allocation8 + $0x1e8] sm:$0xff]
    %v309 = vld [vmem:[#allocation8 + $0x1f0] sm:$0xff]
    %v310 = vld [vmem:[#allocation8 + $0x1f8] sm:$0xff]
    %v311 = vld [vmem:[#allocation10] sm:$0xf]
    %v313 = vperm.slane %v311, 0
    %v314 = vperm.slane %v311, 1
    %v315 = vperm.slane %v311, 2
    %v316 = vperm.slane %v311, 3
    %321 = vmatpush.msra.mxu0 %v307
    %322 = vmatpush.msra.mxu0 %v303
    %323 = vmatpush.msra.mxu0 %v299
    %324 = vmatpush.msra.mxu0 %v295
    %325 = vmatpush.msra.mxu0 %v291
    %326 = vmatpush.msra.mxu0 %v287
    %327 = vmatpush.msra.mxu0 %v283
    %328 = vmatpush.msra.mxu0 %v279
    %329 = vmatpush.msra.mxu0 %v275
    %330 = vmatpush.msra.mxu0 %v271
    %331 = vmatpush.msra.mxu0 %v267
    %332 = vmatpush.msra.mxu0 %v263
    %333 = vmatpush.msra.mxu0 %v259
    %334 = vmatpush.msra.mxu0 %v255
    %335 = vmatpush.msra.mxu0 %v251
    %336 = vmatpush.msra.mxu0 %v247
    %337 = vmatmul.f32.gmra.mxu0 0.0
    %v338 = vpop.f32.mrf.mxu0
    %v339 = vadd.f32 %v313, %v338
    %340 = vdwg.mxu0
    %341 = vmatpush.msra.mxu0 %v308
    %342 = vmatpush.msra.mxu0 %v304
    %343 = vmatpush.msra.mxu0 %v300
    %344 = vmatpush.msra.mxu0 %v296
    %345 = vmatpush.msra.mxu0 %v292
    %346 = vmatpush.msra.mxu0 %v288
    %347 = vmatpush.msra.mxu0 %v284
    %348 = vmatpush.msra.mxu0 %v280
    %349 = vmatpush.msra.mxu0 %v276
    %350 = vmatpush.msra.mxu0 %v272
    %351 = vmatpush.msra.mxu0 %v268
    %352 = vmatpush.msra.mxu0 %v264
    %353 = vmatpush.msra.mxu0 %v260
    %354 = vmatpush.msra.mxu0 %v256
    %355 = vmatpush.msra.mxu0 %v252
    %356 = vmatpush.msra.mxu0 %v248
    %357 = vmatmul.f32.gmra.mxu0 0.0
    %v358 = vpop.f32.mrf.mxu0
    %v359 = vadd.f32 %v314, %v358
    %360 = vdwg.mxu0
    %361 = vmatpush.msra.mxu0 %v309
    %362 = vmatpush.msra.mxu0 %v305
    %363 = vmatpush.msra.mxu0 %v301
    %364 = vmatpush.msra.mxu0 %v297
    %365 = vmatpush.msra.mxu0 %v293
    %366 = vmatpush.msra.mxu0 %v289
    %367 = vmatpush.msra.mxu0 %v285
    %368 = vmatpush.msra.mxu0 %v281
    %369 = vmatpush.msra.mxu0 %v277
    %370 = vmatpush.msra.mxu0 %v273
    %371 = vmatpush.msra.mxu0 %v269
    %372 = vmatpush.msra.mxu0 %v265
    %373 = vmatpush.msra.mxu0 %v261
    %374 = vmatpush.msra.mxu0 %v257
    %375 = vmatpush.msra.mxu0 %v253
    %376 = vmatpush.msra.mxu0 %v249
    %377 = vmatmul.f32.gmra.mxu0 0.0
    %v378 = vpop.f32.mrf.mxu0
    %v379 = vadd.f32 %v315, %v378
    %380 = vdwg.mxu0
    %381 = vmatpush.msra.mxu0 %v310
    %382 = vmatpush.msra.mxu0 %v306
    %383 = vmatpush.msra.mxu0 %v302
    %384 = vmatpush.msra.mxu0 %v298
    %385 = vmatpush.msra.mxu0 %v294
    %386 = vmatpush.msra.mxu0 %v290
    %387 = vmatpush.msra.mxu0 %v286
    %388 = vmatpush.msra.mxu0 %v282
    %389 = vmatpush.msra.mxu0 %v278
    %390 = vmatpush.msra.mxu0 %v274
    %391 = vmatpush.msra.mxu0 %v270
    %392 = vmatpush.msra.mxu0 %v266
    %393 = vmatpush.msra.mxu0 %v262
    %394 = vmatpush.msra.mxu0 %v258
    %395 = vmatpush.msra.mxu0 %v254
    %396 = vmatpush.msra.mxu0 %v250
    %397 = vmatmul.f32.gmra.mxu0 0.0
    %v398 = vpop.f32.mrf.mxu0
    %v399 = vadd.f32 %v316, %v398
    %400 = vdwg.mxu0
    %v401 = vld [vmem:[#allocation2] sm:$0xff]
    %402 = vmatpush.msra.mxu0 %v179
    %403 = vmatpush.msra.mxu0 %v175
    %404 = vmatpush.msra.mxu0 %v171
    %405 = vmatpush.msra.mxu0 %v167
    %406 = vmatpush.msra.mxu0 %v163
    %407 = vmatpush.msra.mxu0 %v159
    %408 = vmatpush.msra.mxu0 %v155
    %409 = vmatpush.msra.mxu0 %v151
    %410 = vmatpush.msra.mxu0 %v147
    %411 = vmatpush.msra.mxu0 %v143
    %412 = vmatpush.msra.mxu0 %v139
    %413 = vmatpush.msra.mxu0 %v135
    %414 = vmatpush.msra.mxu0 %v131
    %415 = vmatpush.msra.mxu0 %v127
    %416 = vmatpush.msra.mxu0 %v123
    %417 = vmatpush.msra.mxu0 %v119
    %418 = vmatmul.f32.gmra.mxu0 0.0
    %v419 = vpop.f32.mrf.mxu0
    %v420 = vadd.f32 0.0, %v419
    %421 = vdwg.mxu0
    %422 = vmatpush.msra.mxu0 %v180
    %423 = vmatpush.msra.mxu0 %v176
    %424 = vmatpush.msra.mxu0 %v172
    %425 = vmatpush.msra.mxu0 %v168
    %426 = vmatpush.msra.mxu0 %v164
    %427 = vmatpush.msra.mxu0 %v160
    %428 = vmatpush.msra.mxu0 %v156
    %429 = vmatpush.msra.mxu0 %v152
    %430 = vmatpush.msra.mxu0 %v148
    %431 = vmatpush.msra.mxu0 %v144
    %432 = vmatpush.msra.mxu0 %v140
    %433 = vmatpush.msra.mxu0 %v136
    %434 = vmatpush.msra.mxu0 %v132
    %435 = vmatpush.msra.mxu0 %v128
    %436 = vmatpush.msra.mxu0 %v124
    %437 = vmatpush.msra.mxu0 %v120
    %438 = vmatmul.f32.gmra.mxu0 0.0
    %v439 = vpop.f32.mrf.mxu0
    %v440 = vadd.f32 0.0, %v439
    %441 = vdwg.mxu0
    %442 = vmatpush.msra.mxu0 %v181
    %443 = vmatpush.msra.mxu0 %v177
    %444 = vmatpush.msra.mxu0 %v173
    %445 = vmatpush.msra.mxu0 %v169
    %446 = vmatpush.msra.mxu0 %v165
    %447 = vmatpush.msra.mxu0 %v161
    %448 = vmatpush.msra.mxu0 %v157
    %449 = vmatpush.msra.mxu0 %v153
    %450 = vmatpush.msra.mxu0 %v149
    %451 = vmatpush.msra.mxu0 %v145
    %452 = vmatpush.msra.mxu0 %v141
    %453 = vmatpush.msra.mxu0 %v137
    %454 = vmatpush.msra.mxu0 %v133
    %455 = vmatpush.msra.mxu0 %v129
    %456 = vmatpush.msra.mxu0 %v125
    %457 = vmatpush.msra.mxu0 %v121
    %458 = vmatmul.f32.gmra.mxu0 0.0
    %v459 = vpop.f32.mrf.mxu0
    %v460 = vadd.f32 0.0, %v459
    %461 = vdwg.mxu0
    %462 = vmatpush.msra.mxu0 %v182
    %463 = vmatpush.msra.mxu0 %v178
    %464 = vmatpush.msra.mxu0 %v174
    %465 = vmatpush.msra.mxu0 %v170
    %466 = vmatpush.msra.mxu0 %v166
    %467 = vmatpush.msra.mxu0 %v162
    %468 = vmatpush.msra.mxu0 %v158
    %469 = vmatpush.msra.mxu0 %v154
    %470 = vmatpush.msra.mxu0 %v150
    %471 = vmatpush.msra.mxu0 %v146
    %472 = vmatpush.msra.mxu0 %v142
    %473 = vmatpush.msra.mxu0 %v138
    %474 = vmatpush.msra.mxu0 %v134
    %475 = vmatpush.msra.mxu0 %v130
    %476 = vmatpush.msra.mxu0 %v126
    %477 = vmatpush.msra.mxu0 %v122
    %478 = vmatmul.f32.gmra.mxu0 0.0
    %v479 = vpop.f32.mrf.mxu0
    %v480 = vadd.f32 0.0, %v479
    %481 = vdwg.mxu0
    %v486 = vrot.slane %v440, 6
    %v487 = vrot.slane %v460, 4
    %v488 = vrot.slane %v480, 2
    %vm489 = vcmask 1041408
    %v490 = vsel %vm489, %v420, %v486
    %vm491 = vcmask 1045508
    %v492 = vsel %vm491, %v487, %v488
    %vm493 = vcmask 1043456
    %v494 = vsel %vm493, %v490, %v492
    %v496 = vadd.f32 %v401, %v494
    %v497 = vxor.u32 %v496, 2147483648
    %v498 = vmul.f32 %v497, 1.442695
    %v499 = vpow.pop %v498
    %v500 = vadd.f32 %v499, 1.0
    %v501 = vrcp.pop %v500
    %v502 = vmul.f32 %v500, %v501
    %v503 = vsub.f32 1.0, %v502
    %v504 = vmul.f32 %v501, %v503
    %v505 = vadd.f32 %v501, %v504
    %vm506 = vweird.f32 %v500
    %vm507 = vweird.f32 %v501
    %vm508 = vmor %vm506, %vm507
    %v509 = vsel %vm508, %v501, %v505
    %v510 = vand.u32 2147483647, %v500
    %vm511 = vcmp.eq.f32.partialorder %v510, 8.507059e+37
    %v512 = vand.u32 %v500, 2147483648
    %v513 = vor.u32 1.1754944e-38, %v512
    %v514 = vsel %vm511, %v513, %v509
    %v515 = vmul.f32 1.0, %v514
    %v517 = vrot.slane %v496, 6
    %v519 = vtanh.pop %v517
    %v521 = vrot.slane %v515, 2
    %v523 = vmul.f32 %v521, 0.0
    %v524 = vmul.f32 %v515, %v519
    %v525 = vadd.f32 %v523, %v524
    %v526 = vtanh.pop %v525
    %v527 = vrot.slane %v515, 4
    %v529 = vmul.f32 %v527, %v526
    %530 = vmatpush.msra.mxu0 %v243
    %531 = vmatpush.msra.mxu0 %v239
    %532 = vmatpush.msra.mxu0 %v235
    %533 = vmatpush.msra.mxu0 %v231
    %534 = vmatpush.msra.mxu0 %v227
    %535 = vmatpush.msra.mxu0 %v223
    %536 = vmatpush.msra.mxu0 %v219
    %537 = vmatpush.msra.mxu0 %v215
    %538 = vmatpush.msra.mxu0 %v211
    %539 = vmatpush.msra.mxu0 %v207
    %540 = vmatpush.msra.mxu0 %v203
    %541 = vmatpush.msra.mxu0 %v199
    %542 = vmatpush.msra.mxu0 %v195
    %543 = vmatpush.msra.mxu0 %v191
    %544 = vmatpush.msra.mxu0 %v187
    %545 = vmatpush.msra.mxu0 %v183
    %546 = vmatmul.f32.gmra.mxu0 %v529
    %v547 = vpop.f32.mrf.mxu0
    %v548 = vadd.f32 0.0, %v547
    %549 = vdwg.mxu0
    %550 = vmatpush.msra.mxu0 %v244
    %551 = vmatpush.msra.mxu0 %v240
    %552 = vmatpush.msra.mxu0 %v236
    %553 = vmatpush.msra.mxu0 %v232
    %554 = vmatpush.msra.mxu0 %v228
    %555 = vmatpush.msra.mxu0 %v224
    %556 = vmatpush.msra.mxu0 %v220
    %557 = vmatpush.msra.mxu0 %v216
    %558 = vmatpush.msra.mxu0 %v212
    %559 = vmatpush.msra.mxu0 %v208
    %560 = vmatpush.msra.mxu0 %v204
    %561 = vmatpush.msra.mxu0 %v200
    %562 = vmatpush.msra.mxu0 %v196
    %563 = vmatpush.msra.mxu0 %v192
    %564 = vmatpush.msra.mxu0 %v188
    %565 = vmatpush.msra.mxu0 %v184
    %566 = vmatmul.f32.gmra.mxu0 %v529
    %v567 = vpop.f32.mrf.mxu0
    %v568 = vadd.f32 0.0, %v567
    %569 = vdwg.mxu0
    %570 = vmatpush.msra.mxu0 %v245
    %571 = vmatpush.msra.mxu0 %v241
    %572 = vmatpush.msra.mxu0 %v237
    %573 = vmatpush.msra.mxu0 %v233
    %574 = vmatpush.msra.mxu0 %v229
    %575 = vmatpush.msra.mxu0 %v225
    %576 = vmatpush.msra.mxu0 %v221
    %577 = vmatpush.msra.mxu0 %v217
    %578 = vmatpush.msra.mxu0 %v213
    %579 = vmatpush.msra.mxu0 %v209
    %580 = vmatpush.msra.mxu0 %v205
    %581 = vmatpush.msra.mxu0 %v201
    %582 = vmatpush.msra.mxu0 %v197
    %583 = vmatpush.msra.mxu0 %v193
    %584 = vmatpush.msra.mxu0 %v189
    %585 = vmatpush.msra.mxu0 %v185
    %586 = vmatmul.f32.gmra.mxu0 %v529
    %v587 = vpop.f32.mrf.mxu0
    %v588 = vadd.f32 0.0, %v587
    %589 = vdwg.mxu0
    %590 = vmatpush.msra.mxu0 %v246
    %591 = vmatpush.msra.mxu0 %v242
    %592 = vmatpush.msra.mxu0 %v238
    %593 = vmatpush.msra.mxu0 %v234
    %594 = vmatpush.msra.mxu0 %v230
    %595 = vmatpush.msra.mxu0 %v226
    %596 = vmatpush.msra.mxu0 %v222
    %597 = vmatpush.msra.mxu0 %v218
    %598 = vmatpush.msra.mxu0 %v214
    %599 = vmatpush.msra.mxu0 %v210
    %600 = vmatpush.msra.mxu0 %v206
    %601 = vmatpush.msra.mxu0 %v202
    %602 = vmatpush.msra.mxu0 %v198
    %603 = vmatpush.msra.mxu0 %v194
    %604 = vmatpush.msra.mxu0 %v190
    %605 = vmatpush.msra.mxu0 %v186
    %606 = vmatmul.f32.gmra.mxu0 %v529
    %v607 = vpop.f32.mrf.mxu0
    %v608 = vadd.f32 0.0, %v607
    %609 = vdwg.mxu0
    %v610 = vadd.f32 %v339, %v548
    %v611 = vadd.f32 %v359, %v568
    %v612 = vadd.f32 %v379, %v588
    %v613 = vadd.f32 %v399, %v608
    %v614 = vxor.u32 %v610, 2147483648
    %v615 = vxor.u32 %v611, 2147483648
    %v616 = vxor.u32 %v612, 2147483648
    %v617 = vmul.f32 %v614, 1.442695
    %v618 = vpow.pop %v617
    %v619 = vmul.f32 %v615, 1.442695
    %v620 = vpow.pop %v619
    %v621 = vmul.f32 %v616, 1.442695
    %v622 = vpow.pop %v621
    %v623 = vadd.f32 %v618, 1.0
    %v624 = vadd.f32 %v620, 1.0
    %v625 = vadd.f32 %v622, 1.0
    %v626 = vrcp.pop %v623
    %v627 = vmul.f32 %v623, %v626
    %v628 = vsub.f32 1.0, %v627
    %v629 = vmul.f32 %v626, %v628
    %v630 = vadd.f32 %v626, %v629
    %vm631 = vweird.f32 %v623
    %vm632 = vweird.f32 %v626
    %vm633 = vmor %vm631, %vm632
    %v634 = vsel %vm633, %v626, %v630
    %v635 = vand.u32 2147483647, %v623
    %vm636 = vcmp.eq.f32.partialorder %v635, 8.507059e+37
    %v637 = vand.u32 %v623, 2147483648
    %v638 = vor.u32 1.1754944e-38, %v637
    %v639 = vsel %vm636, %v638, %v634
    %v640 = vmul.f32 1.0, %v639
    %v641 = vrcp.pop %v624
    %v642 = vmul.f32 %v624, %v641
    %v643 = vsub.f32 1.0, %v642
    %v644 = vmul.f32 %v641, %v643
    %v645 = vadd.f32 %v641, %v644
    %vm646 = vweird.f32 %v624
    %vm647 = vweird.f32 %v641
    %vm648 = vmor %vm646, %vm647
    %v649 = vsel %vm648, %v641, %v645
    %v650 = vand.u32 2147483647, %v624
    %vm651 = vcmp.eq.f32.partialorder %v650, 8.507059e+37
    %v652 = vand.u32 %v624, 2147483648
    %v653 = vor.u32 1.1754944e-38, %v652
    %v654 = vsel %vm651, %v653, %v649
    %v655 = vmul.f32 1.0, %v654
    %v656 = vrcp.pop %v625
    %v657 = vmul.f32 %v625, %v656
    %v658 = vsub.f32 1.0, %v657
    %v659 = vmul.f32 %v656, %v658
    %v660 = vadd.f32 %v656, %v659
    %vm661 = vweird.f32 %v625
    %vm662 = vweird.f32 %v656
    %vm663 = vmor %vm661, %vm662
    %v664 = vsel %vm663, %v656, %v660
    %v665 = vand.u32 2147483647, %v625
    %vm666 = vcmp.eq.f32.partialorder %v665, 8.507059e+37
    %v667 = vand.u32 %v625, 2147483648
    %v668 = vor.u32 1.1754944e-38, %v667
    %v669 = vsel %vm666, %v668, %v664
    %v670 = vmul.f32 1.0, %v669
    %v671 = vtanh.pop %v613
    %v672 = vmul.f32 %v655, 0.0
    %v673 = vmul.f32 %v640, %v671
    %v674 = vadd.f32 %v672, %v673
    %v675 = vtanh.pop %v674
    %v676 = vmul.f32 %v670, %v675
    %677 = vmatpush.msra.mxu0 %v307
    %678 = vmatpush.msra.mxu0 %v303
    %679 = vmatpush.msra.mxu0 %v299
    %680 = vmatpush.msra.mxu0 %v295
    %681 = vmatpush.msra.mxu0 %v291
    %682 = vmatpush.msra.mxu0 %v287
    %683 = vmatpush.msra.mxu0 %v283
    %684 = vmatpush.msra.mxu0 %v279
    %685 = vmatpush.msra.mxu0 %v275
    %686 = vmatpush.msra.mxu0 %v271
    %687 = vmatpush.msra.mxu0 %v267
    %688 = vmatpush.msra.mxu0 %v263
    %689 = vmatpush.msra.mxu0 %v259
    %690 = vmatpush.msra.mxu0 %v255
    %691 = vmatpush.msra.mxu0 %v251
    %692 = vmatpush.msra.mxu0 %v247
    %693 = vmatmul.f32.gmra.mxu0 %v676
    %v694 = vpop.f32.mrf.mxu0
    %v695 = vadd.f32 %v313, %v694
    %696 = vdwg.mxu0
    %697 = vmatpush.msra.mxu0 %v308
    %698 = vmatpush.msra.mxu0 %v304
    %699 = vmatpush.msra.mxu0 %v300
    %700 = vmatpush.msra.mxu0 %v296
    %701 = vmatpush.msra.mxu0 %v292
    %702 = vmatpush.msra.mxu0 %v288
    %703 = vmatpush.msra.mxu0 %v284
    %704 = vmatpush.msra.mxu0 %v280
    %705 = vmatpush.msra.mxu0 %v276
    %706 = vmatpush.msra.mxu0 %v272
    %707 = vmatpush.msra.mxu0 %v268
    %708 = vmatpush.msra.mxu0 %v264
    %709 = vmatpush.msra.mxu0 %v260
    %710 = vmatpush.msra.mxu0 %v256
    %711 = vmatpush.msra.mxu0 %v252
    %712 = vmatpush.msra.mxu0 %v248
    %713 = vmatmul.f32.gmra.mxu0 %v676
    %v714 = vpop.f32.mrf.mxu0
    %v715 = vadd.f32 %v314, %v714
    %716 = vdwg.mxu0
    %717 = vmatpush.msra.mxu0 %v309
    %718 = vmatpush.msra.mxu0 %v305
    %719 = vmatpush.msra.mxu0 %v301
    %720 = vmatpush.msra.mxu0 %v297
    %721 = vmatpush.msra.mxu0 %v293
    %722 = vmatpush.msra.mxu0 %v289
    %723 = vmatpush.msra.mxu0 %v285
    %724 = vmatpush.msra.mxu0 %v281
    %725 = vmatpush.msra.mxu0 %v277
    %726 = vmatpush.msra.mxu0 %v273
    %727 = vmatpush.msra.mxu0 %v269
    %728 = vmatpush.msra.mxu0 %v265
    %729 = vmatpush.msra.mxu0 %v261
    %730 = vmatpush.msra.mxu0 %v257
    %731 = vmatpush.msra.mxu0 %v253
    %732 = vmatpush.msra.mxu0 %v249
    %733 = vmatmul.f32.gmra.mxu0 %v676
    %v734 = vpop.f32.mrf.mxu0
    %v735 = vadd.f32 %v315, %v734
    %736 = vdwg.mxu0
    %737 = vmatpush.msra.mxu0 %v310
    %738 = vmatpush.msra.mxu0 %v306
    %739 = vmatpush.msra.mxu0 %v302
    %740 = vmatpush.msra.mxu0 %v298
    %741 = vmatpush.msra.mxu0 %v294
    %742 = vmatpush.msra.mxu0 %v290
    %743 = vmatpush.msra.mxu0 %v286
    %744 = vmatpush.msra.mxu0 %v282
    %745 = vmatpush.msra.mxu0 %v278
    %746 = vmatpush.msra.mxu0 %v274
    %747 = vmatpush.msra.mxu0 %v270
    %748 = vmatpush.msra.mxu0 %v266
    %749 = vmatpush.msra.mxu0 %v262
    %750 = vmatpush.msra.mxu0 %v258
    %751 = vmatpush.msra.mxu0 %v254
    %752 = vmatpush.msra.mxu0 %v250
    %753 = vmatmul.f32.gmra.mxu0 %v676
    %v754 = vpop.f32.mrf.mxu0
    %v755 = vadd.f32 %v316, %v754
    %756 = vdwg.mxu0
    %s757 = scalar_lea.vmem [#allocation2], 8
    %v758 = vld [vmem:[%s757] sm:$0xff]
    %759 = vmatpush.msra.mxu0 %v179
    %760 = vmatpush.msra.mxu0 %v175
    %761 = vmatpush.msra.mxu0 %v171
    %762 = vmatpush.msra.mxu0 %v167
    %763 = vmatpush.msra.mxu0 %v163
    %764 = vmatpush.msra.mxu0 %v159
    %765 = vmatpush.msra.mxu0 %v155
    %766 = vmatpush.msra.mxu0 %v151
    %767 = vmatpush.msra.mxu0 %v147
    %768 = vmatpush.msra.mxu0 %v143
    %769 = vmatpush.msra.mxu0 %v139
    %770 = vmatpush.msra.mxu0 %v135
    %771 = vmatpush.msra.mxu0 %v131
    %772 = vmatpush.msra.mxu0 %v127
    %773 = vmatpush.msra.mxu0 %v123
    %774 = vmatpush.msra.mxu0 %v119
    %775 = vmatmul.f32.gmra.mxu0 %v529
    %v776 = vpop.f32.mrf.mxu0
    %v777 = vadd.f32 0.0, %v776
    %778 = vdwg.mxu0
    %779 = vmatpush.msra.mxu0 %v180
    %780 = vmatpush.msra.mxu0 %v176
    %781 = vmatpush.msra.mxu0 %v172
    %782 = vmatpush.msra.mxu0 %v168
    %783 = vmatpush.msra.mxu0 %v164
    %784 = vmatpush.msra.mxu0 %v160
    %785 = vmatpush.msra.mxu0 %v156
    %786 = vmatpush.msra.mxu0 %v152
    %787 = vmatpush.msra.mxu0 %v148
    %788 = vmatpush.msra.mxu0 %v144
    %789 = vmatpush.msra.mxu0 %v140
    %790 = vmatpush.msra.mxu0 %v136
    %791 = vmatpush.msra.mxu0 %v132
    %792 = vmatpush.msra.mxu0 %v128
    %793 = vmatpush.msra.mxu0 %v124
    %794 = vmatpush.msra.mxu0 %v120
    %795 = vmatmul.f32.gmra.mxu0 %v529
    %v796 = vpop.f32.mrf.mxu0
    %v797 = vadd.f32 0.0, %v796
    %798 = vdwg.mxu0
    %799 = vmatpush.msra.mxu0 %v181
    %800 = vmatpush.msra.mxu0 %v177
    %801 = vmatpush.msra.mxu0 %v173
    %802 = vmatpush.msra.mxu0 %v169
    %803 = vmatpush.msra.mxu0 %v165
    %804 = vmatpush.msra.mxu0 %v161
    %805 = vmatpush.msra.mxu0 %v157
    %806 = vmatpush.msra.mxu0 %v153
    %807 = vmatpush.msra.mxu0 %v149
    %808 = vmatpush.msra.mxu0 %v145
    %809 = vmatpush.msra.mxu0 %v141
    %810 = vmatpush.msra.mxu0 %v137
    %811 = vmatpush.msra.mxu0 %v133
    %812 = vmatpush.msra.mxu0 %v129
    %813 = vmatpush.msra.mxu0 %v125
    %814 = vmatpush.msra.mxu0 %v121
    %815 = vmatmul.f32.gmra.mxu0 %v529
    %v816 = vpop.f32.mrf.mxu0
    %v817 = vadd.f32 0.0, %v816
    %818 = vdwg.mxu0
    %819 = vmatpush.msra.mxu0 %v182
    %820 = vmatpush.msra.mxu0 %v178
    %821 = vmatpush.msra.mxu0 %v174
    %822 = vmatpush.msra.mxu0 %v170
    %823 = vmatpush.msra.mxu0 %v166
    %824 = vmatpush.msra.mxu0 %v162
    %825 = vmatpush.msra.mxu0 %v158
    %826 = vmatpush.msra.mxu0 %v154
    %827 = vmatpush.msra.mxu0 %v150
    %828 = vmatpush.msra.mxu0 %v146
    %829 = vmatpush.msra.mxu0 %v142
    %830 = vmatpush.msra.mxu0 %v138
    %831 = vmatpush.msra.mxu0 %v134
    %832 = vmatpush.msra.mxu0 %v130
    %833 = vmatpush.msra.mxu0 %v126
    %834 = vmatpush.msra.mxu0 %v122
    %835 = vmatmul.f32.gmra.mxu0 %v529
    %v836 = vpop.f32.mrf.mxu0
    %v837 = vadd.f32 0.0, %v836
    %838 = vdwg.mxu0
    %v843 = vrot.slane %v797, 6
    %v844 = vrot.slane %v817, 4
    %v845 = vrot.slane %v837, 2
    %v846 = vsel %vm489, %v777, %v843
    %v847 = vsel %vm491, %v844, %v845
    %v848 = vsel %vm493, %v846, %v847
    %v850 = vadd.f32 %v758, %v848
    %v851 = vxor.u32 %v850, 2147483648
    %v852 = vmul.f32 %v851, 1.442695
    %v853 = vpow.pop %v852
    %v854 = vadd.f32 %v853, 1.0
    %v855 = vrcp.pop %v854
    %v856 = vmul.f32 %v854, %v855
    %v857 = vsub.f32 1.0, %v856
    %v858 = vmul.f32 %v855, %v857
    %v859 = vadd.f32 %v855, %v858
    %vm860 = vweird.f32 %v854
    %vm861 = vweird.f32 %v855
    %vm862 = vmor %vm860, %vm861
    %v863 = vsel %vm862, %v855, %v859
    %v864 = vand.u32 2147483647, %v854
    %vm865 = vcmp.eq.f32.partialorder %v864, 8.507059e+37
    %v866 = vand.u32 %v854, 2147483648
    %v867 = vor.u32 1.1754944e-38, %v866
    %v868 = vsel %vm865, %v867, %v863
    %v869 = vmul.f32 1.0, %v868
    %v871 = vrot.slane %v850, 6
    %v873 = vtanh.pop %v871
    %v875 = vrot.slane %v869, 2
    %v877 = vmul.f32 %v875, %v525
    %v878 = vmul.f32 %v869, %v873
    %v879 = vadd.f32 %v877, %v878
    %v880 = vtanh.pop %v879
    %v881 = vrot.slane %v869, 4
    %v883 = vmul.f32 %v881, %v880
    %884 = vmatpush.msra.mxu0 %v243
    %885 = vmatpush.msra.mxu0 %v239
    %886 = vmatpush.msra.mxu0 %v235
    %887 = vmatpush.msra.mxu0 %v231
    %888 = vmatpush.msra.mxu0 %v227
    %889 = vmatpush.msra.mxu0 %v223
    %890 = vmatpush.msra.mxu0 %v219
    %891 = vmatpush.msra.mxu0 %v215
    %892 = vmatpush.msra.mxu0 %v211
    %893 = vmatpush.msra.mxu0 %v207
    %894 = vmatpush.msra.mxu0 %v203
    %895 = vmatpush.msra.mxu0 %v199
    %896 = vmatpush.msra.mxu0 %v195
    %897 = vmatpush.msra.mxu0 %v191
    %898 = vmatpush.msra.mxu0 %v187
    %899 = vmatpush.msra.mxu0 %v183
    %900 = vmatmul.f32.gmra.mxu0 %v883
    %v901 = vpop.f32.mrf.mxu0
    %v902 = vadd.f32 0.0, %v901
    %903 = vdwg.mxu0
    %904 = vmatpush.msra.mxu0 %v244
    %905 = vmatpush.msra.mxu0 %v240
    %906 = vmatpush.msra.mxu0 %v236
    %907 = vmatpush.msra.mxu0 %v232
    %908 = vmatpush.msra.mxu0 %v228
    %909 = vmatpush.msra.mxu0 %v224
    %910 = vmatpush.msra.mxu0 %v220
    %911 = vmatpush.msra.mxu0 %v216
    %912 = vmatpush.msra.mxu0 %v212
    %913 = vmatpush.msra.mxu0 %v208
    %914 = vmatpush.msra.mxu0 %v204
    %915 = vmatpush.msra.mxu0 %v200
    %916 = vmatpush.msra.mxu0 %v196
    %917 = vmatpush.msra.mxu0 %v192
    %918 = vmatpush.msra.mxu0 %v188
    %919 = vmatpush.msra.mxu0 %v184
    %920 = vmatmul.f32.gmra.mxu0 %v883
    %v921 = vpop.f32.mrf.mxu0
    %v922 = vadd.f32 0.0, %v921
    %923 = vdwg.mxu0
    %924 = vmatpush.msra.mxu0 %v245
    %925 = vmatpush.msra.mxu0 %v241
    %926 = vmatpush.msra.mxu0 %v237
    %927 = vmatpush.msra.mxu0 %v233
    %928 = vmatpush.msra.mxu0 %v229
    %929 = vmatpush.msra.mxu0 %v225
    %930 = vmatpush.msra.mxu0 %v221
    %931 = vmatpush.msra.mxu0 %v217
    %932 = vmatpush.msra.mxu0 %v213
    %933 = vmatpush.msra.mxu0 %v209
    %934 = vmatpush.msra.mxu0 %v205
    %935 = vmatpush.msra.mxu0 %v201
    %936 = vmatpush.msra.mxu0 %v197
    %937 = vmatpush.msra.mxu0 %v193
    %938 = vmatpush.msra.mxu0 %v189
    %939 = vmatpush.msra.mxu0 %v185
    %940 = vmatmul.f32.gmra.mxu0 %v883
    %v941 = vpop.f32.mrf.mxu0
    %v942 = vadd.f32 0.0, %v941
    %943 = vdwg.mxu0
    %944 = vmatpush.msra.mxu0 %v246
    %945 = vmatpush.msra.mxu0 %v242
    %946 = vmatpush.msra.mxu0 %v238
    %947 = vmatpush.msra.mxu0 %v234
    %948 = vmatpush.msra.mxu0 %v230
    %949 = vmatpush.msra.mxu0 %v226
    %950 = vmatpush.msra.mxu0 %v222
    %951 = vmatpush.msra.mxu0 %v218
    %952 = vmatpush.msra.mxu0 %v214
    %953 = vmatpush.msra.mxu0 %v210
    %954 = vmatpush.msra.mxu0 %v206
    %955 = vmatpush.msra.mxu0 %v202
    %956 = vmatpush.msra.mxu0 %v198
    %957 = vmatpush.msra.mxu0 %v194
    %958 = vmatpush.msra.mxu0 %v190
    %959 = vmatpush.msra.mxu0 %v186
    %960 = vmatmul.f32.gmra.mxu0 %v883
    %v961 = vpop.f32.mrf.mxu0
    %v962 = vadd.f32 0.0, %v961
    %963 = vdwg.mxu0
    %v964 = vadd.f32 %v695, %v902
    %v965 = vadd.f32 %v715, %v922
    %v966 = vadd.f32 %v735, %v942
    %v967 = vadd.f32 %v755, %v962
    %v968 = vxor.u32 %v964, 2147483648
    %v969 = vxor.u32 %v965, 2147483648
    %v970 = vxor.u32 %v966, 2147483648
    %v971 = vmul.f32 %v968, 1.442695
    %v972 = vpow.pop %v971
    %v973 = vmul.f32 %v969, 1.442695
    %v974 = vpow.pop %v973
    %v975 = vmul.f32 %v970, 1.442695
    %v976 = vpow.pop %v975
    %v977 = vadd.f32 %v972, 1.0
    %v978 = vadd.f32 %v974, 1.0
    %v979 = vadd.f32 %v976, 1.0
    %v980 = vrcp.pop %v977
    %v981 = vmul.f32 %v977, %v980
    %v982 = vsub.f32 1.0, %v981
    %v983 = vmul.f32 %v980, %v982
    %v984 = vadd.f32 %v980, %v983
    %vm985 = vweird.f32 %v977
    %vm986 = vweird.f32 %v980
    %vm987 = vmor %vm985, %vm986
    %v988 = vsel %vm987, %v980, %v984
    %v989 = vand.u32 2147483647, %v977
    %vm990 = vcmp.eq.f32.partialorder %v989, 8.507059e+37
    %v991 = vand.u32 %v977, 2147483648
    %v992 = vor.u32 1.1754944e-38, %v991
    %v993 = vsel %vm990, %v992, %v988
    %v994 = vmul.f32 1.0, %v993
    %v995 = vrcp.pop %v978
    %v996 = vmul.f32 %v978, %v995
    %v997 = vsub.f32 1.0, %v996
    %v998 = vmul.f32 %v995, %v997
    %v999 = vadd.f32 %v995, %v998
    %vm1000 = vweird.f32 %v978
    %vm1001 = vweird.f32 %v995
    %vm1002 = vmor %vm1000, %vm1001
    %v1003 = vsel %vm1002, %v995, %v999
    %v1004 = vand.u32 2147483647, %v978
    %vm1005 = vcmp.eq.f32.partialorder %v1004, 8.507059e+37
    %v1006 = vand.u32 %v978, 2147483648
    %v1007 = vor.u32 1.1754944e-38, %v1006
    %v1008 = vsel %vm1005, %v1007, %v1003
    %v1009 = vmul.f32 1.0, %v1008
    %v1010 = vrcp.pop %v979
    %v1011 = vmul.f32 %v979, %v1010
    %v1012 = vsub.f32 1.0, %v1011
    %v1013 = vmul.f32 %v1010, %v1012
    %v1014 = vadd.f32 %v1010, %v1013
    %vm1015 = vweird.f32 %v979
    %vm1016 = vweird.f32 %v1010
    %vm1017 = vmor %vm1015, %vm1016
    %v1018 = vsel %vm1017, %v1010, %v1014
    %v1019 = vand.u32 2147483647, %v979
    %vm1020 = vcmp.eq.f32.partialorder %v1019, 8.507059e+37
    %v1021 = vand.u32 %v979, 2147483648
    %v1022 = vor.u32 1.1754944e-38, %v1021
    %v1023 = vsel %vm1020, %v1022, %v1018
    %v1024 = vmul.f32 1.0, %v1023
    %v1025 = vtanh.pop %v967
    %v1026 = vmul.f32 %v1009, %v674
    %v1027 = vmul.f32 %v994, %v1025
    %v1028 = vadd.f32 %v1026, %v1027
    %v1029 = vtanh.pop %v1028
    %v1030 = vmul.f32 %v1024, %v1029
    %1031 = vmatpush.msra.mxu0 %v307
    %1032 = vmatpush.msra.mxu0 %v303
    %1033 = vmatpush.msra.mxu0 %v299
    %1034 = vmatpush.msra.mxu0 %v295
    %1035 = vmatpush.msra.mxu0 %v291
    %1036 = vmatpush.msra.mxu0 %v287
    %1037 = vmatpush.msra.mxu0 %v283
    %1038 = vmatpush.msra.mxu0 %v279
    %1039 = vmatpush.msra.mxu0 %v275
    %1040 = vmatpush.msra.mxu0 %v271
    %1041 = vmatpush.msra.mxu0 %v267
    %1042 = vmatpush.msra.mxu0 %v263
    %1043 = vmatpush.msra.mxu0 %v259
    %1044 = vmatpush.msra.mxu0 %v255
    %1045 = vmatpush.msra.mxu0 %v251
    %1046 = vmatpush.msra.mxu0 %v247
    %1047 = vmatmul.f32.gmra.mxu0 %v1030
    %v1048 = vpop.f32.mrf.mxu0
    %v1049 = vadd.f32 %v313, %v1048
    %1050 = vdwg.mxu0
    %1051 = vmatpush.msra.mxu0 %v308
    %1052 = vmatpush.msra.mxu0 %v304
    %1053 = vmatpush.msra.mxu0 %v300
    %1054 = vmatpush.msra.mxu0 %v296
    %1055 = vmatpush.msra.mxu0 %v292
    %1056 = vmatpush.msra.mxu0 %v288
    %1057 = vmatpush.msra.mxu0 %v284
    %1058 = vmatpush.msra.mxu0 %v280
    %1059 = vmatpush.msra.mxu0 %v276
    %1060 = vmatpush.msra.mxu0 %v272
    %1061 = vmatpush.msra.mxu0 %v268
    %1062 = vmatpush.msra.mxu0 %v264
    %1063 = vmatpush.msra.mxu0 %v260
    %1064 = vmatpush.msra.mxu0 %v256
    %1065 = vmatpush.msra.mxu0 %v252
    %1066 = vmatpush.msra.mxu0 %v248
    %1067 = vmatmul.f32.gmra.mxu0 %v1030
    %v1068 = vpop.f32.mrf.mxu0
    %v1069 = vadd.f32 %v314, %v1068
    %1070 = vdwg.mxu0
    %1071 = vmatpush.msra.mxu0 %v309
    %1072 = vmatpush.msra.mxu0 %v305
    %1073 = vmatpush.msra.mxu0 %v301
    %1074 = vmatpush.msra.mxu0 %v297
    %1075 = vmatpush.msra.mxu0 %v293
    %1076 = vmatpush.msra.mxu0 %v289
    %1077 = vmatpush.msra.mxu0 %v285
    %1078 = vmatpush.msra.mxu0 %v281
    %1079 = vmatpush.msra.mxu0 %v277
    %1080 = vmatpush.msra.mxu0 %v273
    %1081 = vmatpush.msra.mxu0 %v269
    %1082 = vmatpush.msra.mxu0 %v265
    %1083 = vmatpush.msra.mxu0 %v261
    %1084 = vmatpush.msra.mxu0 %v257
    %1085 = vmatpush.msra.mxu0 %v253
    %1086 = vmatpush.msra.mxu0 %v249
    %1087 = vmatmul.f32.gmra.mxu0 %v1030
    %v1088 = vpop.f32.mrf.mxu0
    %v1089 = vadd.f32 %v315, %v1088
    %1090 = vdwg.mxu0
    %1091 = vmatpush.msra.mxu0 %v310
    %1092 = vmatpush.msra.mxu0 %v306
    %1093 = vmatpush.msra.mxu0 %v302
    %1094 = vmatpush.msra.mxu0 %v298
    %1095 = vmatpush.msra.mxu0 %v294
    %1096 = vmatpush.msra.mxu0 %v290
    %1097 = vmatpush.msra.mxu0 %v286
    %1098 = vmatpush.msra.mxu0 %v282
    %1099 = vmatpush.msra.mxu0 %v278
    %1100 = vmatpush.msra.mxu0 %v274
    %1101 = vmatpush.msra.mxu0 %v270
    %1102 = vmatpush.msra.mxu0 %v266
    %1103 = vmatpush.msra.mxu0 %v262
    %1104 = vmatpush.msra.mxu0 %v258
    %1105 = vmatpush.msra.mxu0 %v254
    %1106 = vmatpush.msra.mxu0 %v250
    %1107 = vmatmul.f32.gmra.mxu0 %v1030
    %v1108 = vpop.f32.mrf.mxu0
    %v1109 = vadd.f32 %v316, %v1108
    %1110 = vdwg.mxu0
    %s1111 = scalar_lea.vmem [#allocation2], 16
    %v1112 = vld [vmem:[%s1111] sm:$0xff]
    %1113 = vmatpush.msra.mxu0 %v179
    %1114 = vmatpush.msra.mxu0 %v175
    %1115 = vmatpush.msra.mxu0 %v171
    %1116 = vmatpush.msra.mxu0 %v167
    %1117 = vmatpush.msra.mxu0 %v163
    %1118 = vmatpush.msra.mxu0 %v159
    %1119 = vmatpush.msra.mxu0 %v155
    %1120 = vmatpush.msra.mxu0 %v151
    %1121 = vmatpush.msra.mxu0 %v147
    %1122 = vmatpush.msra.mxu0 %v143
    %1123 = vmatpush.msra.mxu0 %v139
    %1124 = vmatpush.msra.mxu0 %v135
    %1125 = vmatpush.msra.mxu0 %v131
    %1126 = vmatpush.msra.mxu0 %v127
    %1127 = vmatpush.msra.mxu0 %v123
    %1128 = vmatpush.msra.mxu0 %v119
    %1129 = vmatmul.f32.gmra.mxu0 %v883
    %v1130 = vpop.f32.mrf.mxu0
    %v1131 = vadd.f32 0.0, %v1130
    %1132 = vdwg.mxu0
    %1133 = vmatpush.msra.mxu0 %v180
    %1134 = vmatpush.msra.mxu0 %v176
    %1135 = vmatpush.msra.mxu0 %v172
    %1136 = vmatpush.msra.mxu0 %v168
    %1137 = vmatpush.msra.mxu0 %v164
    %1138 = vmatpush.msra.mxu0 %v160
    %1139 = vmatpush.msra.mxu0 %v156
    %1140 = vmatpush.msra.mxu0 %v152
    %1141 = vmatpush.msra.mxu0 %v148
    %1142 = vmatpush.msra.mxu0 %v144
    %1143 = vmatpush.msra.mxu0 %v140
    %1144 = vmatpush.msra.mxu0 %v136
    %1145 = vmatpush.msra.mxu0 %v132
    %1146 = vmatpush.msra.mxu0 %v128
    %1147 = vmatpush.msra.mxu0 %v124
    %1148 = vmatpush.msra.mxu0 %v120
    %1149 = vmatmul.f32.gmra.mxu0 %v883
    %v1150 = vpop.f32.mrf.mxu0
    %v1151 = vadd.f32 0.0, %v1150
    %1152 = vdwg.mxu0
    %1153 = vmatpush.msra.mxu0 %v181
    %1154 = vmatpush.msra.mxu0 %v177
    %1155 = vmatpush.msra.mxu0 %v173
    %1156 = vmatpush.msra.mxu0 %v169
    %1157 = vmatpush.msra.mxu0 %v165
    %1158 = vmatpush.msra.mxu0 %v161
    %1159 = vmatpush.msra.mxu0 %v157
    %1160 = vmatpush.msra.mxu0 %v153
    %1161 = vmatpush.msra.mxu0 %v149
    %1162 = vmatpush.msra.mxu0 %v145
    %1163 = vmatpush.msra.mxu0 %v141
    %1164 = vmatpush.msra.mxu0 %v137
    %1165 = vmatpush.msra.mxu0 %v133
    %1166 = vmatpush.msra.mxu0 %v129
    %1167 = vmatpush.msra.mxu0 %v125
    %1168 = vmatpush.msra.mxu0 %v121
    %1169 = vmatmul.f32.gmra.mxu0 %v883
    %v1170 = vpop.f32.mrf.mxu0
    %v1171 = vadd.f32 0.0, %v1170
    %1172 = vdwg.mxu0
    %1173 = vmatpush.msra.mxu0 %v182
    %1174 = vmatpush.msra.mxu0 %v178
    %1175 = vmatpush.msra.mxu0 %v174
    %1176 = vmatpush.msra.mxu0 %v170
    %1177 = vmatpush.msra.mxu0 %v166
    %1178 = vmatpush.msra.mxu0 %v162
    %1179 = vmatpush.msra.mxu0 %v158
    %1180 = vmatpush.msra.mxu0 %v154
    %1181 = vmatpush.msra.mxu0 %v150
    %1182 = vmatpush.msra.mxu0 %v146
    %1183 = vmatpush.msra.mxu0 %v142
    %1184 = vmatpush.msra.mxu0 %v138
    %1185 = vmatpush.msra.mxu0 %v134
    %1186 = vmatpush.msra.mxu0 %v130
    %1187 = vmatpush.msra.mxu0 %v126
    %1188 = vmatpush.msra.mxu0 %v122
    %1189 = vmatmul.f32.gmra.mxu0 %v883
    %v1190 = vpop.f32.mrf.mxu0
    %v1191 = vadd.f32 0.0, %v1190
    %1192 = vdwg.mxu0
    %v1197 = vrot.slane %v1151, 6
    %v1198 = vrot.slane %v1171, 4
    %v1199 = vrot.slane %v1191, 2
    %v1200 = vsel %vm489, %v1131, %v1197
    %v1201 = vsel %vm491, %v1198, %v1199
    %v1202 = vsel %vm493, %v1200, %v1201
    %v1204 = vadd.f32 %v1112, %v1202
    %v1205 = vxor.u32 %v1204, 2147483648
    %v1206 = vmul.f32 %v1205, 1.442695
    %v1207 = vpow.pop %v1206
    %v1208 = vadd.f32 %v1207, 1.0
    %v1209 = vrcp.pop %v1208
    %v1210 = vmul.f32 %v1208, %v1209
    %v1211 = vsub.f32 1.0, %v1210
    %v1212 = vmul.f32 %v1209, %v1211
    %v1213 = vadd.f32 %v1209, %v1212
    %vm1214 = vweird.f32 %v1208
    %vm1215 = vweird.f32 %v1209
    %vm1216 = vmor %vm1214, %vm1215
    %v1217 = vsel %vm1216, %v1209, %v1213
    %v1218 = vand.u32 2147483647, %v1208
    %vm1219 = vcmp.eq.f32.partialorder %v1218, 8.507059e+37
    %v1220 = vand.u32 %v1208, 2147483648
    %v1221 = vor.u32 1.1754944e-38, %v1220
    %v1222 = vsel %vm1219, %v1221, %v1217
    %v1223 = vmul.f32 1.0, %v1222
    %v1225 = vrot.slane %v1204, 6
    %v1227 = vtanh.pop %v1225
    %v1229 = vrot.slane %v1223, 2
    %v1231 = vmul.f32 %v1229, %v879
    %v1232 = vmul.f32 %v1223, %v1227
    %v1233 = vadd.f32 %v1231, %v1232
    %v1234 = vtanh.pop %v1233
    %v1235 = vrot.slane %v1223, 4
    %v1237 = vmul.f32 %v1235, %v1234
    %1238 = vmatpush.msra.mxu0 %v243
    %1239 = vmatpush.msra.mxu0 %v239
    %1240 = vmatpush.msra.mxu0 %v235
    %1241 = vmatpush.msra.mxu0 %v231
    %1242 = vmatpush.msra.mxu0 %v227
    %1243 = vmatpush.msra.mxu0 %v223
    %1244 = vmatpush.msra.mxu0 %v219
    %1245 = vmatpush.msra.mxu0 %v215
    %1246 = vmatpush.msra.mxu0 %v211
    %1247 = vmatpush.msra.mxu0 %v207
    %1248 = vmatpush.msra.mxu0 %v203
    %1249 = vmatpush.msra.mxu0 %v199
    %1250 = vmatpush.msra.mxu0 %v195
    %1251 = vmatpush.msra.mxu0 %v191
    %1252 = vmatpush.msra.mxu0 %v187
    %1253 = vmatpush.msra.mxu0 %v183
    %1254 = vmatmul.f32.gmra.mxu0 %v1237
    %v1255 = vpop.f32.mrf.mxu0
    %v1256 = vadd.f32 0.0, %v1255
    %1257 = vdwg.mxu0
    %1258 = vmatpush.msra.mxu0 %v244
    %1259 = vmatpush.msra.mxu0 %v240
    %1260 = vmatpush.msra.mxu0 %v236
    %1261 = vmatpush.msra.mxu0 %v232
    %1262 = vmatpush.msra.mxu0 %v228
    %1263 = vmatpush.msra.mxu0 %v224
    %1264 = vmatpush.msra.mxu0 %v220
    %1265 = vmatpush.msra.mxu0 %v216
    %1266 = vmatpush.msra.mxu0 %v212
    %1267 = vmatpush.msra.mxu0 %v208
    %1268 = vmatpush.msra.mxu0 %v204
    %1269 = vmatpush.msra.mxu0 %v200
    %1270 = vmatpush.msra.mxu0 %v196
    %1271 = vmatpush.msra.mxu0 %v192
    %1272 = vmatpush.msra.mxu0 %v188
    %1273 = vmatpush.msra.mxu0 %v184
    %1274 = vmatmul.f32.gmra.mxu0 %v1237
    %v1275 = vpop.f32.mrf.mxu0
    %v1276 = vadd.f32 0.0, %v1275
    %1277 = vdwg.mxu0
    %1278 = vmatpush.msra.mxu0 %v245
    %1279 = vmatpush.msra.mxu0 %v241
    %1280 = vmatpush.msra.mxu0 %v237
    %1281 = vmatpush.msra.mxu0 %v233
    %1282 = vmatpush.msra.mxu0 %v229
    %1283 = vmatpush.msra.mxu0 %v225
    %1284 = vmatpush.msra.mxu0 %v221
    %1285 = vmatpush.msra.mxu0 %v217
    %1286 = vmatpush.msra.mxu0 %v213
    %1287 = vmatpush.msra.mxu0 %v209
    %1288 = vmatpush.msra.mxu0 %v205
    %1289 = vmatpush.msra.mxu0 %v201
    %1290 = vmatpush.msra.mxu0 %v197
    %1291 = vmatpush.msra.mxu0 %v193
    %1292 = vmatpush.msra.mxu0 %v189
    %1293 = vmatpush.msra.mxu0 %v185
    %1294 = vmatmul.f32.gmra.mxu0 %v1237
    %v1295 = vpop.f32.mrf.mxu0
    %v1296 = vadd.f32 0.0, %v1295
    %1297 = vdwg.mxu0
    %1298 = vmatpush.msra.mxu0 %v246
    %1299 = vmatpush.msra.mxu0 %v242
    %1300 = vmatpush.msra.mxu0 %v238
    %1301 = vmatpush.msra.mxu0 %v234
    %1302 = vmatpush.msra.mxu0 %v230
    %1303 = vmatpush.msra.mxu0 %v226
    %1304 = vmatpush.msra.mxu0 %v222
    %1305 = vmatpush.msra.mxu0 %v218
    %1306 = vmatpush.msra.mxu0 %v214
    %1307 = vmatpush.msra.mxu0 %v210
    %1308 = vmatpush.msra.mxu0 %v206
    %1309 = vmatpush.msra.mxu0 %v202
    %1310 = vmatpush.msra.mxu0 %v198
    %1311 = vmatpush.msra.mxu0 %v194
    %1312 = vmatpush.msra.mxu0 %v190
    %1313 = vmatpush.msra.mxu0 %v186
    %1314 = vmatmul.f32.gmra.mxu0 %v1237
    %v1315 = vpop.f32.mrf.mxu0
    %v1316 = vadd.f32 0.0, %v1315
    %1317 = vdwg.mxu0
    %v1318 = vadd.f32 %v1049, %v1256
    %v1319 = vadd.f32 %v1069, %v1276
    %v1320 = vadd.f32 %v1089, %v1296
    %v1321 = vadd.f32 %v1109, %v1316
    %v1322 = vxor.u32 %v1318, 2147483648
    %v1323 = vxor.u32 %v1319, 2147483648
    %v1324 = vxor.u32 %v1320, 2147483648
    %v1325 = vmul.f32 %v1322, 1.442695
    %v1326 = vpow.pop %v1325
    %v1327 = vmul.f32 %v1323, 1.442695
    %v1328 = vpow.pop %v1327
    %v1329 = vmul.f32 %v1324, 1.442695
    %v1330 = vpow.pop %v1329
    %v1331 = vadd.f32 %v1326, 1.0
    %v1332 = vadd.f32 %v1328, 1.0
    %v1333 = vadd.f32 %v1330, 1.0
    %v1334 = vrcp.pop %v1331
    %v1335 = vmul.f32 %v1331, %v1334
    %v1336 = vsub.f32 1.0, %v1335
    %v1337 = vmul.f32 %v1334, %v1336
    %v1338 = vadd.f32 %v1334, %v1337
    %vm1339 = vweird.f32 %v1331
    %vm1340 = vweird.f32 %v1334
    %vm1341 = vmor %vm1339, %vm1340
    %v1342 = vsel %vm1341, %v1334, %v1338
    %v1343 = vand.u32 2147483647, %v1331
    %vm1344 = vcmp.eq.f32.partialorder %v1343, 8.507059e+37
    %v1345 = vand.u32 %v1331, 2147483648
    %v1346 = vor.u32 1.1754944e-38, %v1345
    %v1347 = vsel %vm1344, %v1346, %v1342
    %v1348 = vmul.f32 1.0, %v1347
    %v1349 = vrcp.pop %v1332
    %v1350 = vmul.f32 %v1332, %v1349
    %v1351 = vsub.f32 1.0, %v1350
    %v1352 = vmul.f32 %v1349, %v1351
    %v1353 = vadd.f32 %v1349, %v1352
    %vm1354 = vweird.f32 %v1332
    %vm1355 = vweird.f32 %v1349
    %vm1356 = vmor %vm1354, %vm1355
    %v1357 = vsel %vm1356, %v1349, %v1353
    %v1358 = vand.u32 2147483647, %v1332
    %vm1359 = vcmp.eq.f32.partialorder %v1358, 8.507059e+37
    %v1360 = vand.u32 %v1332, 2147483648
    %v1361 = vor.u32 1.1754944e-38, %v1360
    %v1362 = vsel %vm1359, %v1361, %v1357
    %v1363 = vmul.f32 1.0, %v1362
    %v1364 = vrcp.pop %v1333
    %v1365 = vmul.f32 %v1333, %v1364
    %v1366 = vsub.f32 1.0, %v1365
    %v1367 = vmul.f32 %v1364, %v1366
    %v1368 = vadd.f32 %v1364, %v1367
    %vm1369 = vweird.f32 %v1333
    %vm1370 = vweird.f32 %v1364
    %vm1371 = vmor %vm1369, %vm1370
    %v1372 = vsel %vm1371, %v1364, %v1368
    %v1373 = vand.u32 2147483647, %v1333
    %vm1374 = vcmp.eq.f32.partialorder %v1373, 8.507059e+37
    %v1375 = vand.u32 %v1333, 2147483648
    %v1376 = vor.u32 1.1754944e-38, %v1375
    %v1377 = vsel %vm1374, %v1376, %v1372
    %v1378 = vmul.f32 1.0, %v1377
    %v1379 = vtanh.pop %v1321
    %v1380 = vmul.f32 %v1363, %v1028
    %v1381 = vmul.f32 %v1348, %v1379
    %v1382 = vadd.f32 %v1380, %v1381
    %v1383 = vtanh.pop %v1382
    %v1384 = vmul.f32 %v1378, %v1383
    %1385 = vmatpush.msra.mxu0 %v307
    %1386 = vmatpush.msra.mxu0 %v303
    %1387 = vmatpush.msra.mxu0 %v299
    %1388 = vmatpush.msra.mxu0 %v295
    %1389 = vmatpush.msra.mxu0 %v291
    %1390 = vmatpush.msra.mxu0 %v287
    %1391 = vmatpush.msra.mxu0 %v283
    %1392 = vmatpush.msra.mxu0 %v279
    %1393 = vmatpush.msra.mxu0 %v275
    %1394 = vmatpush.msra.mxu0 %v271
    %1395 = vmatpush.msra.mxu0 %v267
    %1396 = vmatpush.msra.mxu0 %v263
    %1397 = vmatpush.msra.mxu0 %v259
    %1398 = vmatpush.msra.mxu0 %v255
    %1399 = vmatpush.msra.mxu0 %v251
    %1400 = vmatpush.msra.mxu0 %v247
    %1401 = vmatmul.f32.gmra.mxu0 %v1384
    %v1402 = vpop.f32.mrf.mxu0
    %v1403 = vadd.f32 %v313, %v1402
    %1404 = vdwg.mxu0
    %1405 = vmatpush.msra.mxu0 %v308
    %1406 = vmatpush.msra.mxu0 %v304
    %1407 = vmatpush.msra.mxu0 %v300
    %1408 = vmatpush.msra.mxu0 %v296
    %1409 = vmatpush.msra.mxu0 %v292
    %1410 = vmatpush.msra.mxu0 %v288
    %1411 = vmatpush.msra.mxu0 %v284
    %1412 = vmatpush.msra.mxu0 %v280
    %1413 = vmatpush.msra.mxu0 %v276
    %1414 = vmatpush.msra.mxu0 %v272
    %1415 = vmatpush.msra.mxu0 %v268
    %1416 = vmatpush.msra.mxu0 %v264
    %1417 = vmatpush.msra.mxu0 %v260
    %1418 = vmatpush.msra.mxu0 %v256
    %1419 = vmatpush.msra.mxu0 %v252
    %1420 = vmatpush.msra.mxu0 %v248
    %1421 = vmatmul.f32.gmra.mxu0 %v1384
    %v1422 = vpop.f32.mrf.mxu0
    %v1423 = vadd.f32 %v314, %v1422
    %1424 = vdwg.mxu0
    %1425 = vmatpush.msra.mxu0 %v309
    %1426 = vmatpush.msra.mxu0 %v305
    %1427 = vmatpush.msra.mxu0 %v301
    %1428 = vmatpush.msra.mxu0 %v297
    %1429 = vmatpush.msra.mxu0 %v293
    %1430 = vmatpush.msra.mxu0 %v289
    %1431 = vmatpush.msra.mxu0 %v285
    %1432 = vmatpush.msra.mxu0 %v281
    %1433 = vmatpush.msra.mxu0 %v277
    %1434 = vmatpush.msra.mxu0 %v273
    %1435 = vmatpush.msra.mxu0 %v269
    %1436 = vmatpush.msra.mxu0 %v265
    %1437 = vmatpush.msra.mxu0 %v261
    %1438 = vmatpush.msra.mxu0 %v257
    %1439 = vmatpush.msra.mxu0 %v253
    %1440 = vmatpush.msra.mxu0 %v249
    %1441 = vmatmul.f32.gmra.mxu0 %v1384
    %v1442 = vpop.f32.mrf.mxu0
    %v1443 = vadd.f32 %v315, %v1442
    %1444 = vdwg.mxu0
    %1445 = vmatpush.msra.mxu0 %v310
    %1446 = vmatpush.msra.mxu0 %v306
    %1447 = vmatpush.msra.mxu0 %v302
    %1448 = vmatpush.msra.mxu0 %v298
    %1449 = vmatpush.msra.mxu0 %v294
    %1450 = vmatpush.msra.mxu0 %v290
    %1451 = vmatpush.msra.mxu0 %v286
    %1452 = vmatpush.msra.mxu0 %v282
    %1453 = vmatpush.msra.mxu0 %v278
    %1454 = vmatpush.msra.mxu0 %v274
    %1455 = vmatpush.msra.mxu0 %v270
    %1456 = vmatpush.msra.mxu0 %v266
    %1457 = vmatpush.msra.mxu0 %v262
    %1458 = vmatpush.msra.mxu0 %v258
    %1459 = vmatpush.msra.mxu0 %v254
    %1460 = vmatpush.msra.mxu0 %v250
    %1461 = vmatmul.f32.gmra.mxu0 %v1384
    %v1462 = vpop.f32.mrf.mxu0
    %v1463 = vadd.f32 %v316, %v1462
    %1464 = vdwg.mxu0
    %s1465 = scalar_lea.vmem [#allocation2], 24
    %v1466 = vld [vmem:[%s1465] sm:$0xff]
    %1467 = vmatpush.msra.mxu0 %v179
    %1468 = vmatpush.msra.mxu0 %v175
    %1469 = vmatpush.msra.mxu0 %v171
    %1470 = vmatpush.msra.mxu0 %v167
    %1471 = vmatpush.msra.mxu0 %v163
    %1472 = vmatpush.msra.mxu0 %v159
    %1473 = vmatpush.msra.mxu0 %v155
    %1474 = vmatpush.msra.mxu0 %v151
    %1475 = vmatpush.msra.mxu0 %v147
    %1476 = vmatpush.msra.mxu0 %v143
    %1477 = vmatpush.msra.mxu0 %v139
    %1478 = vmatpush.msra.mxu0 %v135
    %1479 = vmatpush.msra.mxu0 %v131
    %1480 = vmatpush.msra.mxu0 %v127
    %1481 = vmatpush.msra.mxu0 %v123
    %1482 = vmatpush.msra.mxu0 %v119
    %1483 = vmatmul.f32.gmra.mxu0 %v1237
    %v1484 = vpop.f32.mrf.mxu0
    %v1485 = vadd.f32 0.0, %v1484
    %1486 = vdwg.mxu0
    %1487 = vmatpush.msra.mxu0 %v180
    %1488 = vmatpush.msra.mxu0 %v176
    %1489 = vmatpush.msra.mxu0 %v172
    %1490 = vmatpush.msra.mxu0 %v168
    %1491 = vmatpush.msra.mxu0 %v164
    %1492 = vmatpush.msra.mxu0 %v160
    %1493 = vmatpush.msra.mxu0 %v156
    %1494 = vmatpush.msra.mxu0 %v152
    %1495 = vmatpush.msra.mxu0 %v148
    %1496 = vmatpush.msra.mxu0 %v144
    %1497 = vmatpush.msra.mxu0 %v140
    %1498 = vmatpush.msra.mxu0 %v136
    %1499 = vmatpush.msra.mxu0 %v132
    %1500 = vmatpush.msra.mxu0 %v128
    %1501 = vmatpush.msra.mxu0 %v124
    %1502 = vmatpush.msra.mxu0 %v120
    %1503 = vmatmul.f32.gmra.mxu0 %v1237
    %v1504 = vpop.f32.mrf.mxu0
    %v1505 = vadd.f32 0.0, %v1504
    %1506 = vdwg.mxu0
    %1507 = vmatpush.msra.mxu0 %v181
    %1508 = vmatpush.msra.mxu0 %v177
    %1509 = vmatpush.msra.mxu0 %v173
    %1510 = vmatpush.msra.mxu0 %v169
    %1511 = vmatpush.msra.mxu0 %v165
    %1512 = vmatpush.msra.mxu0 %v161
    %1513 = vmatpush.msra.mxu0 %v157
    %1514 = vmatpush.msra.mxu0 %v153
    %1515 = vmatpush.msra.mxu0 %v149
    %1516 = vmatpush.msra.mxu0 %v145
    %1517 = vmatpush.msra.mxu0 %v141
    %1518 = vmatpush.msra.mxu0 %v137
    %1519 = vmatpush.msra.mxu0 %v133
    %1520 = vmatpush.msra.mxu0 %v129
    %1521 = vmatpush.msra.mxu0 %v125
    %1522 = vmatpush.msra.mxu0 %v121
    %1523 = vmatmul.f32.gmra.mxu0 %v1237
    %v1524 = vpop.f32.mrf.mxu0
    %v1525 = vadd.f32 0.0, %v1524
    %1526 = vdwg.mxu0
    %1527 = vmatpush.msra.mxu0 %v182
    %1528 = vmatpush.msra.mxu0 %v178
    %1529 = vmatpush.msra.mxu0 %v174
    %1530 = vmatpush.msra.mxu0 %v170
    %1531 = vmatpush.msra.mxu0 %v166
    %1532 = vmatpush.msra.mxu0 %v162
    %1533 = vmatpush.msra.mxu0 %v158
    %1534 = vmatpush.msra.mxu0 %v154
    %1535 = vmatpush.msra.mxu0 %v150
    %1536 = vmatpush.msra.mxu0 %v146
    %1537 = vmatpush.msra.mxu0 %v142
    %1538 = vmatpush.msra.mxu0 %v138
    %1539 = vmatpush.msra.mxu0 %v134
    %1540 = vmatpush.msra.mxu0 %v130
    %1541 = vmatpush.msra.mxu0 %v126
    %1542 = vmatpush.msra.mxu0 %v122
    %1543 = vmatmul.f32.gmra.mxu0 %v1237
    %v1544 = vpop.f32.mrf.mxu0
    %v1545 = vadd.f32 0.0, %v1544
    %1546 = vdwg.mxu0
    %v1551 = vrot.slane %v1505, 6
    %v1552 = vrot.slane %v1525, 4
    %v1553 = vrot.slane %v1545, 2
    %v1554 = vsel %vm489, %v1485, %v1551
    %v1555 = vsel %vm491, %v1552, %v1553
    %v1556 = vsel %vm493, %v1554, %v1555
    %v1558 = vadd.f32 %v1466, %v1556
    %v1559 = vxor.u32 %v1558, 2147483648
    %v1560 = vmul.f32 %v1559, 1.442695
    %v1561 = vpow.pop %v1560
    %v1562 = vadd.f32 %v1561, 1.0
    %v1563 = vrcp.pop %v1562
    %v1564 = vmul.f32 %v1562, %v1563
    %v1565 = vsub.f32 1.0, %v1564
    %v1566 = vmul.f32 %v1563, %v1565
    %v1567 = vadd.f32 %v1563, %v1566
    %vm1568 = vweird.f32 %v1562
    %vm1569 = vweird.f32 %v1563
    %vm1570 = vmor %vm1568, %vm1569
    %v1571 = vsel %vm1570, %v1563, %v1567
    %v1572 = vand.u32 2147483647, %v1562
    %vm1573 = vcmp.eq.f32.partialorder %v1572, 8.507059e+37
    %v1574 = vand.u32 %v1562, 2147483648
    %v1575 = vor.u32 1.1754944e-38, %v1574
    %v1576 = vsel %vm1573, %v1575, %v1571
    %v1577 = vmul.f32 1.0, %v1576
    %v1579 = vrot.slane %v1558, 6
    %v1581 = vtanh.pop %v1579
    %v1583 = vrot.slane %v1577, 2
    %v1585 = vmul.f32 %v1583, %v1233
    %v1586 = vmul.f32 %v1577, %v1581
    %v1587 = vadd.f32 %v1585, %v1586
    %v1588 = vtanh.pop %v1587
    %v1589 = vrot.slane %v1577, 4
    %v1591 = vmul.f32 %v1589, %v1588
    %1592 = vmatpush.msra.mxu0 %v243
    %1593 = vmatpush.msra.mxu0 %v239
    %1594 = vmatpush.msra.mxu0 %v235
    %1595 = vmatpush.msra.mxu0 %v231
    %1596 = vmatpush.msra.mxu0 %v227
    %1597 = vmatpush.msra.mxu0 %v223
    %1598 = vmatpush.msra.mxu0 %v219
    %1599 = vmatpush.msra.mxu0 %v215
    %1600 = vmatpush.msra.mxu0 %v211
    %1601 = vmatpush.msra.mxu0 %v207
    %1602 = vmatpush.msra.mxu0 %v203
    %1603 = vmatpush.msra.mxu0 %v199
    %1604 = vmatpush.msra.mxu0 %v195
    %1605 = vmatpush.msra.mxu0 %v191
    %1606 = vmatpush.msra.mxu0 %v187
    %1607 = vmatpush.msra.mxu0 %v183
    %1608 = vmatmul.f32.gmra.mxu0 %v1591
    %v1609 = vpop.f32.mrf.mxu0
    %v1610 = vadd.f32 0.0, %v1609
    %1611 = vdwg.mxu0
    %1612 = vmatpush.msra.mxu0 %v244
    %1613 = vmatpush.msra.mxu0 %v240
    %1614 = vmatpush.msra.mxu0 %v236
    %1615 = vmatpush.msra.mxu0 %v232
    %1616 = vmatpush.msra.mxu0 %v228
    %1617 = vmatpush.msra.mxu0 %v224
    %1618 = vmatpush.msra.mxu0 %v220
    %1619 = vmatpush.msra.mxu0 %v216
    %1620 = vmatpush.msra.mxu0 %v212
    %1621 = vmatpush.msra.mxu0 %v208
    %1622 = vmatpush.msra.mxu0 %v204
    %1623 = vmatpush.msra.mxu0 %v200
    %1624 = vmatpush.msra.mxu0 %v196
    %1625 = vmatpush.msra.mxu0 %v192
    %1626 = vmatpush.msra.mxu0 %v188
    %1627 = vmatpush.msra.mxu0 %v184
    %1628 = vmatmul.f32.gmra.mxu0 %v1591
    %v1629 = vpop.f32.mrf.mxu0
    %v1630 = vadd.f32 0.0, %v1629
    %1631 = vdwg.mxu0
    %1632 = vmatpush.msra.mxu0 %v245
    %1633 = vmatpush.msra.mxu0 %v241
    %1634 = vmatpush.msra.mxu0 %v237
    %1635 = vmatpush.msra.mxu0 %v233
    %1636 = vmatpush.msra.mxu0 %v229
    %1637 = vmatpush.msra.mxu0 %v225
    %1638 = vmatpush.msra.mxu0 %v221
    %1639 = vmatpush.msra.mxu0 %v217
    %1640 = vmatpush.msra.mxu0 %v213
    %1641 = vmatpush.msra.mxu0 %v209
    %1642 = vmatpush.msra.mxu0 %v205
    %1643 = vmatpush.msra.mxu0 %v201
    %1644 = vmatpush.msra.mxu0 %v197
    %1645 = vmatpush.msra.mxu0 %v193
    %1646 = vmatpush.msra.mxu0 %v189
    %1647 = vmatpush.msra.mxu0 %v185
    %1648 = vmatmul.f32.gmra.mxu0 %v1591
    %v1649 = vpop.f32.mrf.mxu0
    %v1650 = vadd.f32 0.0, %v1649
    %1651 = vdwg.mxu0
    %1652 = vmatpush.msra.mxu0 %v246
    %1653 = vmatpush.msra.mxu0 %v242
    %1654 = vmatpush.msra.mxu0 %v238
    %1655 = vmatpush.msra.mxu0 %v234
    %1656 = vmatpush.msra.mxu0 %v230
    %1657 = vmatpush.msra.mxu0 %v226
    %1658 = vmatpush.msra.mxu0 %v222
    %1659 = vmatpush.msra.mxu0 %v218
    %1660 = vmatpush.msra.mxu0 %v214
    %1661 = vmatpush.msra.mxu0 %v210
    %1662 = vmatpush.msra.mxu0 %v206
    %1663 = vmatpush.msra.mxu0 %v202
    %1664 = vmatpush.msra.mxu0 %v198
    %1665 = vmatpush.msra.mxu0 %v194
    %1666 = vmatpush.msra.mxu0 %v190
    %1667 = vmatpush.msra.mxu0 %v186
    %1668 = vmatmul.f32.gmra.mxu0 %v1591
    %v1669 = vpop.f32.mrf.mxu0
    %v1670 = vadd.f32 0.0, %v1669
    %1671 = vdwg.mxu0
    %v1672 = vadd.f32 %v1403, %v1610
    %v1673 = vadd.f32 %v1423, %v1630
    %v1674 = vadd.f32 %v1443, %v1650
    %v1675 = vadd.f32 %v1463, %v1670
    %v1676 = vxor.u32 %v1672, 2147483648
    %v1677 = vxor.u32 %v1673, 2147483648
    %v1678 = vxor.u32 %v1674, 2147483648
    %v1679 = vmul.f32 %v1676, 1.442695
    %v1680 = vpow.pop %v1679
    %v1681 = vmul.f32 %v1677, 1.442695
    %v1682 = vpow.pop %v1681
    %v1683 = vmul.f32 %v1678, 1.442695
    %v1684 = vpow.pop %v1683
    %v1685 = vadd.f32 %v1680, 1.0
    %v1686 = vadd.f32 %v1682, 1.0
    %v1687 = vadd.f32 %v1684, 1.0
    %v1688 = vrcp.pop %v1685
    %v1689 = vmul.f32 %v1685, %v1688
    %v1690 = vsub.f32 1.0, %v1689
    %v1691 = vmul.f32 %v1688, %v1690
    %v1692 = vadd.f32 %v1688, %v1691
    %vm1693 = vweird.f32 %v1685
    %vm1694 = vweird.f32 %v1688
    %vm1695 = vmor %vm1693, %vm1694
    %v1696 = vsel %vm1695, %v1688, %v1692
    %v1697 = vand.u32 2147483647, %v1685
    %vm1698 = vcmp.eq.f32.partialorder %v1697, 8.507059e+37
    %v1699 = vand.u32 %v1685, 2147483648
    %v1700 = vor.u32 1.1754944e-38, %v1699
    %v1701 = vsel %vm1698, %v1700, %v1696
    %v1702 = vmul.f32 1.0, %v1701
    %v1703 = vrcp.pop %v1686
    %v1704 = vmul.f32 %v1686, %v1703
    %v1705 = vsub.f32 1.0, %v1704
    %v1706 = vmul.f32 %v1703, %v1705
    %v1707 = vadd.f32 %v1703, %v1706
    %vm1708 = vweird.f32 %v1686
    %vm1709 = vweird.f32 %v1703
    %vm1710 = vmor %vm1708, %vm1709
    %v1711 = vsel %vm1710, %v1703, %v1707
    %v1712 = vand.u32 2147483647, %v1686
    %vm1713 = vcmp.eq.f32.partialorder %v1712, 8.507059e+37
    %v1714 = vand.u32 %v1686, 2147483648
    %v1715 = vor.u32 1.1754944e-38, %v1714
    %v1716 = vsel %vm1713, %v1715, %v1711
    %v1717 = vmul.f32 1.0, %v1716
    %v1718 = vrcp.pop %v1687
    %v1719 = vmul.f32 %v1687, %v1718
    %v1720 = vsub.f32 1.0, %v1719
    %v1721 = vmul.f32 %v1718, %v1720
    %v1722 = vadd.f32 %v1718, %v1721
    %vm1723 = vweird.f32 %v1687
    %vm1724 = vweird.f32 %v1718
    %vm1725 = vmor %vm1723, %vm1724
    %v1726 = vsel %vm1725, %v1718, %v1722
    %v1727 = vand.u32 2147483647, %v1687
    %vm1728 = vcmp.eq.f32.partialorder %v1727, 8.507059e+37
    %v1729 = vand.u32 %v1687, 2147483648
    %v1730 = vor.u32 1.1754944e-38, %v1729
    %v1731 = vsel %vm1728, %v1730, %v1726
    %v1732 = vmul.f32 1.0, %v1731
    %v1733 = vtanh.pop %v1675
    %v1734 = vmul.f32 %v1717, %v1382
    %v1735 = vmul.f32 %v1702, %v1733
    %v1736 = vadd.f32 %v1734, %v1735
    %v1737 = vtanh.pop %v1736
    %v1738 = vmul.f32 %v1732, %v1737
    %1739 = vmatpush.msra.mxu0 %v307
    %1740 = vmatpush.msra.mxu0 %v303
    %1741 = vmatpush.msra.mxu0 %v299
    %1742 = vmatpush.msra.mxu0 %v295
    %1743 = vmatpush.msra.mxu0 %v291
    %1744 = vmatpush.msra.mxu0 %v287
    %1745 = vmatpush.msra.mxu0 %v283
    %1746 = vmatpush.msra.mxu0 %v279
    %1747 = vmatpush.msra.mxu0 %v275
    %1748 = vmatpush.msra.mxu0 %v271
    %1749 = vmatpush.msra.mxu0 %v267
    %1750 = vmatpush.msra.mxu0 %v263
    %1751 = vmatpush.msra.mxu0 %v259
    %1752 = vmatpush.msra.mxu0 %v255
    %1753 = vmatpush.msra.mxu0 %v251
    %1754 = vmatpush.msra.mxu0 %v247
    %1755 = vmatmul.f32.gmra.mxu0 %v1738
    %v1756 = vpop.f32.mrf.mxu0
    %v1757 = vadd.f32 %v313, %v1756
    %1758 = vdwg.mxu0
    %1759 = vmatpush.msra.mxu0 %v308
    %1760 = vmatpush.msra.mxu0 %v304
    %1761 = vmatpush.msra.mxu0 %v300
    %1762 = vmatpush.msra.mxu0 %v296
    %1763 = vmatpush.msra.mxu0 %v292
    %1764 = vmatpush.msra.mxu0 %v288
    %1765 = vmatpush.msra.mxu0 %v284
    %1766 = vmatpush.msra.mxu0 %v280
    %1767 = vmatpush.msra.mxu0 %v276
    %1768 = vmatpush.msra.mxu0 %v272
    %1769 = vmatpush.msra.mxu0 %v268
    %1770 = vmatpush.msra.mxu0 %v264
    %1771 = vmatpush.msra.mxu0 %v260
    %1772 = vmatpush.msra.mxu0 %v256
    %1773 = vmatpush.msra.mxu0 %v252
    %1774 = vmatpush.msra.mxu0 %v248
    %1775 = vmatmul.f32.gmra.mxu0 %v1738
    %v1776 = vpop.f32.mrf.mxu0
    %v1777 = vadd.f32 %v314, %v1776
    %1778 = vdwg.mxu0
    %1779 = vmatpush.msra.mxu0 %v309
    %1780 = vmatpush.msra.mxu0 %v305
    %1781 = vmatpush.msra.mxu0 %v301
    %1782 = vmatpush.msra.mxu0 %v297
    %1783 = vmatpush.msra.mxu0 %v293
    %1784 = vmatpush.msra.mxu0 %v289
    %1785 = vmatpush.msra.mxu0 %v285
    %1786 = vmatpush.msra.mxu0 %v281
    %1787 = vmatpush.msra.mxu0 %v277
    %1788 = vmatpush.msra.mxu0 %v273
    %1789 = vmatpush.msra.mxu0 %v269
    %1790 = vmatpush.msra.mxu0 %v265
    %1791 = vmatpush.msra.mxu0 %v261
    %1792 = vmatpush.msra.mxu0 %v257
    %1793 = vmatpush.msra.mxu0 %v253
    %1794 = vmatpush.msra.mxu0 %v249
    %1795 = vmatmul.f32.gmra.mxu0 %v1738
    %v1796 = vpop.f32.mrf.mxu0
    %v1797 = vadd.f32 %v315, %v1796
    %1798 = vdwg.mxu0
    %1799 = vmatpush.msra.mxu0 %v310
    %1800 = vmatpush.msra.mxu0 %v306
    %1801 = vmatpush.msra.mxu0 %v302
    %1802 = vmatpush.msra.mxu0 %v298
    %1803 = vmatpush.msra.mxu0 %v294
    %1804 = vmatpush.msra.mxu0 %v290
    %1805 = vmatpush.msra.mxu0 %v286
    %1806 = vmatpush.msra.mxu0 %v282
    %1807 = vmatpush.msra.mxu0 %v278
    %1808 = vmatpush.msra.mxu0 %v274
    %1809 = vmatpush.msra.mxu0 %v270
    %1810 = vmatpush.msra.mxu0 %v266
    %1811 = vmatpush.msra.mxu0 %v262
    %1812 = vmatpush.msra.mxu0 %v258
    %1813 = vmatpush.msra.mxu0 %v254
    %1814 = vmatpush.msra.mxu0 %v250
    %1815 = vmatmul.f32.gmra.mxu0 %v1738
    %v1816 = vpop.f32.mrf.mxu0
    %v1817 = vadd.f32 %v316, %v1816
    %1818 = vdwg.mxu0
    %s1819 = scalar_lea.vmem [#allocation2], 32
    %v1820 = vld [vmem:[%s1819] sm:$0xff]
    %1821 = vmatpush.msra.mxu0 %v179
    %1822 = vmatpush.msra.mxu0 %v175
    %1823 = vmatpush.msra.mxu0 %v171
    %1824 = vmatpush.msra.mxu0 %v167
    %1825 = vmatpush.msra.mxu0 %v163
    %1826 = vmatpush.msra.mxu0 %v159
    %1827 = vmatpush.msra.mxu0 %v155
    %1828 = vmatpush.msra.mxu0 %v151
    %1829 = vmatpush.msra.mxu0 %v147
    %1830 = vmatpush.msra.mxu0 %v143
    %1831 = vmatpush.msra.mxu0 %v139
    %1832 = vmatpush.msra.mxu0 %v135
    %1833 = vmatpush.msra.mxu0 %v131
    %1834 = vmatpush.msra.mxu0 %v127
    %1835 = vmatpush.msra.mxu0 %v123
    %1836 = vmatpush.msra.mxu0 %v119
    %1837 = vmatmul.f32.gmra.mxu0 %v1591
    %v1838 = vpop.f32.mrf.mxu0
    %v1839 = vadd.f32 0.0, %v1838
    %1840 = vdwg.mxu0
    %1841 = vmatpush.msra.mxu0 %v180
    %1842 = vmatpush.msra.mxu0 %v176
    %1843 = vmatpush.msra.mxu0 %v172
    %1844 = vmatpush.msra.mxu0 %v168
    %1845 = vmatpush.msra.mxu0 %v164
    %1846 = vmatpush.msra.mxu0 %v160
    %1847 = vmatpush.msra.mxu0 %v156
    %1848 = vmatpush.msra.mxu0 %v152
    %1849 = vmatpush.msra.mxu0 %v148
    %1850 = vmatpush.msra.mxu0 %v144
    %1851 = vmatpush.msra.mxu0 %v140
    %1852 = vmatpush.msra.mxu0 %v136
    %1853 = vmatpush.msra.mxu0 %v132
    %1854 = vmatpush.msra.mxu0 %v128
    %1855 = vmatpush.msra.mxu0 %v124
    %1856 = vmatpush.msra.mxu0 %v120
    %1857 = vmatmul.f32.gmra.mxu0 %v1591
    %v1858 = vpop.f32.mrf.mxu0
    %v1859 = vadd.f32 0.0, %v1858
    %1860 = vdwg.mxu0
    %1861 = vmatpush.msra.mxu0 %v181
    %1862 = vmatpush.msra.mxu0 %v177
    %1863 = vmatpush.msra.mxu0 %v173
    %1864 = vmatpush.msra.mxu0 %v169
    %1865 = vmatpush.msra.mxu0 %v165
    %1866 = vmatpush.msra.mxu0 %v161
    %1867 = vmatpush.msra.mxu0 %v157
    %1868 = vmatpush.msra.mxu0 %v153
    %1869 = vmatpush.msra.mxu0 %v149
    %1870 = vmatpush.msra.mxu0 %v145
    %1871 = vmatpush.msra.mxu0 %v141
    %1872 = vmatpush.msra.mxu0 %v137
    %1873 = vmatpush.msra.mxu0 %v133
    %1874 = vmatpush.msra.mxu0 %v129
    %1875 = vmatpush.msra.mxu0 %v125
    %1876 = vmatpush.msra.mxu0 %v121
    %1877 = vmatmul.f32.gmra.mxu0 %v1591
    %v1878 = vpop.f32.mrf.mxu0
    %v1879 = vadd.f32 0.0, %v1878
    %1880 = vdwg.mxu0
    %1881 = vmatpush.msra.mxu0 %v182
    %1882 = vmatpush.msra.mxu0 %v178
    %1883 = vmatpush.msra.mxu0 %v174
    %1884 = vmatpush.msra.mxu0 %v170
    %1885 = vmatpush.msra.mxu0 %v166
    %1886 = vmatpush.msra.mxu0 %v162
    %1887 = vmatpush.msra.mxu0 %v158
    %1888 = vmatpush.msra.mxu0 %v154
    %1889 = vmatpush.msra.mxu0 %v150
    %1890 = vmatpush.msra.mxu0 %v146
    %1891 = vmatpush.msra.mxu0 %v142
    %1892 = vmatpush.msra.mxu0 %v138
    %1893 = vmatpush.msra.mxu0 %v134
    %1894 = vmatpush.msra.mxu0 %v130
    %1895 = vmatpush.msra.mxu0 %v126
    %1896 = vmatpush.msra.mxu0 %v122
    %1897 = vmatmul.f32.gmra.mxu0 %v1591
    %v1898 = vpop.f32.mrf.mxu0
    %v1899 = vadd.f32 0.0, %v1898
    %1900 = vdwg.mxu0
    %v1905 = vrot.slane %v1859, 6
    %v1906 = vrot.slane %v1879, 4
    %v1907 = vrot.slane %v1899, 2
    %v1908 = vsel %vm489, %v1839, %v1905
    %v1909 = vsel %vm491, %v1906, %v1907
    %v1910 = vsel %vm493, %v1908, %v1909
    %v1912 = vadd.f32 %v1820, %v1910
    %v1913 = vxor.u32 %v1912, 2147483648
    %v1914 = vmul.f32 %v1913, 1.442695
    %v1915 = vpow.pop %v1914
    %v1916 = vadd.f32 %v1915, 1.0
    %v1917 = vrcp.pop %v1916
    %v1918 = vmul.f32 %v1916, %v1917
    %v1919 = vsub.f32 1.0, %v1918
    %v1920 = vmul.f32 %v1917, %v1919
    %v1921 = vadd.f32 %v1917, %v1920
    %vm1922 = vweird.f32 %v1916
    %vm1923 = vweird.f32 %v1917
    %vm1924 = vmor %vm1922, %vm1923
    %v1925 = vsel %vm1924, %v1917, %v1921
    %v1926 = vand.u32 2147483647, %v1916
    %vm1927 = vcmp.eq.f32.partialorder %v1926, 8.507059e+37
    %v1928 = vand.u32 %v1916, 2147483648
    %v1929 = vor.u32 1.1754944e-38, %v1928
    %v1930 = vsel %vm1927, %v1929, %v1925
    %v1931 = vmul.f32 1.0, %v1930
    %v1933 = vrot.slane %v1912, 6
    %v1935 = vtanh.pop %v1933
    %v1937 = vrot.slane %v1931, 2
    %v1939 = vmul.f32 %v1937, %v1587
    %v1940 = vmul.f32 %v1931, %v1935
    %v1941 = vadd.f32 %v1939, %v1940
    %v1942 = vtanh.pop %v1941
    %v1943 = vrot.slane %v1931, 4
    %v1945 = vmul.f32 %v1943, %v1942
    %1946 = vmatpush.msra.mxu0 %v243
    %1947 = vmatpush.msra.mxu0 %v239
    %1948 = vmatpush.msra.mxu0 %v235
    %1949 = vmatpush.msra.mxu0 %v231
    %1950 = vmatpush.msra.mxu0 %v227
    %1951 = vmatpush.msra.mxu0 %v223
    %1952 = vmatpush.msra.mxu0 %v219
    %1953 = vmatpush.msra.mxu0 %v215
    %1954 = vmatpush.msra.mxu0 %v211
    %1955 = vmatpush.msra.mxu0 %v207
    %1956 = vmatpush.msra.mxu0 %v203
    %1957 = vmatpush.msra.mxu0 %v199
    %1958 = vmatpush.msra.mxu0 %v195
    %1959 = vmatpush.msra.mxu0 %v191
    %1960 = vmatpush.msra.mxu0 %v187
    %1961 = vmatpush.msra.mxu0 %v183
    %1962 = vmatmul.f32.gmra.mxu0 %v1945
    %v1963 = vpop.f32.mrf.mxu0
    %v1964 = vadd.f32 0.0, %v1963
    %1965 = vdwg.mxu0
    %1966 = vmatpush.msra.mxu0 %v244
    %1967 = vmatpush.msra.mxu0 %v240
    %1968 = vmatpush.msra.mxu0 %v236
    %1969 = vmatpush.msra.mxu0 %v232
    %1970 = vmatpush.msra.mxu0 %v228
    %1971 = vmatpush.msra.mxu0 %v224
    %1972 = vmatpush.msra.mxu0 %v220
    %1973 = vmatpush.msra.mxu0 %v216
    %1974 = vmatpush.msra.mxu0 %v212
    %1975 = vmatpush.msra.mxu0 %v208
    %1976 = vmatpush.msra.mxu0 %v204
    %1977 = vmatpush.msra.mxu0 %v200
    %1978 = vmatpush.msra.mxu0 %v196
    %1979 = vmatpush.msra.mxu0 %v192
    %1980 = vmatpush.msra.mxu0 %v188
    %1981 = vmatpush.msra.mxu0 %v184
    %1982 = vmatmul.f32.gmra.mxu0 %v1945
    %v1983 = vpop.f32.mrf.mxu0
    %v1984 = vadd.f32 0.0, %v1983
    %1985 = vdwg.mxu0
    %1986 = vmatpush.msra.mxu0 %v245
    %1987 = vmatpush.msra.mxu0 %v241
    %1988 = vmatpush.msra.mxu0 %v237
    %1989 = vmatpush.msra.mxu0 %v233
    %1990 = vmatpush.msra.mxu0 %v229
    %1991 = vmatpush.msra.mxu0 %v225
    %1992 = vmatpush.msra.mxu0 %v221
    %1993 = vmatpush.msra.mxu0 %v217
    %1994 = vmatpush.msra.mxu0 %v213
    %1995 = vmatpush.msra.mxu0 %v209
    %1996 = vmatpush.msra.mxu0 %v205
    %1997 = vmatpush.msra.mxu0 %v201
    %1998 = vmatpush.msra.mxu0 %v197
    %1999 = vmatpush.msra.mxu0 %v193
    %2000 = vmatpush.msra.mxu0 %v189
    %2001 = vmatpush.msra.mxu0 %v185
    %2002 = vmatmul.f32.gmra.mxu0 %v1945
    %v2003 = vpop.f32.mrf.mxu0
    %v2004 = vadd.f32 0.0, %v2003
    %2005 = vdwg.mxu0
    %2006 = vmatpush.msra.mxu0 %v246
    %2007 = vmatpush.msra.mxu0 %v242
    %2008 = vmatpush.msra.mxu0 %v238
    %2009 = vmatpush.msra.mxu0 %v234
    %2010 = vmatpush.msra.mxu0 %v230
    %2011 = vmatpush.msra.mxu0 %v226
    %2012 = vmatpush.msra.mxu0 %v222
    %2013 = vmatpush.msra.mxu0 %v218
    %2014 = vmatpush.msra.mxu0 %v214
    %2015 = vmatpush.msra.mxu0 %v210
    %2016 = vmatpush.msra.mxu0 %v206
    %2017 = vmatpush.msra.mxu0 %v202
    %2018 = vmatpush.msra.mxu0 %v198
    %2019 = vmatpush.msra.mxu0 %v194
    %2020 = vmatpush.msra.mxu0 %v190
    %2021 = vmatpush.msra.mxu0 %v186
    %2022 = vmatmul.f32.gmra.mxu0 %v1945
    %v2023 = vpop.f32.mrf.mxu0
    %v2024 = vadd.f32 0.0, %v2023
    %2025 = vdwg.mxu0
    %v2026 = vadd.f32 %v1757, %v1964
    %v2027 = vadd.f32 %v1777, %v1984
    %v2028 = vadd.f32 %v1797, %v2004
    %v2029 = vadd.f32 %v1817, %v2024
    %v2030 = vxor.u32 %v2026, 2147483648
    %v2031 = vxor.u32 %v2027, 2147483648
    %v2032 = vxor.u32 %v2028, 2147483648
    %v2033 = vmul.f32 %v2030, 1.442695
    %v2034 = vpow.pop %v2033
    %v2035 = vmul.f32 %v2031, 1.442695
    %v2036 = vpow.pop %v2035
    %v2037 = vmul.f32 %v2032, 1.442695
    %v2038 = vpow.pop %v2037
    %v2039 = vadd.f32 %v2034, 1.0
    %v2040 = vadd.f32 %v2036, 1.0
    %v2041 = vadd.f32 %v2038, 1.0
    %v2042 = vrcp.pop %v2039
    %v2043 = vmul.f32 %v2039, %v2042
    %v2044 = vsub.f32 1.0, %v2043
    %v2045 = vmul.f32 %v2042, %v2044
    %v2046 = vadd.f32 %v2042, %v2045
    %vm2047 = vweird.f32 %v2039
    %vm2048 = vweird.f32 %v2042
    %vm2049 = vmor %vm2047, %vm2048
    %v2050 = vsel %vm2049, %v2042, %v2046
    %v2051 = vand.u32 2147483647, %v2039
    %vm2052 = vcmp.eq.f32.partialorder %v2051, 8.507059e+37
    %v2053 = vand.u32 %v2039, 2147483648
    %v2054 = vor.u32 1.1754944e-38, %v2053
    %v2055 = vsel %vm2052, %v2054, %v2050
    %v2056 = vmul.f32 1.0, %v2055
    %v2057 = vrcp.pop %v2040
    %v2058 = vmul.f32 %v2040, %v2057
    %v2059 = vsub.f32 1.0, %v2058
    %v2060 = vmul.f32 %v2057, %v2059
    %v2061 = vadd.f32 %v2057, %v2060
    %vm2062 = vweird.f32 %v2040
    %vm2063 = vweird.f32 %v2057
    %vm2064 = vmor %vm2062, %vm2063
    %v2065 = vsel %vm2064, %v2057, %v2061
    %v2066 = vand.u32 2147483647, %v2040
    %vm2067 = vcmp.eq.f32.partialorder %v2066, 8.507059e+37
    %v2068 = vand.u32 %v2040, 2147483648
    %v2069 = vor.u32 1.1754944e-38, %v2068
    %v2070 = vsel %vm2067, %v2069, %v2065
    %v2071 = vmul.f32 1.0, %v2070
    %v2072 = vrcp.pop %v2041
    %v2073 = vmul.f32 %v2041, %v2072
    %v2074 = vsub.f32 1.0, %v2073
    %v2075 = vmul.f32 %v2072, %v2074
    %v2076 = vadd.f32 %v2072, %v2075
    %vm2077 = vweird.f32 %v2041
    %vm2078 = vweird.f32 %v2072
    %vm2079 = vmor %vm2077, %vm2078
    %v2080 = vsel %vm2079, %v2072, %v2076
    %v2081 = vand.u32 2147483647, %v2041
    %vm2082 = vcmp.eq.f32.partialorder %v2081, 8.507059e+37
    %v2083 = vand.u32 %v2041, 2147483648
    %v2084 = vor.u32 1.1754944e-38, %v2083
    %v2085 = vsel %vm2082, %v2084, %v2080
    %v2086 = vmul.f32 1.0, %v2085
    %v2087 = vtanh.pop %v2029
    %v2088 = vmul.f32 %v2071, %v1736
    %v2089 = vmul.f32 %v2056, %v2087
    %v2090 = vadd.f32 %v2088, %v2089
    %v2091 = vtanh.pop %v2090
    %v2092 = vmul.f32 %v2086, %v2091
    %2093 = vmatpush.msra.mxu0 %v307
    %2094 = vmatpush.msra.mxu0 %v303
    %2095 = vmatpush.msra.mxu0 %v299
    %2096 = vmatpush.msra.mxu0 %v295
    %2097 = vmatpush.msra.mxu0 %v291
    %2098 = vmatpush.msra.mxu0 %v287
    %2099 = vmatpush.msra.mxu0 %v283
    %2100 = vmatpush.msra.mxu0 %v279
    %2101 = vmatpush.msra.mxu0 %v275
    %2102 = vmatpush.msra.mxu0 %v271
    %2103 = vmatpush.msra.mxu0 %v267
    %2104 = vmatpush.msra.mxu0 %v263
    %2105 = vmatpush.msra.mxu0 %v259
    %2106 = vmatpush.msra.mxu0 %v255
    %2107 = vmatpush.msra.mxu0 %v251
    %2108 = vmatpush.msra.mxu0 %v247
    %2109 = vmatmul.f32.gmra.mxu0 %v2092
    %v2110 = vpop.f32.mrf.mxu0
    %v2111 = vadd.f32 %v313, %v2110
    %2112 = vdwg.mxu0
    %2113 = vmatpush.msra.mxu0 %v308
    %2114 = vmatpush.msra.mxu0 %v304
    %2115 = vmatpush.msra.mxu0 %v300
    %2116 = vmatpush.msra.mxu0 %v296
    %2117 = vmatpush.msra.mxu0 %v292
    %2118 = vmatpush.msra.mxu0 %v288
    %2119 = vmatpush.msra.mxu0 %v284
    %2120 = vmatpush.msra.mxu0 %v280
    %2121 = vmatpush.msra.mxu0 %v276
    %2122 = vmatpush.msra.mxu0 %v272
    %2123 = vmatpush.msra.mxu0 %v268
    %2124 = vmatpush.msra.mxu0 %v264
    %2125 = vmatpush.msra.mxu0 %v260
    %2126 = vmatpush.msra.mxu0 %v256
    %2127 = vmatpush.msra.mxu0 %v252
    %2128 = vmatpush.msra.mxu0 %v248
    %2129 = vmatmul.f32.gmra.mxu0 %v2092
    %v2130 = vpop.f32.mrf.mxu0
    %v2131 = vadd.f32 %v314, %v2130
    %2132 = vdwg.mxu0
    %2133 = vmatpush.msra.mxu0 %v309
    %2134 = vmatpush.msra.mxu0 %v305
    %2135 = vmatpush.msra.mxu0 %v301
    %2136 = vmatpush.msra.mxu0 %v297
    %2137 = vmatpush.msra.mxu0 %v293
    %2138 = vmatpush.msra.mxu0 %v289
    %2139 = vmatpush.msra.mxu0 %v285
    %2140 = vmatpush.msra.mxu0 %v281
    %2141 = vmatpush.msra.mxu0 %v277
    %2142 = vmatpush.msra.mxu0 %v273
    %2143 = vmatpush.msra.mxu0 %v269
    %2144 = vmatpush.msra.mxu0 %v265
    %2145 = vmatpush.msra.mxu0 %v261
    %2146 = vmatpush.msra.mxu0 %v257
    %2147 = vmatpush.msra.mxu0 %v253
    %2148 = vmatpush.msra.mxu0 %v249
    %2149 = vmatmul.f32.gmra.mxu0 %v2092
    %v2150 = vpop.f32.mrf.mxu0
    %v2151 = vadd.f32 %v315, %v2150
    %2152 = vdwg.mxu0
    %2153 = vmatpush.msra.mxu0 %v310
    %2154 = vmatpush.msra.mxu0 %v306
    %2155 = vmatpush.msra.mxu0 %v302
    %2156 = vmatpush.msra.mxu0 %v298
    %2157 = vmatpush.msra.mxu0 %v294
    %2158 = vmatpush.msra.mxu0 %v290
    %2159 = vmatpush.msra.mxu0 %v286
    %2160 = vmatpush.msra.mxu0 %v282
    %2161 = vmatpush.msra.mxu0 %v278
    %2162 = vmatpush.msra.mxu0 %v274
    %2163 = vmatpush.msra.mxu0 %v270
    %2164 = vmatpush.msra.mxu0 %v266
    %2165 = vmatpush.msra.mxu0 %v262
    %2166 = vmatpush.msra.mxu0 %v258
    %2167 = vmatpush.msra.mxu0 %v254
    %2168 = vmatpush.msra.mxu0 %v250
    %2169 = vmatmul.f32.gmra.mxu0 %v2092
    %v2170 = vpop.f32.mrf.mxu0
    %v2171 = vadd.f32 %v316, %v2170
    %2172 = vdwg.mxu0
    %s2173 = scalar_lea.vmem [#allocation2], 40
    %v2174 = vld [vmem:[%s2173] sm:$0xff]
    %2175 = vmatpush.msra.mxu0 %v179
    %2176 = vmatpush.msra.mxu0 %v175
    %2177 = vmatpush.msra.mxu0 %v171
    %2178 = vmatpush.msra.mxu0 %v167
    %2179 = vmatpush.msra.mxu0 %v163
    %2180 = vmatpush.msra.mxu0 %v159
    %2181 = vmatpush.msra.mxu0 %v155
    %2182 = vmatpush.msra.mxu0 %v151
    %2183 = vmatpush.msra.mxu0 %v147
    %2184 = vmatpush.msra.mxu0 %v143
    %2185 = vmatpush.msra.mxu0 %v139
    %2186 = vmatpush.msra.mxu0 %v135
    %2187 = vmatpush.msra.mxu0 %v131
    %2188 = vmatpush.msra.mxu0 %v127
    %2189 = vmatpush.msra.mxu0 %v123
    %2190 = vmatpush.msra.mxu0 %v119
    %2191 = vmatmul.f32.gmra.mxu0 %v1945
    %v2192 = vpop.f32.mrf.mxu0
    %v2193 = vadd.f32 0.0, %v2192
    %2194 = vdwg.mxu0
    %2195 = vmatpush.msra.mxu0 %v180
    %2196 = vmatpush.msra.mxu0 %v176
    %2197 = vmatpush.msra.mxu0 %v172
    %2198 = vmatpush.msra.mxu0 %v168
    %2199 = vmatpush.msra.mxu0 %v164
    %2200 = vmatpush.msra.mxu0 %v160
    %2201 = vmatpush.msra.mxu0 %v156
    %2202 = vmatpush.msra.mxu0 %v152
    %2203 = vmatpush.msra.mxu0 %v148
    %2204 = vmatpush.msra.mxu0 %v144
    %2205 = vmatpush.msra.mxu0 %v140
    %2206 = vmatpush.msra.mxu0 %v136
    %2207 = vmatpush.msra.mxu0 %v132
    %2208 = vmatpush.msra.mxu0 %v128
    %2209 = vmatpush.msra.mxu0 %v124
    %2210 = vmatpush.msra.mxu0 %v120
    %2211 = vmatmul.f32.gmra.mxu0 %v1945
    %v2212 = vpop.f32.mrf.mxu0
    %v2213 = vadd.f32 0.0, %v2212
    %2214 = vdwg.mxu0
    %2215 = vmatpush.msra.mxu0 %v181
    %2216 = vmatpush.msra.mxu0 %v177
    %2217 = vmatpush.msra.mxu0 %v173
    %2218 = vmatpush.msra.mxu0 %v169
    %2219 = vmatpush.msra.mxu0 %v165
    %2220 = vmatpush.msra.mxu0 %v161
    %2221 = vmatpush.msra.mxu0 %v157
    %2222 = vmatpush.msra.mxu0 %v153
    %2223 = vmatpush.msra.mxu0 %v149
    %2224 = vmatpush.msra.mxu0 %v145
    %2225 = vmatpush.msra.mxu0 %v141
    %2226 = vmatpush.msra.mxu0 %v137
    %2227 = vmatpush.msra.mxu0 %v133
    %2228 = vmatpush.msra.mxu0 %v129
    %2229 = vmatpush.msra.mxu0 %v125
    %2230 = vmatpush.msra.mxu0 %v121
    %2231 = vmatmul.f32.gmra.mxu0 %v1945
    %v2232 = vpop.f32.mrf.mxu0
    %v2233 = vadd.f32 0.0, %v2232
    %2234 = vdwg.mxu0
    %2235 = vmatpush.msra.mxu0 %v182
    %2236 = vmatpush.msra.mxu0 %v178
    %2237 = vmatpush.msra.mxu0 %v174
    %2238 = vmatpush.msra.mxu0 %v170
    %2239 = vmatpush.msra.mxu0 %v166
    %2240 = vmatpush.msra.mxu0 %v162
    %2241 = vmatpush.msra.mxu0 %v158
    %2242 = vmatpush.msra.mxu0 %v154
    %2243 = vmatpush.msra.mxu0 %v150
    %2244 = vmatpush.msra.mxu0 %v146
    %2245 = vmatpush.msra.mxu0 %v142
    %2246 = vmatpush.msra.mxu0 %v138
    %2247 = vmatpush.msra.mxu0 %v134
    %2248 = vmatpush.msra.mxu0 %v130
    %2249 = vmatpush.msra.mxu0 %v126
    %2250 = vmatpush.msra.mxu0 %v122
    %2251 = vmatmul.f32.gmra.mxu0 %v1945
    %v2252 = vpop.f32.mrf.mxu0
    %v2253 = vadd.f32 0.0, %v2252
    %2254 = vdwg.mxu0
    %v2259 = vrot.slane %v2213, 6
    %v2260 = vrot.slane %v2233, 4
    %v2261 = vrot.slane %v2253, 2
    %v2262 = vsel %vm489, %v2193, %v2259
    %v2263 = vsel %vm491, %v2260, %v2261
    %v2264 = vsel %vm493, %v2262, %v2263
    %v2266 = vadd.f32 %v2174, %v2264
    %v2267 = vxor.u32 %v2266, 2147483648
    %v2268 = vmul.f32 %v2267, 1.442695
    %v2269 = vpow.pop %v2268
    %v2270 = vadd.f32 %v2269, 1.0
    %v2271 = vrcp.pop %v2270
    %v2272 = vmul.f32 %v2270, %v2271
    %v2273 = vsub.f32 1.0, %v2272
    %v2274 = vmul.f32 %v2271, %v2273
    %v2275 = vadd.f32 %v2271, %v2274
    %vm2276 = vweird.f32 %v2270
    %vm2277 = vweird.f32 %v2271
    %vm2278 = vmor %vm2276, %vm2277
    %v2279 = vsel %vm2278, %v2271, %v2275
    %v2280 = vand.u32 2147483647, %v2270
    %vm2281 = vcmp.eq.f32.partialorder %v2280, 8.507059e+37
    %v2282 = vand.u32 %v2270, 2147483648
    %v2283 = vor.u32 1.1754944e-38, %v2282
    %v2284 = vsel %vm2281, %v2283, %v2279
    %v2285 = vmul.f32 1.0, %v2284
    %v2287 = vrot.slane %v2266, 6
    %v2289 = vtanh.pop %v2287
    %v2291 = vrot.slane %v2285, 2
    %v2293 = vmul.f32 %v2291, %v1941
    %v2294 = vmul.f32 %v2285, %v2289
    %v2295 = vadd.f32 %v2293, %v2294
    %v2296 = vtanh.pop %v2295
    %v2297 = vrot.slane %v2285, 4
    %v2299 = vmul.f32 %v2297, %v2296
    %2300 = vmatpush.msra.mxu0 %v243
    %2301 = vmatpush.msra.mxu0 %v239
    %2302 = vmatpush.msra.mxu0 %v235
    %2303 = vmatpush.msra.mxu0 %v231
    %2304 = vmatpush.msra.mxu0 %v227
    %2305 = vmatpush.msra.mxu0 %v223
    %2306 = vmatpush.msra.mxu0 %v219
    %2307 = vmatpush.msra.mxu0 %v215
    %2308 = vmatpush.msra.mxu0 %v211
    %2309 = vmatpush.msra.mxu0 %v207
    %2310 = vmatpush.msra.mxu0 %v203
    %2311 = vmatpush.msra.mxu0 %v199
    %2312 = vmatpush.msra.mxu0 %v195
    %2313 = vmatpush.msra.mxu0 %v191
    %2314 = vmatpush.msra.mxu0 %v187
    %2315 = vmatpush.msra.mxu0 %v183
    %2316 = vmatmul.f32.gmra.mxu0 %v2299
    %v2317 = vpop.f32.mrf.mxu0
    %v2318 = vadd.f32 0.0, %v2317
    %2319 = vdwg.mxu0
    %2320 = vmatpush.msra.mxu0 %v244
    %2321 = vmatpush.msra.mxu0 %v240
    %2322 = vmatpush.msra.mxu0 %v236
    %2323 = vmatpush.msra.mxu0 %v232
    %2324 = vmatpush.msra.mxu0 %v228
    %2325 = vmatpush.msra.mxu0 %v224
    %2326 = vmatpush.msra.mxu0 %v220
    %2327 = vmatpush.msra.mxu0 %v216
    %2328 = vmatpush.msra.mxu0 %v212
    %2329 = vmatpush.msra.mxu0 %v208
    %2330 = vmatpush.msra.mxu0 %v204
    %2331 = vmatpush.msra.mxu0 %v200
    %2332 = vmatpush.msra.mxu0 %v196
    %2333 = vmatpush.msra.mxu0 %v192
    %2334 = vmatpush.msra.mxu0 %v188
    %2335 = vmatpush.msra.mxu0 %v184
    %2336 = vmatmul.f32.gmra.mxu0 %v2299
    %v2337 = vpop.f32.mrf.mxu0
    %v2338 = vadd.f32 0.0, %v2337
    %2339 = vdwg.mxu0
    %2340 = vmatpush.msra.mxu0 %v245
    %2341 = vmatpush.msra.mxu0 %v241
    %2342 = vmatpush.msra.mxu0 %v237
    %2343 = vmatpush.msra.mxu0 %v233
    %2344 = vmatpush.msra.mxu0 %v229
    %2345 = vmatpush.msra.mxu0 %v225
    %2346 = vmatpush.msra.mxu0 %v221
    %2347 = vmatpush.msra.mxu0 %v217
    %2348 = vmatpush.msra.mxu0 %v213
    %2349 = vmatpush.msra.mxu0 %v209
    %2350 = vmatpush.msra.mxu0 %v205
    %2351 = vmatpush.msra.mxu0 %v201
    %2352 = vmatpush.msra.mxu0 %v197
    %2353 = vmatpush.msra.mxu0 %v193
    %2354 = vmatpush.msra.mxu0 %v189
    %2355 = vmatpush.msra.mxu0 %v185
    %2356 = vmatmul.f32.gmra.mxu0 %v2299
    %v2357 = vpop.f32.mrf.mxu0
    %v2358 = vadd.f32 0.0, %v2357
    %2359 = vdwg.mxu0
    %2360 = vmatpush.msra.mxu0 %v246
    %2361 = vmatpush.msra.mxu0 %v242
    %2362 = vmatpush.msra.mxu0 %v238
    %2363 = vmatpush.msra.mxu0 %v234
    %2364 = vmatpush.msra.mxu0 %v230
    %2365 = vmatpush.msra.mxu0 %v226
    %2366 = vmatpush.msra.mxu0 %v222
    %2367 = vmatpush.msra.mxu0 %v218
    %2368 = vmatpush.msra.mxu0 %v214
    %2369 = vmatpush.msra.mxu0 %v210
    %2370 = vmatpush.msra.mxu0 %v206
    %2371 = vmatpush.msra.mxu0 %v202
    %2372 = vmatpush.msra.mxu0 %v198
    %2373 = vmatpush.msra.mxu0 %v194
    %2374 = vmatpush.msra.mxu0 %v190
    %2375 = vmatpush.msra.mxu0 %v186
    %2376 = vmatmul.f32.gmra.mxu0 %v2299
    %v2377 = vpop.f32.mrf.mxu0
    %v2378 = vadd.f32 0.0, %v2377
    %2379 = vdwg.mxu0
    %v2380 = vadd.f32 %v2111, %v2318
    %v2381 = vadd.f32 %v2131, %v2338
    %v2382 = vadd.f32 %v2151, %v2358
    %v2383 = vadd.f32 %v2171, %v2378
    %v2384 = vxor.u32 %v2380, 2147483648
    %v2385 = vxor.u32 %v2381, 2147483648
    %v2386 = vxor.u32 %v2382, 2147483648
    %v2387 = vmul.f32 %v2384, 1.442695
    %v2388 = vpow.pop %v2387
    %v2389 = vmul.f32 %v2385, 1.442695
    %v2390 = vpow.pop %v2389
    %v2391 = vmul.f32 %v2386, 1.442695
    %v2392 = vpow.pop %v2391
    %v2393 = vadd.f32 %v2388, 1.0
    %v2394 = vadd.f32 %v2390, 1.0
    %v2395 = vadd.f32 %v2392, 1.0
    %v2396 = vrcp.pop %v2393
    %v2397 = vmul.f32 %v2393, %v2396
    %v2398 = vsub.f32 1.0, %v2397
    %v2399 = vmul.f32 %v2396, %v2398
    %v2400 = vadd.f32 %v2396, %v2399
    %vm2401 = vweird.f32 %v2393
    %vm2402 = vweird.f32 %v2396
    %vm2403 = vmor %vm2401, %vm2402
    %v2404 = vsel %vm2403, %v2396, %v2400
    %v2405 = vand.u32 2147483647, %v2393
    %vm2406 = vcmp.eq.f32.partialorder %v2405, 8.507059e+37
    %v2407 = vand.u32 %v2393, 2147483648
    %v2408 = vor.u32 1.1754944e-38, %v2407
    %v2409 = vsel %vm2406, %v2408, %v2404
    %v2410 = vmul.f32 1.0, %v2409
    %v2411 = vrcp.pop %v2394
    %v2412 = vmul.f32 %v2394, %v2411
    %v2413 = vsub.f32 1.0, %v2412
    %v2414 = vmul.f32 %v2411, %v2413
    %v2415 = vadd.f32 %v2411, %v2414
    %vm2416 = vweird.f32 %v2394
    %vm2417 = vweird.f32 %v2411
    %vm2418 = vmor %vm2416, %vm2417
    %v2419 = vsel %vm2418, %v2411, %v2415
    %v2420 = vand.u32 2147483647, %v2394
    %vm2421 = vcmp.eq.f32.partialorder %v2420, 8.507059e+37
    %v2422 = vand.u32 %v2394, 2147483648
    %v2423 = vor.u32 1.1754944e-38, %v2422
    %v2424 = vsel %vm2421, %v2423, %v2419
    %v2425 = vmul.f32 1.0, %v2424
    %v2426 = vrcp.pop %v2395
    %v2427 = vmul.f32 %v2395, %v2426
    %v2428 = vsub.f32 1.0, %v2427
    %v2429 = vmul.f32 %v2426, %v2428
    %v2430 = vadd.f32 %v2426, %v2429
    %vm2431 = vweird.f32 %v2395
    %vm2432 = vweird.f32 %v2426
    %vm2433 = vmor %vm2431, %vm2432
    %v2434 = vsel %vm2433, %v2426, %v2430
    %v2435 = vand.u32 2147483647, %v2395
    %vm2436 = vcmp.eq.f32.partialorder %v2435, 8.507059e+37
    %v2437 = vand.u32 %v2395, 2147483648
    %v2438 = vor.u32 1.1754944e-38, %v2437
    %v2439 = vsel %vm2436, %v2438, %v2434
    %v2440 = vmul.f32 1.0, %v2439
    %v2441 = vtanh.pop %v2383
    %v2442 = vmul.f32 %v2425, %v2090
    %v2443 = vmul.f32 %v2410, %v2441
    %v2444 = vadd.f32 %v2442, %v2443
    %v2445 = vtanh.pop %v2444
    %v2446 = vmul.f32 %v2440, %v2445
    %2447 = vmatpush.msra.mxu0 %v307
    %2448 = vmatpush.msra.mxu0 %v303
    %2449 = vmatpush.msra.mxu0 %v299
    %2450 = vmatpush.msra.mxu0 %v295
    %2451 = vmatpush.msra.mxu0 %v291
    %2452 = vmatpush.msra.mxu0 %v287
    %2453 = vmatpush.msra.mxu0 %v283
    %2454 = vmatpush.msra.mxu0 %v279
    %2455 = vmatpush.msra.mxu0 %v275
    %2456 = vmatpush.msra.mxu0 %v271
    %2457 = vmatpush.msra.mxu0 %v267
    %2458 = vmatpush.msra.mxu0 %v263
    %2459 = vmatpush.msra.mxu0 %v259
    %2460 = vmatpush.msra.mxu0 %v255
    %2461 = vmatpush.msra.mxu0 %v251
    %2462 = vmatpush.msra.mxu0 %v247
    %2463 = vmatmul.f32.gmra.mxu0 %v2446
    %v2464 = vpop.f32.mrf.mxu0
    %v2465 = vadd.f32 %v313, %v2464
    %2466 = vdwg.mxu0
    %2467 = vmatpush.msra.mxu0 %v308
    %2468 = vmatpush.msra.mxu0 %v304
    %2469 = vmatpush.msra.mxu0 %v300
    %2470 = vmatpush.msra.mxu0 %v296
    %2471 = vmatpush.msra.mxu0 %v292
    %2472 = vmatpush.msra.mxu0 %v288
    %2473 = vmatpush.msra.mxu0 %v284
    %2474 = vmatpush.msra.mxu0 %v280
    %2475 = vmatpush.msra.mxu0 %v276
    %2476 = vmatpush.msra.mxu0 %v272
    %2477 = vmatpush.msra.mxu0 %v268
    %2478 = vmatpush.msra.mxu0 %v264
    %2479 = vmatpush.msra.mxu0 %v260
    %2480 = vmatpush.msra.mxu0 %v256
    %2481 = vmatpush.msra.mxu0 %v252
    %2482 = vmatpush.msra.mxu0 %v248
    %2483 = vmatmul.f32.gmra.mxu0 %v2446
    %v2484 = vpop.f32.mrf.mxu0
    %v2485 = vadd.f32 %v314, %v2484
    %2486 = vdwg.mxu0
    %2487 = vmatpush.msra.mxu0 %v309
    %2488 = vmatpush.msra.mxu0 %v305
    %2489 = vmatpush.msra.mxu0 %v301
    %2490 = vmatpush.msra.mxu0 %v297
    %2491 = vmatpush.msra.mxu0 %v293
    %2492 = vmatpush.msra.mxu0 %v289
    %2493 = vmatpush.msra.mxu0 %v285
    %2494 = vmatpush.msra.mxu0 %v281
    %2495 = vmatpush.msra.mxu0 %v277
    %2496 = vmatpush.msra.mxu0 %v273
    %2497 = vmatpush.msra.mxu0 %v269
    %2498 = vmatpush.msra.mxu0 %v265
    %2499 = vmatpush.msra.mxu0 %v261
    %2500 = vmatpush.msra.mxu0 %v257
    %2501 = vmatpush.msra.mxu0 %v253
    %2502 = vmatpush.msra.mxu0 %v249
    %2503 = vmatmul.f32.gmra.mxu0 %v2446
    %v2504 = vpop.f32.mrf.mxu0
    %v2505 = vadd.f32 %v315, %v2504
    %2506 = vdwg.mxu0
    %2507 = vmatpush.msra.mxu0 %v310
    %2508 = vmatpush.msra.mxu0 %v306
    %2509 = vmatpush.msra.mxu0 %v302
    %2510 = vmatpush.msra.mxu0 %v298
    %2511 = vmatpush.msra.mxu0 %v294
    %2512 = vmatpush.msra.mxu0 %v290
    %2513 = vmatpush.msra.mxu0 %v286
    %2514 = vmatpush.msra.mxu0 %v282
    %2515 = vmatpush.msra.mxu0 %v278
    %2516 = vmatpush.msra.mxu0 %v274
    %2517 = vmatpush.msra.mxu0 %v270
    %2518 = vmatpush.msra.mxu0 %v266
    %2519 = vmatpush.msra.mxu0 %v262
    %2520 = vmatpush.msra.mxu0 %v258
    %2521 = vmatpush.msra.mxu0 %v254
    %2522 = vmatpush.msra.mxu0 %v250
    %2523 = vmatmul.f32.gmra.mxu0 %v2446
    %v2524 = vpop.f32.mrf.mxu0
    %v2525 = vadd.f32 %v316, %v2524
    %2526 = vdwg.mxu0
    %s2527 = scalar_lea.vmem [#allocation2], 48
    %v2528 = vld [vmem:[%s2527] sm:$0xff]
    %2529 = vmatpush.msra.mxu0 %v179
    %2530 = vmatpush.msra.mxu0 %v175
    %2531 = vmatpush.msra.mxu0 %v171
    %2532 = vmatpush.msra.mxu0 %v167
    %2533 = vmatpush.msra.mxu0 %v163
    %2534 = vmatpush.msra.mxu0 %v159
    %2535 = vmatpush.msra.mxu0 %v155
    %2536 = vmatpush.msra.mxu0 %v151
    %2537 = vmatpush.msra.mxu0 %v147
    %2538 = vmatpush.msra.mxu0 %v143
    %2539 = vmatpush.msra.mxu0 %v139
    %2540 = vmatpush.msra.mxu0 %v135
    %2541 = vmatpush.msra.mxu0 %v131
    %2542 = vmatpush.msra.mxu0 %v127
    %2543 = vmatpush.msra.mxu0 %v123
    %2544 = vmatpush.msra.mxu0 %v119
    %2545 = vmatmul.f32.gmra.mxu0 %v2299
    %v2546 = vpop.f32.mrf.mxu0
    %v2547 = vadd.f32 0.0, %v2546
    %2548 = vdwg.mxu0
    %2549 = vmatpush.msra.mxu0 %v180
    %2550 = vmatpush.msra.mxu0 %v176
    %2551 = vmatpush.msra.mxu0 %v172
    %2552 = vmatpush.msra.mxu0 %v168
    %2553 = vmatpush.msra.mxu0 %v164
    %2554 = vmatpush.msra.mxu0 %v160
    %2555 = vmatpush.msra.mxu0 %v156
    %2556 = vmatpush.msra.mxu0 %v152
    %2557 = vmatpush.msra.mxu0 %v148
    %2558 = vmatpush.msra.mxu0 %v144
    %2559 = vmatpush.msra.mxu0 %v140
    %2560 = vmatpush.msra.mxu0 %v136
    %2561 = vmatpush.msra.mxu0 %v132
    %2562 = vmatpush.msra.mxu0 %v128
    %2563 = vmatpush.msra.mxu0 %v124
    %2564 = vmatpush.msra.mxu0 %v120
    %2565 = vmatmul.f32.gmra.mxu0 %v2299
    %v2566 = vpop.f32.mrf.mxu0
    %v2567 = vadd.f32 0.0, %v2566
    %2568 = vdwg.mxu0
    %2569 = vmatpush.msra.mxu0 %v181
    %2570 = vmatpush.msra.mxu0 %v177
    %2571 = vmatpush.msra.mxu0 %v173
    %2572 = vmatpush.msra.mxu0 %v169
    %2573 = vmatpush.msra.mxu0 %v165
    %2574 = vmatpush.msra.mxu0 %v161
    %2575 = vmatpush.msra.mxu0 %v157
    %2576 = vmatpush.msra.mxu0 %v153
    %2577 = vmatpush.msra.mxu0 %v149
    %2578 = vmatpush.msra.mxu0 %v145
    %2579 = vmatpush.msra.mxu0 %v141
    %2580 = vmatpush.msra.mxu0 %v137
    %2581 = vmatpush.msra.mxu0 %v133
    %2582 = vmatpush.msra.mxu0 %v129
    %2583 = vmatpush.msra.mxu0 %v125
    %2584 = vmatpush.msra.mxu0 %v121
    %2585 = vmatmul.f32.gmra.mxu0 %v2299
    %v2586 = vpop.f32.mrf.mxu0
    %v2587 = vadd.f32 0.0, %v2586
    %2588 = vdwg.mxu0
    %2589 = vmatpush.msra.mxu0 %v182
    %2590 = vmatpush.msra.mxu0 %v178
    %2591 = vmatpush.msra.mxu0 %v174
    %2592 = vmatpush.msra.mxu0 %v170
    %2593 = vmatpush.msra.mxu0 %v166
    %2594 = vmatpush.msra.mxu0 %v162
    %2595 = vmatpush.msra.mxu0 %v158
    %2596 = vmatpush.msra.mxu0 %v154
    %2597 = vmatpush.msra.mxu0 %v150
    %2598 = vmatpush.msra.mxu0 %v146
    %2599 = vmatpush.msra.mxu0 %v142
    %2600 = vmatpush.msra.mxu0 %v138
    %2601 = vmatpush.msra.mxu0 %v134
    %2602 = vmatpush.msra.mxu0 %v130
    %2603 = vmatpush.msra.mxu0 %v126
    %2604 = vmatpush.msra.mxu0 %v122
    %2605 = vmatmul.f32.gmra.mxu0 %v2299
    %v2606 = vpop.f32.mrf.mxu0
    %v2607 = vadd.f32 0.0, %v2606
    %2608 = vdwg.mxu0
    %v2613 = vrot.slane %v2567, 6
    %v2614 = vrot.slane %v2587, 4
    %v2615 = vrot.slane %v2607, 2
    %v2616 = vsel %vm489, %v2547, %v2613
    %v2617 = vsel %vm491, %v2614, %v2615
    %v2618 = vsel %vm493, %v2616, %v2617
    %v2620 = vadd.f32 %v2528, %v2618
    %v2621 = vxor.u32 %v2620, 2147483648
    %v2622 = vmul.f32 %v2621, 1.442695
    %v2623 = vpow.pop %v2622
    %v2624 = vadd.f32 %v2623, 1.0
    %v2625 = vrcp.pop %v2624
    %v2626 = vmul.f32 %v2624, %v2625
    %v2627 = vsub.f32 1.0, %v2626
    %v2628 = vmul.f32 %v2625, %v2627
    %v2629 = vadd.f32 %v2625, %v2628
    %vm2630 = vweird.f32 %v2624
    %vm2631 = vweird.f32 %v2625
    %vm2632 = vmor %vm2630, %vm2631
    %v2633 = vsel %vm2632, %v2625, %v2629
    %v2634 = vand.u32 2147483647, %v2624
    %vm2635 = vcmp.eq.f32.partialorder %v2634, 8.507059e+37
    %v2636 = vand.u32 %v2624, 2147483648
    %v2637 = vor.u32 1.1754944e-38, %v2636
    %v2638 = vsel %vm2635, %v2637, %v2633
    %v2639 = vmul.f32 1.0, %v2638
    %v2641 = vrot.slane %v2620, 6
    %v2643 = vtanh.pop %v2641
    %v2645 = vrot.slane %v2639, 2
    %v2647 = vmul.f32 %v2645, %v2295
    %v2648 = vmul.f32 %v2639, %v2643
    %v2649 = vadd.f32 %v2647, %v2648
    %v2650 = vtanh.pop %v2649
    %v2651 = vrot.slane %v2639, 4
    %v2653 = vmul.f32 %v2651, %v2650
    %2654 = vmatpush.msra.mxu0 %v243
    %2655 = vmatpush.msra.mxu0 %v239
    %2656 = vmatpush.msra.mxu0 %v235
    %2657 = vmatpush.msra.mxu0 %v231
    %2658 = vmatpush.msra.mxu0 %v227
    %2659 = vmatpush.msra.mxu0 %v223
    %2660 = vmatpush.msra.mxu0 %v219
    %2661 = vmatpush.msra.mxu0 %v215
    %2662 = vmatpush.msra.mxu0 %v211
    %2663 = vmatpush.msra.mxu0 %v207
    %2664 = vmatpush.msra.mxu0 %v203
    %2665 = vmatpush.msra.mxu0 %v199
    %2666 = vmatpush.msra.mxu0 %v195
    %2667 = vmatpush.msra.mxu0 %v191
    %2668 = vmatpush.msra.mxu0 %v187
    %2669 = vmatpush.msra.mxu0 %v183
    %2670 = vmatmul.f32.gmra.mxu0 %v2653
    %v2671 = vpop.f32.mrf.mxu0
    %v2672 = vadd.f32 0.0, %v2671
    %2673 = vdwg.mxu0
    %2674 = vmatpush.msra.mxu0 %v244
    %2675 = vmatpush.msra.mxu0 %v240
    %2676 = vmatpush.msra.mxu0 %v236
    %2677 = vmatpush.msra.mxu0 %v232
    %2678 = vmatpush.msra.mxu0 %v228
    %2679 = vmatpush.msra.mxu0 %v224
    %2680 = vmatpush.msra.mxu0 %v220
    %2681 = vmatpush.msra.mxu0 %v216
    %2682 = vmatpush.msra.mxu0 %v212
    %2683 = vmatpush.msra.mxu0 %v208
    %2684 = vmatpush.msra.mxu0 %v204
    %2685 = vmatpush.msra.mxu0 %v200
    %2686 = vmatpush.msra.mxu0 %v196
    %2687 = vmatpush.msra.mxu0 %v192
    %2688 = vmatpush.msra.mxu0 %v188
    %2689 = vmatpush.msra.mxu0 %v184
    %2690 = vmatmul.f32.gmra.mxu0 %v2653
    %v2691 = vpop.f32.mrf.mxu0
    %v2692 = vadd.f32 0.0, %v2691
    %2693 = vdwg.mxu0
    %2694 = vmatpush.msra.mxu0 %v245
    %2695 = vmatpush.msra.mxu0 %v241
    %2696 = vmatpush.msra.mxu0 %v237
    %2697 = vmatpush.msra.mxu0 %v233
    %2698 = vmatpush.msra.mxu0 %v229
    %2699 = vmatpush.msra.mxu0 %v225
    %2700 = vmatpush.msra.mxu0 %v221
    %2701 = vmatpush.msra.mxu0 %v217
    %2702 = vmatpush.msra.mxu0 %v213
    %2703 = vmatpush.msra.mxu0 %v209
    %2704 = vmatpush.msra.mxu0 %v205
    %2705 = vmatpush.msra.mxu0 %v201
    %2706 = vmatpush.msra.mxu0 %v197
    %2707 = vmatpush.msra.mxu0 %v193
    %2708 = vmatpush.msra.mxu0 %v189
    %2709 = vmatpush.msra.mxu0 %v185
    %2710 = vmatmul.f32.gmra.mxu0 %v2653
    %v2711 = vpop.f32.mrf.mxu0
    %v2712 = vadd.f32 0.0, %v2711
    %2713 = vdwg.mxu0
    %2714 = vmatpush.msra.mxu0 %v246
    %2715 = vmatpush.msra.mxu0 %v242
    %2716 = vmatpush.msra.mxu0 %v238
    %2717 = vmatpush.msra.mxu0 %v234
    %2718 = vmatpush.msra.mxu0 %v230
    %2719 = vmatpush.msra.mxu0 %v226
    %2720 = vmatpush.msra.mxu0 %v222
    %2721 = vmatpush.msra.mxu0 %v218
    %2722 = vmatpush.msra.mxu0 %v214
    %2723 = vmatpush.msra.mxu0 %v210
    %2724 = vmatpush.msra.mxu0 %v206
    %2725 = vmatpush.msra.mxu0 %v202
    %2726 = vmatpush.msra.mxu0 %v198
    %2727 = vmatpush.msra.mxu0 %v194
    %2728 = vmatpush.msra.mxu0 %v190
    %2729 = vmatpush.msra.mxu0 %v186
    %2730 = vmatmul.f32.gmra.mxu0 %v2653
    %v2731 = vpop.f32.mrf.mxu0
    %v2732 = vadd.f32 0.0, %v2731
    %2733 = vdwg.mxu0
    %v2734 = vadd.f32 %v2465, %v2672
    %v2735 = vadd.f32 %v2485, %v2692
    %v2736 = vadd.f32 %v2505, %v2712
    %v2737 = vadd.f32 %v2525, %v2732
    %v2738 = vxor.u32 %v2734, 2147483648
    %v2739 = vxor.u32 %v2735, 2147483648
    %v2740 = vxor.u32 %v2736, 2147483648
    %v2741 = vmul.f32 %v2738, 1.442695
    %v2742 = vpow.pop %v2741
    %v2743 = vmul.f32 %v2739, 1.442695
    %v2744 = vpow.pop %v2743
    %v2745 = vmul.f32 %v2740, 1.442695
    %v2746 = vpow.pop %v2745
    %v2747 = vadd.f32 %v2742, 1.0
    %v2748 = vadd.f32 %v2744, 1.0
    %v2749 = vadd.f32 %v2746, 1.0
    %v2750 = vrcp.pop %v2747
    %v2751 = vmul.f32 %v2747, %v2750
    %v2752 = vsub.f32 1.0, %v2751
    %v2753 = vmul.f32 %v2750, %v2752
    %v2754 = vadd.f32 %v2750, %v2753
    %vm2755 = vweird.f32 %v2747
    %vm2756 = vweird.f32 %v2750
    %vm2757 = vmor %vm2755, %vm2756
    %v2758 = vsel %vm2757, %v2750, %v2754
    %v2759 = vand.u32 2147483647, %v2747
    %vm2760 = vcmp.eq.f32.partialorder %v2759, 8.507059e+37
    %v2761 = vand.u32 %v2747, 2147483648
    %v2762 = vor.u32 1.1754944e-38, %v2761
    %v2763 = vsel %vm2760, %v2762, %v2758
    %v2764 = vmul.f32 1.0, %v2763
    %v2765 = vrcp.pop %v2748
    %v2766 = vmul.f32 %v2748, %v2765
    %v2767 = vsub.f32 1.0, %v2766
    %v2768 = vmul.f32 %v2765, %v2767
    %v2769 = vadd.f32 %v2765, %v2768
    %vm2770 = vweird.f32 %v2748
    %vm2771 = vweird.f32 %v2765
    %vm2772 = vmor %vm2770, %vm2771
    %v2773 = vsel %vm2772, %v2765, %v2769
    %v2774 = vand.u32 2147483647, %v2748
    %vm2775 = vcmp.eq.f32.partialorder %v2774, 8.507059e+37
    %v2776 = vand.u32 %v2748, 2147483648
    %v2777 = vor.u32 1.1754944e-38, %v2776
    %v2778 = vsel %vm2775, %v2777, %v2773
    %v2779 = vmul.f32 1.0, %v2778
    %v2780 = vrcp.pop %v2749
    %v2781 = vmul.f32 %v2749, %v2780
    %v2782 = vsub.f32 1.0, %v2781
    %v2783 = vmul.f32 %v2780, %v2782
    %v2784 = vadd.f32 %v2780, %v2783
    %vm2785 = vweird.f32 %v2749
    %vm2786 = vweird.f32 %v2780
    %vm2787 = vmor %vm2785, %vm2786
    %v2788 = vsel %vm2787, %v2780, %v2784
    %v2789 = vand.u32 2147483647, %v2749
    %vm2790 = vcmp.eq.f32.partialorder %v2789, 8.507059e+37
    %v2791 = vand.u32 %v2749, 2147483648
    %v2792 = vor.u32 1.1754944e-38, %v2791
    %v2793 = vsel %vm2790, %v2792, %v2788
    %v2794 = vmul.f32 1.0, %v2793
    %v2795 = vtanh.pop %v2737
    %v2796 = vmul.f32 %v2779, %v2444
    %v2797 = vmul.f32 %v2764, %v2795
    %v2798 = vadd.f32 %v2796, %v2797
    %v2799 = vtanh.pop %v2798
    %v2800 = vmul.f32 %v2794, %v2799
    %2801 = vmatpush.msra.mxu0 %v307
    %2802 = vmatpush.msra.mxu0 %v303
    %2803 = vmatpush.msra.mxu0 %v299
    %2804 = vmatpush.msra.mxu0 %v295
    %2805 = vmatpush.msra.mxu0 %v291
    %2806 = vmatpush.msra.mxu0 %v287
    %2807 = vmatpush.msra.mxu0 %v283
    %2808 = vmatpush.msra.mxu0 %v279
    %2809 = vmatpush.msra.mxu0 %v275
    %2810 = vmatpush.msra.mxu0 %v271
    %2811 = vmatpush.msra.mxu0 %v267
    %2812 = vmatpush.msra.mxu0 %v263
    %2813 = vmatpush.msra.mxu0 %v259
    %2814 = vmatpush.msra.mxu0 %v255
    %2815 = vmatpush.msra.mxu0 %v251
    %2816 = vmatpush.msra.mxu0 %v247
    %2817 = vmatmul.f32.gmra.mxu0 %v2800
    %v2818 = vpop.f32.mrf.mxu0
    %v2819 = vadd.f32 %v313, %v2818
    %2820 = vdwg.mxu0
    %2821 = vmatpush.msra.mxu0 %v308
    %2822 = vmatpush.msra.mxu0 %v304
    %2823 = vmatpush.msra.mxu0 %v300
    %2824 = vmatpush.msra.mxu0 %v296
    %2825 = vmatpush.msra.mxu0 %v292
    %2826 = vmatpush.msra.mxu0 %v288
    %2827 = vmatpush.msra.mxu0 %v284
    %2828 = vmatpush.msra.mxu0 %v280
    %2829 = vmatpush.msra.mxu0 %v276
    %2830 = vmatpush.msra.mxu0 %v272
    %2831 = vmatpush.msra.mxu0 %v268
    %2832 = vmatpush.msra.mxu0 %v264
    %2833 = vmatpush.msra.mxu0 %v260
    %2834 = vmatpush.msra.mxu0 %v256
    %2835 = vmatpush.msra.mxu0 %v252
    %2836 = vmatpush.msra.mxu0 %v248
    %2837 = vmatmul.f32.gmra.mxu0 %v2800
    %v2838 = vpop.f32.mrf.mxu0
    %v2839 = vadd.f32 %v314, %v2838
    %2840 = vdwg.mxu0
    %2841 = vmatpush.msra.mxu0 %v309
    %2842 = vmatpush.msra.mxu0 %v305
    %2843 = vmatpush.msra.mxu0 %v301
    %2844 = vmatpush.msra.mxu0 %v297
    %2845 = vmatpush.msra.mxu0 %v293
    %2846 = vmatpush.msra.mxu0 %v289
    %2847 = vmatpush.msra.mxu0 %v285
    %2848 = vmatpush.msra.mxu0 %v281
    %2849 = vmatpush.msra.mxu0 %v277
    %2850 = vmatpush.msra.mxu0 %v273
    %2851 = vmatpush.msra.mxu0 %v269
    %2852 = vmatpush.msra.mxu0 %v265
    %2853 = vmatpush.msra.mxu0 %v261
    %2854 = vmatpush.msra.mxu0 %v257
    %2855 = vmatpush.msra.mxu0 %v253
    %2856 = vmatpush.msra.mxu0 %v249
    %2857 = vmatmul.f32.gmra.mxu0 %v2800
    %v2858 = vpop.f32.mrf.mxu0
    %v2859 = vadd.f32 %v315, %v2858
    %2860 = vdwg.mxu0
    %2861 = vmatpush.msra.mxu0 %v310
    %2862 = vmatpush.msra.mxu0 %v306
    %2863 = vmatpush.msra.mxu0 %v302
    %2864 = vmatpush.msra.mxu0 %v298
    %2865 = vmatpush.msra.mxu0 %v294
    %2866 = vmatpush.msra.mxu0 %v290
    %2867 = vmatpush.msra.mxu0 %v286
    %2868 = vmatpush.msra.mxu0 %v282
    %2869 = vmatpush.msra.mxu0 %v278
    %2870 = vmatpush.msra.mxu0 %v274
    %2871 = vmatpush.msra.mxu0 %v270
    %2872 = vmatpush.msra.mxu0 %v266
    %2873 = vmatpush.msra.mxu0 %v262
    %2874 = vmatpush.msra.mxu0 %v258
    %2875 = vmatpush.msra.mxu0 %v254
    %2876 = vmatpush.msra.mxu0 %v250
    %2877 = vmatmul.f32.gmra.mxu0 %v2800
    %v2878 = vpop.f32.mrf.mxu0
    %v2879 = vadd.f32 %v316, %v2878
    %2880 = vdwg.mxu0
    %s2881 = scalar_lea.vmem [#allocation2], 56
    %v2882 = vld [vmem:[%s2881] sm:$0xff]
    %2883 = vmatpush.msra.mxu0 %v179
    %2884 = vmatpush.msra.mxu0 %v175
    %2885 = vmatpush.msra.mxu0 %v171
    %2886 = vmatpush.msra.mxu0 %v167
    %2887 = vmatpush.msra.mxu0 %v163
    %2888 = vmatpush.msra.mxu0 %v159
    %2889 = vmatpush.msra.mxu0 %v155
    %2890 = vmatpush.msra.mxu0 %v151
    %2891 = vmatpush.msra.mxu0 %v147
    %2892 = vmatpush.msra.mxu0 %v143
    %2893 = vmatpush.msra.mxu0 %v139
    %2894 = vmatpush.msra.mxu0 %v135
    %2895 = vmatpush.msra.mxu0 %v131
    %2896 = vmatpush.msra.mxu0 %v127
    %2897 = vmatpush.msra.mxu0 %v123
    %2898 = vmatpush.msra.mxu0 %v119
    %2899 = vmatmul.f32.gmra.mxu0 %v2653
    %v2900 = vpop.f32.mrf.mxu0
    %v2901 = vadd.f32 0.0, %v2900
    %2902 = vdwg.mxu0
    %2903 = vmatpush.msra.mxu0 %v180
    %2904 = vmatpush.msra.mxu0 %v176
    %2905 = vmatpush.msra.mxu0 %v172
    %2906 = vmatpush.msra.mxu0 %v168
    %2907 = vmatpush.msra.mxu0 %v164
    %2908 = vmatpush.msra.mxu0 %v160
    %2909 = vmatpush.msra.mxu0 %v156
    %2910 = vmatpush.msra.mxu0 %v152
    %2911 = vmatpush.msra.mxu0 %v148
    %2912 = vmatpush.msra.mxu0 %v144
    %2913 = vmatpush.msra.mxu0 %v140
    %2914 = vmatpush.msra.mxu0 %v136
    %2915 = vmatpush.msra.mxu0 %v132
    %2916 = vmatpush.msra.mxu0 %v128
    %2917 = vmatpush.msra.mxu0 %v124
    %2918 = vmatpush.msra.mxu0 %v120
    %2919 = vmatmul.f32.gmra.mxu0 %v2653
    %v2920 = vpop.f32.mrf.mxu0
    %v2921 = vadd.f32 0.0, %v2920
    %2922 = vdwg.mxu0
    %2923 = vmatpush.msra.mxu0 %v181
    %2924 = vmatpush.msra.mxu0 %v177
    %2925 = vmatpush.msra.mxu0 %v173
    %2926 = vmatpush.msra.mxu0 %v169
    %2927 = vmatpush.msra.mxu0 %v165
    %2928 = vmatpush.msra.mxu0 %v161
    %2929 = vmatpush.msra.mxu0 %v157
    %2930 = vmatpush.msra.mxu0 %v153
    %2931 = vmatpush.msra.mxu0 %v149
    %2932 = vmatpush.msra.mxu0 %v145
    %2933 = vmatpush.msra.mxu0 %v141
    %2934 = vmatpush.msra.mxu0 %v137
    %2935 = vmatpush.msra.mxu0 %v133
    %2936 = vmatpush.msra.mxu0 %v129
    %2937 = vmatpush.msra.mxu0 %v125
    %2938 = vmatpush.msra.mxu0 %v121
    %2939 = vmatmul.f32.gmra.mxu0 %v2653
    %v2940 = vpop.f32.mrf.mxu0
    %v2941 = vadd.f32 0.0, %v2940
    %2942 = vdwg.mxu0
    %2943 = vmatpush.msra.mxu0 %v182
    %2944 = vmatpush.msra.mxu0 %v178
    %2945 = vmatpush.msra.mxu0 %v174
    %2946 = vmatpush.msra.mxu0 %v170
    %2947 = vmatpush.msra.mxu0 %v166
    %2948 = vmatpush.msra.mxu0 %v162
    %2949 = vmatpush.msra.mxu0 %v158
    %2950 = vmatpush.msra.mxu0 %v154
    %2951 = vmatpush.msra.mxu0 %v150
    %2952 = vmatpush.msra.mxu0 %v146
    %2953 = vmatpush.msra.mxu0 %v142
    %2954 = vmatpush.msra.mxu0 %v138
    %2955 = vmatpush.msra.mxu0 %v134
    %2956 = vmatpush.msra.mxu0 %v130
    %2957 = vmatpush.msra.mxu0 %v126
    %2958 = vmatpush.msra.mxu0 %v122
    %2959 = vmatmul.f32.gmra.mxu0 %v2653
    %v2960 = vpop.f32.mrf.mxu0
    %v2961 = vadd.f32 0.0, %v2960
    %2962 = vdwg.mxu0
    %v2967 = vrot.slane %v2921, 6
    %v2968 = vrot.slane %v2941, 4
    %v2969 = vrot.slane %v2961, 2
    %v2970 = vsel %vm489, %v2901, %v2967
    %v2971 = vsel %vm491, %v2968, %v2969
    %v2972 = vsel %vm493, %v2970, %v2971
    %v2974 = vadd.f32 %v2882, %v2972
    %v2975 = vxor.u32 %v2974, 2147483648
    %v2976 = vmul.f32 %v2975, 1.442695
    %v2977 = vpow.pop %v2976
    %v2978 = vadd.f32 %v2977, 1.0
    %v2979 = vrcp.pop %v2978
    %v2980 = vmul.f32 %v2978, %v2979
    %v2981 = vsub.f32 1.0, %v2980
    %v2982 = vmul.f32 %v2979, %v2981
    %v2983 = vadd.f32 %v2979, %v2982
    %vm2984 = vweird.f32 %v2978
    %vm2985 = vweird.f32 %v2979
    %vm2986 = vmor %vm2984, %vm2985
    %v2987 = vsel %vm2986, %v2979, %v2983
    %v2988 = vand.u32 2147483647, %v2978
    %vm2989 = vcmp.eq.f32.partialorder %v2988, 8.507059e+37
    %v2990 = vand.u32 %v2978, 2147483648
    %v2991 = vor.u32 1.1754944e-38, %v2990
    %v2992 = vsel %vm2989, %v2991, %v2987
    %v2993 = vmul.f32 1.0, %v2992
    %v2995 = vrot.slane %v2974, 6
    %v2997 = vtanh.pop %v2995
    %v2999 = vrot.slane %v2993, 2
    %v3001 = vmul.f32 %v2999, %v2649
    %v3002 = vmul.f32 %v2993, %v2997
    %v3003 = vadd.f32 %v3001, %v3002
    %v3004 = vtanh.pop %v3003
    %v3005 = vrot.slane %v2993, 4
    %v3007 = vmul.f32 %v3005, %v3004
    %3008 = vmatpush.msra.mxu0 %v243
    %3009 = vmatpush.msra.mxu0 %v239
    %3010 = vmatpush.msra.mxu0 %v235
    %3011 = vmatpush.msra.mxu0 %v231
    %3012 = vmatpush.msra.mxu0 %v227
    %3013 = vmatpush.msra.mxu0 %v223
    %3014 = vmatpush.msra.mxu0 %v219
    %3015 = vmatpush.msra.mxu0 %v215
    %3016 = vmatpush.msra.mxu0 %v211
    %3017 = vmatpush.msra.mxu0 %v207
    %3018 = vmatpush.msra.mxu0 %v203
    %3019 = vmatpush.msra.mxu0 %v199
    %3020 = vmatpush.msra.mxu0 %v195
    %3021 = vmatpush.msra.mxu0 %v191
    %3022 = vmatpush.msra.mxu0 %v187
    %3023 = vmatpush.msra.mxu0 %v183
    %3024 = vmatmul.f32.gmra.mxu0 %v3007
    %v3025 = vpop.f32.mrf.mxu0
    %v3026 = vadd.f32 0.0, %v3025
    %3027 = vdwg.mxu0
    %3028 = vmatpush.msra.mxu0 %v244
    %3029 = vmatpush.msra.mxu0 %v240
    %3030 = vmatpush.msra.mxu0 %v236
    %3031 = vmatpush.msra.mxu0 %v232
    %3032 = vmatpush.msra.mxu0 %v228
    %3033 = vmatpush.msra.mxu0 %v224
    %3034 = vmatpush.msra.mxu0 %v220
    %3035 = vmatpush.msra.mxu0 %v216
    %3036 = vmatpush.msra.mxu0 %v212
    %3037 = vmatpush.msra.mxu0 %v208
    %3038 = vmatpush.msra.mxu0 %v204
    %3039 = vmatpush.msra.mxu0 %v200
    %3040 = vmatpush.msra.mxu0 %v196
    %3041 = vmatpush.msra.mxu0 %v192
    %3042 = vmatpush.msra.mxu0 %v188
    %3043 = vmatpush.msra.mxu0 %v184
    %3044 = vmatmul.f32.gmra.mxu0 %v3007
    %v3045 = vpop.f32.mrf.mxu0
    %v3046 = vadd.f32 0.0, %v3045
    %3047 = vdwg.mxu0
    %3048 = vmatpush.msra.mxu0 %v245
    %3049 = vmatpush.msra.mxu0 %v241
    %3050 = vmatpush.msra.mxu0 %v237
    %3051 = vmatpush.msra.mxu0 %v233
    %3052 = vmatpush.msra.mxu0 %v229
    %3053 = vmatpush.msra.mxu0 %v225
    %3054 = vmatpush.msra.mxu0 %v221
    %3055 = vmatpush.msra.mxu0 %v217
    %3056 = vmatpush.msra.mxu0 %v213
    %3057 = vmatpush.msra.mxu0 %v209
    %3058 = vmatpush.msra.mxu0 %v205
    %3059 = vmatpush.msra.mxu0 %v201
    %3060 = vmatpush.msra.mxu0 %v197
    %3061 = vmatpush.msra.mxu0 %v193
    %3062 = vmatpush.msra.mxu0 %v189
    %3063 = vmatpush.msra.mxu0 %v185
    %3064 = vmatmul.f32.gmra.mxu0 %v3007
    %v3065 = vpop.f32.mrf.mxu0
    %v3066 = vadd.f32 0.0, %v3065
    %3067 = vdwg.mxu0
    %3068 = vmatpush.msra.mxu0 %v246
    %3069 = vmatpush.msra.mxu0 %v242
    %3070 = vmatpush.msra.mxu0 %v238
    %3071 = vmatpush.msra.mxu0 %v234
    %3072 = vmatpush.msra.mxu0 %v230
    %3073 = vmatpush.msra.mxu0 %v226
    %3074 = vmatpush.msra.mxu0 %v222
    %3075 = vmatpush.msra.mxu0 %v218
    %3076 = vmatpush.msra.mxu0 %v214
    %3077 = vmatpush.msra.mxu0 %v210
    %3078 = vmatpush.msra.mxu0 %v206
    %3079 = vmatpush.msra.mxu0 %v202
    %3080 = vmatpush.msra.mxu0 %v198
    %3081 = vmatpush.msra.mxu0 %v194
    %3082 = vmatpush.msra.mxu0 %v190
    %3083 = vmatpush.msra.mxu0 %v186
    %3084 = vmatmul.f32.gmra.mxu0 %v3007
    %v3085 = vpop.f32.mrf.mxu0
    %v3086 = vadd.f32 0.0, %v3085
    %3087 = vdwg.mxu0
    %v3088 = vadd.f32 %v2819, %v3026
    %v3089 = vadd.f32 %v2839, %v3046
    %v3090 = vadd.f32 %v2859, %v3066
    %v3091 = vadd.f32 %v2879, %v3086
    %v3092 = vxor.u32 %v3088, 2147483648
    %v3093 = vxor.u32 %v3089, 2147483648
    %v3094 = vxor.u32 %v3090, 2147483648
    %v3095 = vmul.f32 %v3092, 1.442695
    %v3096 = vpow.pop %v3095
    %v3097 = vmul.f32 %v3093, 1.442695
    %v3098 = vpow.pop %v3097
    %v3099 = vmul.f32 %v3094, 1.442695
    %v3100 = vpow.pop %v3099
    %v3101 = vadd.f32 %v3096, 1.0
    %v3102 = vadd.f32 %v3098, 1.0
    %v3103 = vadd.f32 %v3100, 1.0
    %v3104 = vrcp.pop %v3101
    %v3105 = vmul.f32 %v3101, %v3104
    %v3106 = vsub.f32 1.0, %v3105
    %v3107 = vmul.f32 %v3104, %v3106
    %v3108 = vadd.f32 %v3104, %v3107
    %vm3109 = vweird.f32 %v3101
    %vm3110 = vweird.f32 %v3104
    %vm3111 = vmor %vm3109, %vm3110
    %v3112 = vsel %vm3111, %v3104, %v3108
    %v3113 = vand.u32 2147483647, %v3101
    %vm3114 = vcmp.eq.f32.partialorder %v3113, 8.507059e+37
    %v3115 = vand.u32 %v3101, 2147483648
    %v3116 = vor.u32 1.1754944e-38, %v3115
    %v3117 = vsel %vm3114, %v3116, %v3112
    %v3118 = vmul.f32 1.0, %v3117
    %v3119 = vrcp.pop %v3102
    %v3120 = vmul.f32 %v3102, %v3119
    %v3121 = vsub.f32 1.0, %v3120
    %v3122 = vmul.f32 %v3119, %v3121
    %v3123 = vadd.f32 %v3119, %v3122
    %vm3124 = vweird.f32 %v3102
    %vm3125 = vweird.f32 %v3119
    %vm3126 = vmor %vm3124, %vm3125
    %v3127 = vsel %vm3126, %v3119, %v3123
    %v3128 = vand.u32 2147483647, %v3102
    %vm3129 = vcmp.eq.f32.partialorder %v3128, 8.507059e+37
    %v3130 = vand.u32 %v3102, 2147483648
    %v3131 = vor.u32 1.1754944e-38, %v3130
    %v3132 = vsel %vm3129, %v3131, %v3127
    %v3133 = vmul.f32 1.0, %v3132
    %v3134 = vrcp.pop %v3103
    %v3135 = vmul.f32 %v3103, %v3134
    %v3136 = vsub.f32 1.0, %v3135
    %v3137 = vmul.f32 %v3134, %v3136
    %v3138 = vadd.f32 %v3134, %v3137
    %vm3139 = vweird.f32 %v3103
    %vm3140 = vweird.f32 %v3134
    %vm3141 = vmor %vm3139, %vm3140
    %v3142 = vsel %vm3141, %v3134, %v3138
    %v3143 = vand.u32 2147483647, %v3103
    %vm3144 = vcmp.eq.f32.partialorder %v3143, 8.507059e+37
    %v3145 = vand.u32 %v3103, 2147483648
    %v3146 = vor.u32 1.1754944e-38, %v3145
    %v3147 = vsel %vm3144, %v3146, %v3142
    %v3148 = vmul.f32 1.0, %v3147
    %v3149 = vtanh.pop %v3091
    %v3150 = vmul.f32 %v3133, %v2798
    %v3151 = vmul.f32 %v3118, %v3149
    %v3152 = vadd.f32 %v3150, %v3151
    %v3153 = vtanh.pop %v3152
    %v3154 = vmul.f32 %v3148, %v3153
    %v3155 = vld [vmem:[#allocation11] sm:$0xff]
    %v3156 = vld [vmem:[#allocation11 + $0x8] sm:$0xff]
    %v3157 = vld [vmem:[#allocation11 + $0x10] sm:$0xff]
    %v3158 = vld [vmem:[#allocation11 + $0x18] sm:$0xff]
    %v3159 = vld [vmem:[#allocation11 + $0x20] sm:$0xff]
    %v3160 = vld [vmem:[#allocation11 + $0x28] sm:$0xff]
    %v3161 = vld [vmem:[#allocation11 + $0x30] sm:$0xff]
    %v3162 = vld [vmem:[#allocation11 + $0x38] sm:$0xff]
    %v3163 = vld [vmem:[#allocation11 + $0x40] sm:$0xff]
    %v3164 = vld [vmem:[#allocation11 + $0x48] sm:$0xff]
    %v3165 = vld [vmem:[#allocation11 + $0x50] sm:$0xff]
    %v3166 = vld [vmem:[#allocation11 + $0x58] sm:$0xff]
    %v3167 = vld [vmem:[#allocation11 + $0x60] sm:$0xff]
    %v3168 = vld [vmem:[#allocation11 + $0x68] sm:$0xff]
    %v3169 = vld [vmem:[#allocation11 + $0x70] sm:$0xff]
    %v3170 = vld [vmem:[#allocation11 + $0x78] sm:$0xff]
    %v3171 = vld [vmem:[%s6] sm:$0x1]
    %v3173 = vperm.slane %v3171, 0
    %3175 = vmatpush.msra.mxu0 %v3170
    %3176 = vmatpush.msra.mxu0 %v3169
    %3177 = vmatpush.msra.mxu0 %v3168
    %3178 = vmatpush.msra.mxu0 %v3167
    %3179 = vmatpush.msra.mxu0 %v3166
    %3180 = vmatpush.msra.mxu0 %v3165
    %3181 = vmatpush.msra.mxu0 %v3164
    %3182 = vmatpush.msra.mxu0 %v3163
    %3183 = vmatpush.msra.mxu0 %v3162
    %3184 = vmatpush.msra.mxu0 %v3161
    %3185 = vmatpush.msra.mxu0 %v3160
    %3186 = vmatpush.msra.mxu0 %v3159
    %3187 = vmatpush.msra.mxu0 %v3158
    %3188 = vmatpush.msra.mxu0 %v3157
    %3189 = vmatpush.msra.mxu0 %v3156
    %3190 = vmatpush.msra.mxu0 %v3155
    %3191 = vmatmul.f32.gmra.mxu0 %v3154
    %v3192 = vpop.f32.mrf.mxu0
    %v3193 = vadd.f32 %v3173, %v3192
    %3194 = vdwg.mxu0
    %3195 = vst [vmem:[#allocation13] sm:$0x3] %v3193
    // Predicated region
    $region54: #{tpu_custom_call.1} parent=1 // pred_check
      _
    $region55: #{tpu_custom_call.1} parent=1 // pred_check_branch
      %3197 = sbr.rel (0) target = $region57
    $region56: #{tpu_custom_call.1} parent=1 // pred_region
      %3199 = vsyncadd [#allocation4], 0
      %s3201 = sshll.u32 [#allocation13], 4
      %s3202 = int_to_ptr.vmem [resolvable:$true] %s3201
      %s3203 = sshll.u32 %s7, 4
      %s3204 = int_to_ptr.hbm [resolvable:$true] %s3203
      %3206 = dma.vmem_to_hbm [thread:$0]  %s3202, 32, %s3204, [#allocation4]
    $region57: #{tpu_custom_call.1} parent=1 // pred_fallthru
      _
    // Predicated region
    $region58: #{tpu_custom_call.1} parent=1 // pred_check
      _
    $region59: #{tpu_custom_call.1} parent=1 // pred_check_branch
      %3208 = sbr.rel (0) target = $region61
    $region60: #{tpu_custom_call.1} parent=1 // pred_region
      %3210 = dma.done [#allocation4], 32
    $region61: #{tpu_custom_call.1} parent=1 // pred_fallthru
      _
    %3211 = vsyncpa [#allocation3], 1
    %3212 = vsyncpa [#allocation6], 1
    %3213 = vsyncpa [#allocation9], 1
    %3214 = vsyncpa [#allocation12], 1
    %3215 = vsyncpa [#allocation4], 1

</llo_original>
